<compile_context>
chip_gen: v7x
topology: tpu7x:2x2x1
jax: 0.10.0
libtpu: 0.0.40
codegen_flags: <defaults>
</compile_context>

<pallas_src>
import functools

import jax
import jax.numpy as jnp
from jax.experimental import pallas as pl
from jax.experimental.pallas import tpu as pltpu


def conv_relu_kernel(x_ref, w_ref, o_ref, patch_ref, *,
                     width, out_h, out_w, ksize_h, ksize_w):
    """One batch block per grid step.

    x_ref    : (NB, C, H*W)     flattened NCHW images (spatial axis on lanes)
    w_ref    : (O, KPAD)        weights, tap-major / channel-minor; bias folded
                                into column KH*KW*C; zero columns after it
    o_ref    : (NB, O, Ho, Wo)  valid conv + ReLU output (module layout)
    patch_ref: (KPAD, NB*HWV)   VMEM scratch: im2col patch fed to one GEMM
    """
    nb, c, _ = x_ref.shape
    kpad = w_ref.shape[1]
    k_real = ksize_h * ksize_w * c
    # Only the first HWV flattened positions can ever be a valid output pixel,
    # so every tap slice below is an in-bounds static slice of the image:
    # no zero-padded staging buffer, no roll, no mask.
    hwv = (out_h - 1) * width + out_w

    # Bias row (ones) + zero rows padding K up to a sublane multiple.  Written
    # every step (4 rows, trivial) so the kernel stays correct when the batch
    # grid axis is sharded across TensorCores ("parallel" on v7x).
    pad_rows = kpad - k_real
    row_id = jax.lax.broadcasted_iota(jnp.int32, (pad_rows, nb * hwv), 0)
    patch_ref[k_real:kpad, :] = (row_id == 0).astype(patch_ref.dtype)

    # im2col: one full load of each image, then 9 lane-shifted value slices
    # written straight into patch_ref (no xpad staging, no ref->ref copies).
    for n in range(nb):
        x_n = x_ref[n]                                   # (C, H*W) value
        for i in range(ksize_h):
            for j in range(ksize_w):
                t = i * ksize_w + j
                s = i * width + j
                patch_ref[t * c:(t + 1) * c, n * hwv:(n + 1) * hwv] = \
                    x_n[:, s:s + hwv]

    # One MXU GEMM for the whole batch block: (O, KPAD) @ (KPAD, NB*HWV).
    # The bias rides inside the GEMM (ones row x bias column); ReLU in f32.
    acc = jnp.dot(w_ref[...], patch_ref[...],
                  preferred_element_type=jnp.float32)
    acc = jnp.maximum(acc, 0.0)

    # Compact the W-strided valid columns directly into the (Ho, Wo) output
    # layout.  All post-processing stays inside the kernel: the wrapper emits
    # no reshape/slice kernel and the invalid right/bottom-edge columns never
    # reach HBM.  These are tiny masked VMEM stores (static offsets).
    n_out = o_ref.shape[1]
    for n in range(nb):
        base = n * hwv
        for r in range(out_h):
            rows = acc[:, base + r * width: base + r * width + out_w]
            rows = rows.astype(o_ref.dtype)              # (O, Wo)
            for o in range(n_out):
                o_ref[n, o, r, :] = rows[o]


@functools.partial(jax.jit,
                   static_argnames=("padding", "compute_dtype", "batch_block"))
def conv2d_relu(x_nchw, weight_oihw, bias, padding=0, compute_dtype=None,
                batch_block=None):
    """Conv2dReLU.forward: Conv2d(stride=1, padding=`padding`, bias) -> ReLU.

    Returns (N, O, Ho, Wo) straight from the Pallas kernel (no wrapper-side
    slice / reshape kernels).

    compute_dtype: optional MXU-input dtype (e.g. jnp.bfloat16 on v6e/v7x);
        leave None on v5e (no bf16 VPU) or for exact f32 numerics.
        Accumulation, bias and ReLU stay f32 either way.
    batch_block: images per grid step.  Default = whole batch (single grid
        step — best on single-TensorCore v5e/v6e).  Use 1 on v7x to shard the
        batch across its two TensorCores.
    """
    if padding:
        # TODO(synk): fold the padding halo into the in-kernel im2col slices
        # instead of materializing a padded copy of x in HBM.
        x_nchw = jnp.pad(
            x_nchw, ((0, 0), (0, 0), (padding, padding), (padding, padding)))

    N, C, H, W = x_nchw.shape
    O, _, KH, KW = weight_oihw.shape
    Ho, Wo = H - KH + 1, W - KW + 1
    HW = H * W
    HWV = (Ho - 1) * W + Wo
    out_dtype = x_nchw.dtype

    if batch_block is None:
        batch_block = N
    assert N % batch_block == 0

    # Contraction dim: KH*KW*C taps + 1 bias row, padded to a sublane multiple.
    k_real = KH * KW * C
    k_pad = ((k_real + 1 + 7) // 8) * 8

    # Free reshape (NCHW is already contiguous this way): spatial axis -> lanes.
    x_flat = x_nchw.reshape(N, C, HW)
    # (O, C, KH, KW) -> (O, KH*KW*C) tap-major / channel-minor, bias folded as
    # an extra column, zero-padded to k_pad.  Pure parameter prep.
    w_flat = jnp.transpose(weight_oihw, (0, 2, 3, 1)).reshape(O, k_real)
    w_full = jnp.concatenate(
        [w_flat, bias.reshape(O, 1),
         jnp.zeros((O, k_pad - k_real - 1), w_flat.dtype)], axis=1)

    if compute_dtype is not None:
        x_flat = x_flat.astype(compute_dtype)
        w_full = w_full.astype(compute_dtype)

    # VMEM scaling guard (v7x scoped default is 32 MiB): the patch scratch is
    # ~KH*KW x the input block, plus double-buffered in/out blocks.
    itemsize = x_flat.dtype.itemsize
    vmem_est = (k_pad * batch_block * HWV * itemsize
                + 2 * batch_block * C * HW * itemsize
                + 2 * batch_block * O * Ho * Wo * out_dtype.itemsize)
    assert vmem_est < 24 * 1024 * 1024, (
        "scale-up: tile the spatial axis with an extra grid dim and set "
        "vmem_limit_bytes before growing this kernel")

    kernel = functools.partial(conv_relu_kernel, width=W, out_h=Ho, out_w=Wo,
                               ksize_h=KH, ksize_w=KW)

    return pl.pallas_call(
        kernel,
        out_shape=jax.ShapeDtypeStruct((N, O, Ho, Wo), out_dtype),
        grid_spec=pltpu.PrefetchScalarGridSpec(
            num_scalar_prefetch=0,
            grid=(N // batch_block,),
            in_specs=[
                pl.BlockSpec((batch_block, C, HW), lambda b: (b, 0, 0)),
                # Constant index map -> tiny weight block not re-DMA'd per step.
                pl.BlockSpec((O, k_pad), lambda b: (0, 0)),
            ],
            out_specs=pl.BlockSpec((batch_block, O, Ho, Wo),
                                   lambda b: (b, 0, 0, 0)),
            scratch_shapes=[
                pltpu.VMEM((k_pad, batch_block * HWV), x_flat.dtype),
            ],
        ),
        compiler_params=pltpu.CompilerParams(
            dimension_semantics=("parallel",)),
    )(x_flat, w_full)


if __name__ == "__main__":
    # Module config: Conv2dReLU(n_inputs=4, n_outputs=8) == Conv2d(4, 8, 3,
    # stride=1, padding=0, bias=True) followed by ReLU.
    N, C_IN, H, W = 2, 4, 16, 16
    C_OUT, K = 8, 3

    key = jax.random.PRNGKey(0)
    k_x, k_w, k_b = jax.random.split(key, 3)

    x = jax.random.normal(k_x, (N, C_IN, H, W), dtype=jnp.float32)
    fan_in = C_IN * K * K
    bound = 1.0 / (fan_in ** 0.5)
    weight = jax.random.uniform(k_w, (C_OUT, C_IN, K, K), jnp.float32,
                                -bound, bound)
    bias = jax.random.uniform(k_b, (C_OUT,), jnp.float32, -bound, bound)

    # Reference: XLA conv (NCHW / OIHW, VALID) + bias + ReLU.
    ref = jax.lax.conv_general_dilated(
        x, weight, window_strides=(1, 1), padding="VALID",
        dimension_numbers=("NCHW", "OIHW", "NCHW"))
    ref = jnp.maximum(ref + bias[None, :, None, None], 0.0)

    # Default path: whole batch in one grid step (single-TC v5e/v6e friendly).
    y = jax.block_until_ready(conv2d_relu(x, weight, bias))
    assert y.shape == (N, C_OUT, H - K + 1, W - K + 1), y.shape
    err = float(jnp.max(jnp.abs(y - ref)))
    assert err < 1e-5, err

    # batch_block=1: one image per "parallel" grid step (both v7x TCs).
    y1 = jax.block_until_ready(conv2d_relu(x, weight, bias, batch_block=1))
    err1 = float(jnp.max(jnp.abs(y1 - ref)))
    assert err1 < 1e-5, err1

    print("KERNEL_OK")
</pallas_src>

<mosaic_0001>
module attributes {stable_mosaic.version = 11 : i64} {
  func.func @conv_relu_kernel(%arg0: i32, %arg1: memref<2x4x256xf32, #tpu.memory_space<vmem>>, %arg2: memref<8x40xf32, #tpu.memory_space<vmem>>, %arg3: memref<2x8x14x14xf32, #tpu.memory_space<vmem>>, %arg4: memref<40x444xf32, #tpu.memory_space<vmem>>) attributes {dimension_semantics = [#tpu.dimension_semantics<parallel>], iteration_bounds = array<i64: 1>, scalar_prefetch = 0 : i64, scratch_operands = 1 : i64, tpu.core_type = #tpu.core_type<tc>, window_params = [{transform_indices = @transform_0, window_bounds = array<i64: 2, 4, 256>}, {pipeline_mode = #tpu.pipeline_mode<synchronous>, transform_indices = @transform_1, window_bounds = array<i64: 8, 40>}, {transform_indices = @transform_2, window_bounds = array<i64: 2, 8, 14, 14>}]} {
    %0 = tpu.iota {dimensions = array<i32: 0>} : vector<4x444xi32>
    %c0_i32 = arith.constant 0 : i32
    %1 = vector.broadcast %c0_i32 : i32 to vector<4x444xi32>
    %2 = arith.cmpi eq, %0, %1 : vector<4x444xi32>
    %3 = arith.extui %2 : vector<4x444xi1> to vector<4x444xi32>
    %4 = arith.sitofp %3 : vector<4x444xi32> to vector<4x444xf32>
    %c36 = arith.constant 36 : index
    %c0 = arith.constant 0 : index
    %5 = vector.load %arg4[%c36, %c0] : memref<40x444xf32, #tpu.memory_space<vmem>>, vector<4x444xf32>
    tpu.vector_store %arg4[%c36, %c0], %4 {strides = array<i32>} : memref<40x444xf32, #tpu.memory_space<vmem>>, vector<4x444xf32>,
    %c0_0 = arith.constant 0 : index
    %c0_1 = arith.constant 0 : index
    %c0_2 = arith.constant 0 : index
    %6 = vector.load %arg1[%c0_0, %c0_1, %c0_2] : memref<2x4x256xf32, #tpu.memory_space<vmem>>, vector<1x4x256xf32>
    %7 = vector.shape_cast %6 : vector<1x4x256xf32> to vector<4x256xf32>
    %8 = vector.extract_strided_slice %7 {offsets = [0, 0], sizes = [4, 222], strides = [1, 1]} : vector<4x256xf32> to vector<4x222xf32>
    %c0_3 = arith.constant 0 : index
    %c0_4 = arith.constant 0 : index
    %9 = vector.load %arg4[%c0_3, %c0_4] : memref<40x444xf32, #tpu.memory_space<vmem>>, vector<4x222xf32>
    tpu.vector_store %arg4[%c0_3, %c0_4], %8 {strides = array<i32>} : memref<40x444xf32, #tpu.memory_space<vmem>>, vector<4x222xf32>,
    %10 = vector.extract_strided_slice %7 {offsets = [0, 1], sizes = [4, 222], strides = [1, 1]} : vector<4x256xf32> to vector<4x222xf32>
    %c4 = arith.constant 4 : index
    %c0_5 = arith.constant 0 : index
    %11 = vector.load %arg4[%c4, %c0_5] : memref<40x444xf32, #tpu.memory_space<vmem>>, vector<4x222xf32>
    tpu.vector_store %arg4[%c4, %c0_5], %10 {strides = array<i32>} : memref<40x444xf32, #tpu.memory_space<vmem>>, vector<4x222xf32>,
    %12 = vector.extract_strided_slice %7 {offsets = [0, 2], sizes = [4, 222], strides = [1, 1]} : vector<4x256xf32> to vector<4x222xf32>
    %c8 = arith.constant 8 : index
    %c0_6 = arith.constant 0 : index
    %13 = vector.load %arg4[%c8, %c0_6] : memref<40x444xf32, #tpu.memory_space<vmem>>, vector<4x222xf32>
    tpu.vector_store %arg4[%c8, %c0_6], %12 {strides = array<i32>} : memref<40x444xf32, #tpu.memory_space<vmem>>, vector<4x222xf32>,
    %14 = vector.extract_strided_slice %7 {offsets = [0, 16], sizes = [4, 222], strides = [1, 1]} : vector<4x256xf32> to vector<4x222xf32>
    %c12 = arith.constant 12 : index
    %c0_7 = arith.constant 0 : index
    %15 = vector.load %arg4[%c12, %c0_7] : memref<40x444xf32, #tpu.memory_space<vmem>>, vector<4x222xf32>
    tpu.vector_store %arg4[%c12, %c0_7], %14 {strides = array<i32>} : memref<40x444xf32, #tpu.memory_space<vmem>>, vector<4x222xf32>,
    %16 = vector.extract_strided_slice %7 {offsets = [0, 17], sizes = [4, 222], strides = [1, 1]} : vector<4x256xf32> to vector<4x222xf32>
    %c16 = arith.constant 16 : index
    %c0_8 = arith.constant 0 : index
    %17 = vector.load %arg4[%c16, %c0_8] : memref<40x444xf32, #tpu.memory_space<vmem>>, vector<4x222xf32>
    tpu.vector_store %arg4[%c16, %c0_8], %16 {strides = array<i32>} : memref<40x444xf32, #tpu.memory_space<vmem>>, vector<4x222xf32>,
    %18 = vector.extract_strided_slice %7 {offsets = [0, 18], sizes = [4, 222], strides = [1, 1]} : vector<4x256xf32> to vector<4x222xf32>
    %c20 = arith.constant 20 : index
    %c0_9 = arith.constant 0 : index
    %19 = vector.load %arg4[%c20, %c0_9] : memref<40x444xf32, #tpu.memory_space<vmem>>, vector<4x222xf32>
    tpu.vector_store %arg4[%c20, %c0_9], %18 {strides = array<i32>} : memref<40x444xf32, #tpu.memory_space<vmem>>, vector<4x222xf32>,
    %20 = vector.extract_strided_slice %7 {offsets = [0, 32], sizes = [4, 222], strides = [1, 1]} : vector<4x256xf32> to vector<4x222xf32>
    %c24 = arith.constant 24 : index
    %c0_10 = arith.constant 0 : index
    %21 = vector.load %arg4[%c24, %c0_10] : memref<40x444xf32, #tpu.memory_space<vmem>>, vector<4x222xf32>
    tpu.vector_store %arg4[%c24, %c0_10], %20 {strides = array<i32>} : memref<40x444xf32, #tpu.memory_space<vmem>>, vector<4x222xf32>,
    %22 = vector.extract_strided_slice %7 {offsets = [0, 33], sizes = [4, 222], strides = [1, 1]} : vector<4x256xf32> to vector<4x222xf32>
    %c28 = arith.constant 28 : index
    %c0_11 = arith.constant 0 : index
    %23 = vector.load %arg4[%c28, %c0_11] : memref<40x444xf32, #tpu.memory_space<vmem>>, vector<4x222xf32>
    tpu.vector_store %arg4[%c28, %c0_11], %22 {strides = array<i32>} : memref<40x444xf32, #tpu.memory_space<vmem>>, vector<4x222xf32>,
    %24 = vector.extract_strided_slice %7 {offsets = [0, 34], sizes = [4, 222], strides = [1, 1]} : vector<4x256xf32> to vector<4x222xf32>
    %c32 = arith.constant 32 : index
    %c0_12 = arith.constant 0 : index
    %25 = vector.load %arg4[%c32, %c0_12] : memref<40x444xf32, #tpu.memory_space<vmem>>, vector<4x222xf32>
    tpu.vector_store %arg4[%c32, %c0_12], %24 {strides = array<i32>} : memref<40x444xf32, #tpu.memory_space<vmem>>, vector<4x222xf32>,
    %c1 = arith.constant 1 : index
    %c0_13 = arith.constant 0 : index
    %c0_14 = arith.constant 0 : index
    %26 = vector.load %arg1[%c1, %c0_13, %c0_14] : memref<2x4x256xf32, #tpu.memory_space<vmem>>, vector<1x4x256xf32>
    %27 = vector.shape_cast %26 : vector<1x4x256xf32> to vector<4x256xf32>
    %28 = vector.extract_strided_slice %27 {offsets = [0, 0], sizes = [4, 222], strides = [1, 1]} : vector<4x256xf32> to vector<4x222xf32>
    %c0_15 = arith.constant 0 : index
    %c222 = arith.constant 222 : index
    %29 = vector.load %arg4[%c0_15, %c222] : memref<40x444xf32, #tpu.memory_space<vmem>>, vector<4x222xf32>
    tpu.vector_store %arg4[%c0_15, %c222], %28 {strides = array<i32>} : memref<40x444xf32, #tpu.memory_space<vmem>>, vector<4x222xf32>,
    %30 = vector.extract_strided_slice %27 {offsets = [0, 1], sizes = [4, 222], strides = [1, 1]} : vector<4x256xf32> to vector<4x222xf32>
    %c4_16 = arith.constant 4 : index
    %c222_17 = arith.constant 222 : index
    %31 = vector.load %arg4[%c4_16, %c222_17] : memref<40x444xf32, #tpu.memory_space<vmem>>, vector<4x222xf32>
    tpu.vector_store %arg4[%c4_16, %c222_17], %30 {strides = array<i32>} : memref<40x444xf32, #tpu.memory_space<vmem>>, vector<4x222xf32>,
    %32 = vector.extract_strided_slice %27 {offsets = [0, 2], sizes = [4, 222], strides = [1, 1]} : vector<4x256xf32> to vector<4x222xf32>
    %c8_18 = arith.constant 8 : index
    %c222_19 = arith.constant 222 : index
    %33 = vector.load %arg4[%c8_18, %c222_19] : memref<40x444xf32, #tpu.memory_space<vmem>>, vector<4x222xf32>
    tpu.vector_store %arg4[%c8_18, %c222_19], %32 {strides = array<i32>} : memref<40x444xf32, #tpu.memory_space<vmem>>, vector<4x222xf32>,
    %34 = vector.extract_strided_slice %27 {offsets = [0, 16], sizes = [4, 222], strides = [1, 1]} : vector<4x256xf32> to vector<4x222xf32>
    %c12_20 = arith.constant 12 : index
    %c222_21 = arith.constant 222 : index
    %35 = vector.load %arg4[%c12_20, %c222_21] : memref<40x444xf32, #tpu.memory_space<vmem>>, vector<4x222xf32>
    tpu.vector_store %arg4[%c12_20, %c222_21], %34 {strides = array<i32>} : memref<40x444xf32, #tpu.memory_space<vmem>>, vector<4x222xf32>,
    %36 = vector.extract_strided_slice %27 {offsets = [0, 17], sizes = [4, 222], strides = [1, 1]} : vector<4x256xf32> to vector<4x222xf32>
    %c16_22 = arith.constant 16 : index
    %c222_23 = arith.constant 222 : index
    %37 = vector.load %arg4[%c16_22, %c222_23] : memref<40x444xf32, #tpu.memory_space<vmem>>, vector<4x222xf32>
    tpu.vector_store %arg4[%c16_22, %c222_23], %36 {strides = array<i32>} : memref<40x444xf32, #tpu.memory_space<vmem>>, vector<4x222xf32>,
    %38 = vector.extract_strided_slice %27 {offsets = [0, 18], sizes = [4, 222], strides = [1, 1]} : vector<4x256xf32> to vector<4x222xf32>
    %c20_24 = arith.constant 20 : index
    %c222_25 = arith.constant 222 : index
    %39 = vector.load %arg4[%c20_24, %c222_25] : memref<40x444xf32, #tpu.memory_space<vmem>>, vector<4x222xf32>
    tpu.vector_store %arg4[%c20_24, %c222_25], %38 {strides = array<i32>} : memref<40x444xf32, #tpu.memory_space<vmem>>, vector<4x222xf32>,
    %40 = vector.extract_strided_slice %27 {offsets = [0, 32], sizes = [4, 222], strides = [1, 1]} : vector<4x256xf32> to vector<4x222xf32>
    %c24_26 = arith.constant 24 : index
    %c222_27 = arith.constant 222 : index
    %41 = vector.load %arg4[%c24_26, %c222_27] : memref<40x444xf32, #tpu.memory_space<vmem>>, vector<4x222xf32>
    tpu.vector_store %arg4[%c24_26, %c222_27], %40 {strides = array<i32>} : memref<40x444xf32, #tpu.memory_space<vmem>>, vector<4x222xf32>,
    %42 = vector.extract_strided_slice %27 {offsets = [0, 33], sizes = [4, 222], strides = [1, 1]} : vector<4x256xf32> to vector<4x222xf32>
    %c28_28 = arith.constant 28 : index
    %c222_29 = arith.constant 222 : index
    %43 = vector.load %arg4[%c28_28, %c222_29] : memref<40x444xf32, #tpu.memory_space<vmem>>, vector<4x222xf32>
    tpu.vector_store %arg4[%c28_28, %c222_29], %42 {strides = array<i32>} : memref<40x444xf32, #tpu.memory_space<vmem>>, vector<4x222xf32>,
    %44 = vector.extract_strided_slice %27 {offsets = [0, 34], sizes = [4, 222], strides = [1, 1]} : vector<4x256xf32> to vector<4x222xf32>
    %c32_30 = arith.constant 32 : index
    %c222_31 = arith.constant 222 : index
    %45 = vector.load %arg4[%c32_30, %c222_31] : memref<40x444xf32, #tpu.memory_space<vmem>>, vector<4x222xf32>
    tpu.vector_store %arg4[%c32_30, %c222_31], %44 {strides = array<i32>} : memref<40x444xf32, #tpu.memory_space<vmem>>, vector<4x222xf32>,
    %c0_32 = arith.constant 0 : index
    %c0_33 = arith.constant 0 : index
    %46 = vector.load %arg2[%c0_32, %c0_33] : memref<8x40xf32, #tpu.memory_space<vmem>>, vector<8x40xf32>
    %c0_34 = arith.constant 0 : index
    %c0_35 = arith.constant 0 : index
    %47 = vector.load %arg4[%c0_34, %c0_35] : memref<40x444xf32, #tpu.memory_space<vmem>>, vector<40x444xf32>
    %cst = arith.constant dense<0.000000e+00> : vector<8x444xf32>
    %48 = tpu.matmul %46, %47, %cst {dimension_numbers = #tpu.dot_dimension_numbers<[1], [0], [0], [1], [0, 0, 1, 1], [], []>} : vector<8x40xf32>, vector<40x444xf32>, vector<8x444xf32> -> vector<8x444xf32>
    %cst_36 = arith.constant 0.000000e+00 : f32
    %49 = vector.broadcast %cst_36 : f32 to vector<8x444xf32>
    %50 = arith.maximumf %48, %49 : vector<8x444xf32>
    %51 = vector.extract_strided_slice %50 {offsets = [0, 0], sizes = [8, 14], strides = [1, 1]} : vector<8x444xf32> to vector<8x14xf32>
    %52 = vector.extract_strided_slice %51 {offsets = [0, 0], sizes = [1, 14], strides = [1, 1]} : vector<8x14xf32> to vector<1x14xf32>
    %53 = vector.shape_cast %52 : vector<1x14xf32> to vector<14xf32>
    %c0_37 = arith.constant 0 : index
    %c0_38 = arith.constant 0 : index
    %c0_39 = arith.constant 0 : index
    %c0_40 = arith.constant 0 : index
    %54 = vector.load %arg3[%c0_37, %c0_38, %c0_39, %c0_40] : memref<2x8x14x14xf32, #tpu.memory_space<vmem>>, vector<1x1x1x14xf32>
    %55 = vector.shape_cast %54 : vector<1x1x1x14xf32> to vector<14xf32>
    %56 = vector.shape_cast %53 : vector<14xf32> to vector<1x1x1x14xf32>
    tpu.vector_store %arg3[%c0_37, %c0_38, %c0_39, %c0_40], %56 {strides = array<i32>} : memref<2x8x14x14xf32, #tpu.memory_space<vmem>>, vector<1x1x1x14xf32>,
    %57 = vector.extract_strided_slice %51 {offsets = [1, 0], sizes = [1, 14], strides = [1, 1]} : vector<8x14xf32> to vector<1x14xf32>
    %58 = vector.shape_cast %57 : vector<1x14xf32> to vector<14xf32>
    %c0_41 = arith.constant 0 : index
    %c1_42 = arith.constant 1 : index
    %c0_43 = arith.constant 0 : index
    %c0_44 = arith.constant 0 : index
    %59 = vector.load %arg3[%c0_41, %c1_42, %c0_43, %c0_44] : memref<2x8x14x14xf32, #tpu.memory_space<vmem>>, vector<1x1x1x14xf32>
    %60 = vector.shape_cast %59 : vector<1x1x1x14xf32> to vector<14xf32>
    %61 = vector.shape_cast %58 : vector<14xf32> to vector<1x1x1x14xf32>
    tpu.vector_store %arg3[%c0_41, %c1_42, %c0_43, %c0_44], %61 {strides = array<i32>} : memref<2x8x14x14xf32, #tpu.memory_space<vmem>>, vector<1x1x1x14xf32>,
    %62 = vector.extract_strided_slice %51 {offsets = [2, 0], sizes = [1, 14], strides = [1, 1]} : vector<8x14xf32> to vector<1x14xf32>
    %63 = vector.shape_cast %62 : vector<1x14xf32> to vector<14xf32>
    %c0_45 = arith.constant 0 : index
    %c2 = arith.constant 2 : index
    %c0_46 = arith.constant 0 : index
    %c0_47 = arith.constant 0 : index
    %64 = vector.load %arg3[%c0_45, %c2, %c0_46, %c0_47] : memref<2x8x14x14xf32, #tpu.memory_space<vmem>>, vector<1x1x1x14xf32>
    %65 = vector.shape_cast %64 : vector<1x1x1x14xf32> to vector<14xf32>
    %66 = vector.shape_cast %63 : vector<14xf32> to vector<1x1x1x14xf32>
    tpu.vector_store %arg3[%c0_45, %c2, %c0_46, %c0_47], %66 {strides = array<i32>} : memref<2x8x14x14xf32, #tpu.memory_space<vmem>>, vector<1x1x1x14xf32>,
    %67 = vector.extract_strided_slice %51 {offsets = [3, 0], sizes = [1, 14], strides = [1, 1]} : vector<8x14xf32> to vector<1x14xf32>
    %68 = vector.shape_cast %67 : vector<1x14xf32> to vector<14xf32>
    %c0_48 = arith.constant 0 : index
    %c3 = arith.constant 3 : index
    %c0_49 = arith.constant 0 : index
    %c0_50 = arith.constant 0 : index
    %69 = vector.load %arg3[%c0_48, %c3, %c0_49, %c0_50] : memref<2x8x14x14xf32, #tpu.memory_space<vmem>>, vector<1x1x1x14xf32>
    %70 = vector.shape_cast %69 : vector<1x1x1x14xf32> to vector<14xf32>
    %71 = vector.shape_cast %68 : vector<14xf32> to vector<1x1x1x14xf32>
    tpu.vector_store %arg3[%c0_48, %c3, %c0_49, %c0_50], %71 {strides = array<i32>} : memref<2x8x14x14xf32, #tpu.memory_space<vmem>>, vector<1x1x1x14xf32>,
    %72 = vector.extract_strided_slice %51 {offsets = [4, 0], sizes = [1, 14], strides = [1, 1]} : vector<8x14xf32> to vector<1x14xf32>
    %73 = vector.shape_cast %72 : vector<1x14xf32> to vector<14xf32>
    %c0_51 = arith.constant 0 : index
    %c4_52 = arith.constant 4 : index
    %c0_53 = arith.constant 0 : index
    %c0_54 = arith.constant 0 : index
    %74 = vector.load %arg3[%c0_51, %c4_52, %c0_53, %c0_54] : memref<2x8x14x14xf32, #tpu.memory_space<vmem>>, vector<1x1x1x14xf32>
    %75 = vector.shape_cast %74 : vector<1x1x1x14xf32> to vector<14xf32>
    %76 = vector.shape_cast %73 : vector<14xf32> to vector<1x1x1x14xf32>
    tpu.vector_store %arg3[%c0_51, %c4_52, %c0_53, %c0_54], %76 {strides = array<i32>} : memref<2x8x14x14xf32, #tpu.memory_space<vmem>>, vector<1x1x1x14xf32>,
    %77 = vector.extract_strided_slice %51 {offsets = [5, 0], sizes = [1, 14], strides = [1, 1]} : vector<8x14xf32> to vector<1x14xf32>
    %78 = vector.shape_cast %77 : vector<1x14xf32> to vector<14xf32>
    %c0_55 = arith.constant 0 : index
    %c5 = arith.constant 5 : index
    %c0_56 = arith.constant 0 : index
    %c0_57 = arith.constant 0 : index
    %79 = vector.load %arg3[%c0_55, %c5, %c0_56, %c0_57] : memref<2x8x14x14xf32, #tpu.memory_space<vmem>>, vector<1x1x1x14xf32>
    %80 = vector.shape_cast %79 : vector<1x1x1x14xf32> to vector<14xf32>
    %81 = vector.shape_cast %78 : vector<14xf32> to vector<1x1x1x14xf32>
    tpu.vector_store %arg3[%c0_55, %c5, %c0_56, %c0_57], %81 {strides = array<i32>} : memref<2x8x14x14xf32, #tpu.memory_space<vmem>>, vector<1x1x1x14xf32>,
    %82 = vector.extract_strided_slice %51 {offsets = [6, 0], sizes = [1, 14], strides = [1, 1]} : vector<8x14xf32> to vector<1x14xf32>
    %83 = vector.shape_cast %82 : vector<1x14xf32> to vector<14xf32>
    %c0_58 = arith.constant 0 : index
    %c6 = arith.constant 6 : index
    %c0_59 = arith.constant 0 : index
    %c0_60 = arith.constant 0 : index
    %84 = vector.load %arg3[%c0_58, %c6, %c0_59, %c0_60] : memref<2x8x14x14xf32, #tpu.memory_space<vmem>>, vector<1x1x1x14xf32>
    %85 = vector.shape_cast %84 : vector<1x1x1x14xf32> to vector<14xf32>
    %86 = vector.shape_cast %83 : vector<14xf32> to vector<1x1x1x14xf32>
    tpu.vector_store %arg3[%c0_58, %c6, %c0_59, %c0_60], %86 {strides = array<i32>} : memref<2x8x14x14xf32, #tpu.memory_space<vmem>>, vector<1x1x1x14xf32>,
    %87 = vector.extract_strided_slice %51 {offsets = [7, 0], sizes = [1, 14], strides = [1, 1]} : vector<8x14xf32> to vector<1x14xf32>
    %88 = vector.shape_cast %87 : vector<1x14xf32> to vector<14xf32>
    %c0_61 = arith.constant 0 : index
    %c7 = arith.constant 7 : index
    %c0_62 = arith.constant 0 : index
    %c0_63 = arith.constant 0 : index
    %89 = vector.load %arg3[%c0_61, %c7, %c0_62, %c0_63] : memref<2x8x14x14xf32, #tpu.memory_space<vmem>>, vector<1x1x1x14xf32>
    %90 = vector.shape_cast %89 : vector<1x1x1x14xf32> to vector<14xf32>
    %91 = vector.shape_cast %88 : vector<14xf32> to vector<1x1x1x14xf32>
    tpu.vector_store %arg3[%c0_61, %c7, %c0_62, %c0_63], %91 {strides = array<i32>} : memref<2x8x14x14xf32, #tpu.memory_space<vmem>>, vector<1x1x1x14xf32>,
    %92 = vector.extract_strided_slice %50 {offsets = [0, 16], sizes = [8, 14], strides = [1, 1]} : vector<8x444xf32> to vector<8x14xf32>
    %93 = vector.extract_strided_slice %92 {offsets = [0, 0], sizes = [1, 14], strides = [1, 1]} : vector<8x14xf32> to vector<1x14xf32>
    %94 = vector.shape_cast %93 : vector<1x14xf32> to vector<14xf32>
    %c0_64 = arith.constant 0 : index
    %c0_65 = arith.constant 0 : index
    %c1_66 = arith.constant 1 : index
    %c0_67 = arith.constant 0 : index
    %95 = vector.load %arg3[%c0_64, %c0_65, %c1_66, %c0_67] : memref<2x8x14x14xf32, #tpu.memory_space<vmem>>, vector<1x1x1x14xf32>
    %96 = vector.shape_cast %95 : vector<1x1x1x14xf32> to vector<14xf32>
    %97 = vector.shape_cast %94 : vector<14xf32> to vector<1x1x1x14xf32>
    tpu.vector_store %arg3[%c0_64, %c0_65, %c1_66, %c0_67], %97 {strides = array<i32>} : memref<2x8x14x14xf32, #tpu.memory_space<vmem>>, vector<1x1x1x14xf32>,
    %98 = vector.extract_strided_slice %92 {offsets = [1, 0], sizes = [1, 14], strides = [1, 1]} : vector<8x14xf32> to vector<1x14xf32>
    %99 = vector.shape_cast %98 : vector<1x14xf32> to vector<14xf32>
    %c0_68 = arith.constant 0 : index
    %c1_69 = arith.constant 1 : index
    %c1_70 = arith.constant 1 : index
    %c0_71 = arith.constant 0 : index
    %100 = vector.load %arg3[%c0_68, %c1_69, %c1_70, %c0_71] : memref<2x8x14x14xf32, #tpu.memory_space<vmem>>, vector<1x1x1x14xf32>
    %101 = vector.shape_cast %100 : vector<1x1x1x14xf32> to vector<14xf32>
    %102 = vector.shape_cast %99 : vector<14xf32> to vector<1x1x1x14xf32>
    tpu.vector_store %arg3[%c0_68, %c1_69, %c1_70, %c0_71], %102 {strides = array<i32>} : memref<2x8x14x14xf32, #tpu.memory_space<vmem>>, vector<1x1x1x14xf32>,
    %103 = vector.extract_strided_slice %92 {offsets = [2, 0], sizes = [1, 14], strides = [1, 1]} : vector<8x14xf32> to vector<1x14xf32>
    %104 = vector.shape_cast %103 : vector<1x14xf32> to vector<14xf32>
    %c0_72 = arith.constant 0 : index
    %c2_73 = arith.constant 2 : index
    %c1_74 = arith.constant 1 : index
    %c0_75 = arith.constant 0 : index
    %105 = vector.load %arg3[%c0_72, %c2_73, %c1_74, %c0_75] : memref<2x8x14x14xf32, #tpu.memory_space<vmem>>, vector<1x1x1x14xf32>
    %106 = vector.shape_cast %105 : vector<1x1x1x14xf32> to vector<14xf32>
    %107 = vector.shape_cast %104 : vector<14xf32> to vector<1x1x1x14xf32>
    tpu.vector_store %arg3[%c0_72, %c2_73, %c1_74, %c0_75], %107 {strides = array<i32>} : memref<2x8x14x14xf32, #tpu.memory_space<vmem>>, vector<1x1x1x14xf32>,
    %108 = vector.extract_strided_slice %92 {offsets = [3, 0], sizes = [1, 14], strides = [1, 1]} : vector<8x14xf32> to vector<1x14xf32>
    %109 = vector.shape_cast %108 : vector<1x14xf32> to vector<14xf32>
    %c0_76 = arith.constant 0 : index
    %c3_77 = arith.constant 3 : index
    %c1_78 = arith.constant 1 : index
    %c0_79 = arith.constant 0 : index
    %110 = vector.load %arg3[%c0_76, %c3_77, %c1_78, %c0_79] : memref<2x8x14x14xf32, #tpu.memory_space<vmem>>, vector<1x1x1x14xf32>
    %111 = vector.shape_cast %110 : vector<1x1x1x14xf32> to vector<14xf32>
    %112 = vector.shape_cast %109 : vector<14xf32> to vector<1x1x1x14xf32>
    tpu.vector_store %arg3[%c0_76, %c3_77, %c1_78, %c0_79], %112 {strides = array<i32>} : memref<2x8x14x14xf32, #tpu.memory_space<vmem>>, vector<1x1x1x14xf32>,
    %113 = vector.extract_strided_slice %92 {offsets = [4, 0], sizes = [1, 14], strides = [1, 1]} : vector<8x14xf32> to vector<1x14xf32>
    %114 = vector.shape_cast %113 : vector<1x14xf32> to vector<14xf32>
    %c0_80 = arith.constant 0 : index
    %c4_81 = arith.constant 4 : index
    %c1_82 = arith.constant 1 : index
    %c0_83 = arith.constant 0 : index
    %115 = vector.load %arg3[%c0_80, %c4_81, %c1_82, %c0_83] : memref<2x8x14x14xf32, #tpu.memory_space<vmem>>, vector<1x1x1x14xf32>
    %116 = vector.shape_cast %115 : vector<1x1x1x14xf32> to vector<14xf32>
    %117 = vector.shape_cast %114 : vector<14xf32> to vector<1x1x1x14xf32>
    tpu.vector_store %arg3[%c0_80, %c4_81, %c1_82, %c0_83], %117 {strides = array<i32>} : memref<2x8x14x14xf32, #tpu.memory_space<vmem>>, vector<1x1x1x14xf32>,
    %118 = vector.extract_strided_slice %92 {offsets = [5, 0], sizes = [1, 14], strides = [1, 1]} : vector<8x14xf32> to vector<1x14xf32>
    %119 = vector.shape_cast %118 : vector<1x14xf32> to vector<14xf32>
    %c0_84 = arith.constant 0 : index
    %c5_85 = arith.constant 5 : index
    %c1_86 = arith.constant 1 : index
    %c0_87 = arith.constant 0 : index
    %120 = vector.load %arg3[%c0_84, %c5_85, %c1_86, %c0_87] : memref<2x8x14x14xf32, #tpu.memory_space<vmem>>, vector<1x1x1x14xf32>
    %121 = vector.shape_cast %120 : vector<1x1x1x14xf32> to vector<14xf32>
    %122 = vector.shape_cast %119 : vector<14xf32> to vector<1x1x1x14xf32>
    tpu.vector_store %arg3[%c0_84, %c5_85, %c1_86, %c0_87], %122 {strides = array<i32>} : memref<2x8x14x14xf32, #tpu.memory_space<vmem>>, vector<1x1x1x14xf32>,
    %123 = vector.extract_strided_slice %92 {offsets = [6, 0], sizes = [1, 14], strides = [1, 1]} : vector<8x14xf32> to vector<1x14xf32>
    %124 = vector.shape_cast %123 : vector<1x14xf32> to vector<14xf32>
    %c0_88 = arith.constant 0 : index
    %c6_89 = arith.constant 6 : index
    %c1_90 = arith.constant 1 : index
    %c0_91 = arith.constant 0 : index
    %125 = vector.load %arg3[%c0_88, %c6_89, %c1_90, %c0_91] : memref<2x8x14x14xf32, #tpu.memory_space<vmem>>, vector<1x1x1x14xf32>
    %126 = vector.shape_cast %125 : vector<1x1x1x14xf32> to vector<14xf32>
    %127 = vector.shape_cast %124 : vector<14xf32> to vector<1x1x1x14xf32>
    tpu.vector_store %arg3[%c0_88, %c6_89, %c1_90, %c0_91], %127 {strides = array<i32>} : memref<2x8x14x14xf32, #tpu.memory_space<vmem>>, vector<1x1x1x14xf32>,
    %128 = vector.extract_strided_slice %92 {offsets = [7, 0], sizes = [1, 14], strides = [1, 1]} : vector<8x14xf32> to vector<1x14xf32>
    %129 = vector.shape_cast %128 : vector<1x14xf32> to vector<14xf32>
    %c0_92 = arith.constant 0 : index
    %c7_93 = arith.constant 7 : index
    %c1_94 = arith.constant 1 : index
    %c0_95 = arith.constant 0 : index
    %130 = vector.load %arg3[%c0_92, %c7_93, %c1_94, %c0_95] : memref<2x8x14x14xf32, #tpu.memory_space<vmem>>, vector<1x1x1x14xf32>
    %131 = vector.shape_cast %130 : vector<1x1x1x14xf32> to vector<14xf32>
    %132 = vector.shape_cast %129 : vector<14xf32> to vector<1x1x1x14xf32>
    tpu.vector_store %arg3[%c0_92, %c7_93, %c1_94, %c0_95], %132 {strides = array<i32>} : memref<2x8x14x14xf32, #tpu.memory_space<vmem>>, vector<1x1x1x14xf32>,
    %133 = vector.extract_strided_slice %50 {offsets = [0, 32], sizes = [8, 14], strides = [1, 1]} : vector<8x444xf32> to vector<8x14xf32>
    %134 = vector.extract_strided_slice %133 {offsets = [0, 0], sizes = [1, 14], strides = [1, 1]} : vector<8x14xf32> to vector<1x14xf32>
    %135 = vector.shape_cast %134 : vector<1x14xf32> to vector<14xf32>
    %c0_96 = arith.constant 0 : index
    %c0_97 = arith.constant 0 : index
    %c2_98 = arith.constant 2 : index
    %c0_99 = arith.constant 0 : index
    %136 = vector.load %arg3[%c0_96, %c0_97, %c2_98, %c0_99] : memref<2x8x14x14xf32, #tpu.memory_space<vmem>>, vector<1x1x1x14xf32>
    %137 = vector.shape_cast %136 : vector<1x1x1x14xf32> to vector<14xf32>
    %138 = vector.shape_cast %135 : vector<14xf32> to vector<1x1x1x14xf32>
    tpu.vector_store %arg3[%c0_96, %c0_97, %c2_98, %c0_99], %138 {strides = array<i32>} : memref<2x8x14x14xf32, #tpu.memory_space<vmem>>, vector<1x1x1x14xf32>,
    %139 = vector.extract_strided_slice %133 {offsets = [1, 0], sizes = [1, 14], strides = [1, 1]} : vector<8x14xf32> to vector<1x14xf32>
    %140 = vector.shape_cast %139 : vector<1x14xf32> to vector<14xf32>
    %c0_100 = arith.constant 0 : index
    %c1_101 = arith.constant 1 : index
    %c2_102 = arith.constant 2 : index
    %c0_103 = arith.constant 0 : index
    %141 = vector.load %arg3[%c0_100, %c1_101, %c2_102, %c0_103] : memref<2x8x14x14xf32, #tpu.memory_space<vmem>>, vector<1x1x1x14xf32>
    %142 = vector.shape_cast %141 : vector<1x1x1x14xf32> to vector<14xf32>
    %143 = vector.shape_cast %140 : vector<14xf32> to vector<1x1x1x14xf32>
    tpu.vector_store %arg3[%c0_100, %c1_101, %c2_102, %c0_103], %143 {strides = array<i32>} : memref<2x8x14x14xf32, #tpu.memory_space<vmem>>, vector<1x1x1x14xf32>,
    %144 = vector.extract_strided_slice %133 {offsets = [2, 0], sizes = [1, 14], strides = [1, 1]} : vector<8x14xf32> to vector<1x14xf32>
    %145 = vector.shape_cast %144 : vector<1x14xf32> to vector<14xf32>
    %c0_104 = arith.constant 0 : index
    %c2_105 = arith.constant 2 : index
    %c2_106 = arith.constant 2 : index
    %c0_107 = arith.constant 0 : index
    %146 = vector.load %arg3[%c0_104, %c2_105, %c2_106, %c0_107] : memref<2x8x14x14xf32, #tpu.memory_space<vmem>>, vector<1x1x1x14xf32>
    %147 = vector.shape_cast %146 : vector<1x1x1x14xf32> to vector<14xf32>
    %148 = vector.shape_cast %145 : vector<14xf32> to vector<1x1x1x14xf32>
    tpu.vector_store %arg3[%c0_104, %c2_105, %c2_106, %c0_107], %148 {strides = array<i32>} : memref<2x8x14x14xf32, #tpu.memory_space<vmem>>, vector<1x1x1x14xf32>,
    %149 = vector.extract_strided_slice %133 {offsets = [3, 0], sizes = [1, 14], strides = [1, 1]} : vector<8x14xf32> to vector<1x14xf32>
    %150 = vector.shape_cast %149 : vector<1x14xf32> to vector<14xf32>
    %c0_108 = arith.constant 0 : index
    %c3_109 = arith.constant 3 : index
    %c2_110 = arith.constant 2 : index
    %c0_111 = arith.constant 0 : index
    %151 = vector.load %arg3[%c0_108, %c3_109, %c2_110, %c0_111] : memref<2x8x14x14xf32, #tpu.memory_space<vmem>>, vector<1x1x1x14xf32>
    %152 = vector.shape_cast %151 : vector<1x1x1x14xf32> to vector<14xf32>
    %153 = vector.shape_cast %150 : vector<14xf32> to vector<1x1x1x14xf32>
    tpu.vector_store %arg3[%c0_108, %c3_109, %c2_110, %c0_111], %153 {strides = array<i32>} : memref<2x8x14x14xf32, #tpu.memory_space<vmem>>, vector<1x1x1x14xf32>,
    %154 = vector.extract_strided_slice %133 {offsets = [4, 0], sizes = [1, 14], strides = [1, 1]} : vector<8x14xf32> to vector<1x14xf32>
    %155 = vector.shape_cast %154 : vector<1x14xf32> to vector<14xf32>
    %c0_112 = arith.constant 0 : index
    %c4_113 = arith.constant 4 : index
    %c2_114 = arith.constant 2 : index
    %c0_115 = arith.constant 0 : index
    %156 = vector.load %arg3[%c0_112, %c4_113, %c2_114, %c0_115] : memref<2x8x14x14xf32, #tpu.memory_space<vmem>>, vector<1x1x1x14xf32>
    %157 = vector.shape_cast %156 : vector<1x1x1x14xf32> to vector<14xf32>
    %158 = vector.shape_cast %155 : vector<14xf32> to vector<1x1x1x14xf32>
    tpu.vector_store %arg3[%c0_112, %c4_113, %c2_114, %c0_115], %158 {strides = array<i32>} : memref<2x8x14x14xf32, #tpu.memory_space<vmem>>, vector<1x1x1x14xf32>,
    %159 = vector.extract_strided_slice %133 {offsets = [5, 0], sizes = [1, 14], strides = [1, 1]} : vector<8x14xf32> to vector<1x14xf32>
    %160 = vector.shape_cast %159 : vector<1x14xf32> to vector<14xf32>
    %c0_116 = arith.constant 0 : index
    %c5_117 = arith.constant 5 : index
    %c2_118 = arith.constant 2 : index
    %c0_119 = arith.constant 0 : index
    %161 = vector.load %arg3[%c0_116, %c5_117, %c2_118, %c0_119] : memref<2x8x14x14xf32, #tpu.memory_space<vmem>>, vector<1x1x1x14xf32>
    %162 = vector.shape_cast %161 : vector<1x1x1x14xf32> to vector<14xf32>
    %163 = vector.shape_cast %160 : vector<14xf32> to vector<1x1x1x14xf32>
    tpu.vector_store %arg3[%c0_116, %c5_117, %c2_118, %c0_119], %163 {strides = array<i32>} : memref<2x8x14x14xf32, #tpu.memory_space<vmem>>, vector<1x1x1x14xf32>,
    %164 = vector.extract_strided_slice %133 {offsets = [6, 0], sizes = [1, 14], strides = [1, 1]} : vector<8x14xf32> to vector<1x14xf32>
    %165 = vector.shape_cast %164 : vector<1x14xf32> to vector<14xf32>
    %c0_120 = arith.constant 0 : index
    %c6_121 = arith.constant 6 : index
    %c2_122 = arith.constant 2 : index
    %c0_123 = arith.constant 0 : index
    %166 = vector.load %arg3[%c0_120, %c6_121, %c2_122, %c0_123] : memref<2x8x14x14xf32, #tpu.memory_space<vmem>>, vector<1x1x1x14xf32>
    %167 = vector.shape_cast %166 : vector<1x1x1x14xf32> to vector<14xf32>
    %168 = vector.shape_cast %165 : vector<14xf32> to vector<1x1x1x14xf32>
    tpu.vector_store %arg3[%c0_120, %c6_121, %c2_122, %c0_123], %168 {strides = array<i32>} : memref<2x8x14x14xf32, #tpu.memory_space<vmem>>, vector<1x1x1x14xf32>,
    %169 = vector.extract_strided_slice %133 {offsets = [7, 0], sizes = [1, 14], strides = [1, 1]} : vector<8x14xf32> to vector<1x14xf32>
    %170 = vector.shape_cast %169 : vector<1x14xf32> to vector<14xf32>
    %c0_124 = arith.constant 0 : index
    %c7_125 = arith.constant 7 : index
    %c2_126 = arith.constant 2 : index
    %c0_127 = arith.constant 0 : index
    %171 = vector.load %arg3[%c0_124, %c7_125, %c2_126, %c0_127] : memref<2x8x14x14xf32, #tpu.memory_space<vmem>>, vector<1x1x1x14xf32>
    %172 = vector.shape_cast %171 : vector<1x1x1x14xf32> to vector<14xf32>
    %173 = vector.shape_cast %170 : vector<14xf32> to vector<1x1x1x14xf32>
    tpu.vector_store %arg3[%c0_124, %c7_125, %c2_126, %c0_127], %173 {strides = array<i32>} : memref<2x8x14x14xf32, #tpu.memory_space<vmem>>, vector<1x1x1x14xf32>,
    %174 = vector.extract_strided_slice %50 {offsets = [0, 48], sizes = [8, 14], strides = [1, 1]} : vector<8x444xf32> to vector<8x14xf32>
    %175 = vector.extract_strided_slice %174 {offsets = [0, 0], sizes = [1, 14], strides = [1, 1]} : vector<8x14xf32> to vector<1x14xf32>
    %176 = vector.shape_cast %175 : vector<1x14xf32> to vector<14xf32>
    %c0_128 = arith.constant 0 : index
    %c0_129 = arith.constant 0 : index
    %c3_130 = arith.constant 3 : index
    %c0_131 = arith.constant 0 : index
    %177 = vector.load %arg3[%c0_128, %c0_129, %c3_130, %c0_131] : memref<2x8x14x14xf32, #tpu.memory_space<vmem>>, vector<1x1x1x14xf32>
    %178 = vector.shape_cast %177 : vector<1x1x1x14xf32> to vector<14xf32>
    %179 = vector.shape_cast %176 : vector<14xf32> to vector<1x1x1x14xf32>
    tpu.vector_store %arg3[%c0_128, %c0_129, %c3_130, %c0_131], %179 {strides = array<i32>} : memref<2x8x14x14xf32, #tpu.memory_space<vmem>>, vector<1x1x1x14xf32>,
    %180 = vector.extract_strided_slice %174 {offsets = [1, 0], sizes = [1, 14], strides = [1, 1]} : vector<8x14xf32> to vector<1x14xf32>
    %181 = vector.shape_cast %180 : vector<1x14xf32> to vector<14xf32>
    %c0_132 = arith.constant 0 : index
    %c1_133 = arith.constant 1 : index
    %c3_134 = arith.constant 3 : index
    %c0_135 = arith.constant 0 : index
    %182 = vector.load %arg3[%c0_132, %c1_133, %c3_134, %c0_135] : memref<2x8x14x14xf32, #tpu.memory_space<vmem>>, vector<1x1x1x14xf32>
    %183 = vector.shape_cast %182 : vector<1x1x1x14xf32> to vector<14xf32>
    %184 = vector.shape_cast %181 : vector<14xf32> to vector<1x1x1x14xf32>
    tpu.vector_store %arg3[%c0_132, %c1_133, %c3_134, %c0_135], %184 {strides = array<i32>} : memref<2x8x14x14xf32, #tpu.memory_space<vmem>>, vector<1x1x1x14xf32>,
    %185 = vector.extract_strided_slice %174 {offsets = [2, 0], sizes = [1, 14], strides = [1, 1]} : vector<8x14xf32> to vector<1x14xf32>
    %186 = vector.shape_cast %185 : vector<1x14xf32> to vector<14xf32>
    %c0_136 = arith.constant 0 : index
    %c2_137 = arith.constant 2 : index
    %c3_138 = arith.constant 3 : index
    %c0_139 = arith.constant 0 : index
    %187 = vector.load %arg3[%c0_136, %c2_137, %c3_138, %c0_139] : memref<2x8x14x14xf32, #tpu.memory_space<vmem>>, vector<1x1x1x14xf32>
    %188 = vector.shape_cast %187 : vector<1x1x1x14xf32> to vector<14xf32>
    %189 = vector.shape_cast %186 : vector<14xf32> to vector<1x1x1x14xf32>
    tpu.vector_store %arg3[%c0_136, %c2_137, %c3_138, %c0_139], %189 {strides = array<i32>} : memref<2x8x14x14xf32, #tpu.memory_space<vmem>>, vector<1x1x1x14xf32>,
    %190 = vector.extract_strided_slice %174 {offsets = [3, 0], sizes = [1, 14], strides = [1, 1]} : vector<8x14xf32> to vector<1x14xf32>
    %191 = vector.shape_cast %190 : vector<1x14xf32> to vector<14xf32>
    %c0_140 = arith.constant 0 : index
    %c3_141 = arith.constant 3 : index
    %c3_142 = arith.constant 3 : index
    %c0_143 = arith.constant 0 : index
    %192 = vector.load %arg3[%c0_140, %c3_141, %c3_142, %c0_143] : memref<2x8x14x14xf32, #tpu.memory_space<vmem>>, vector<1x1x1x14xf32>
    %193 = vector.shape_cast %192 : vector<1x1x1x14xf32> to vector<14xf32>
    %194 = vector.shape_cast %191 : vector<14xf32> to vector<1x1x1x14xf32>
    tpu.vector_store %arg3[%c0_140, %c3_141, %c3_142, %c0_143], %194 {strides = array<i32>} : memref<2x8x14x14xf32, #tpu.memory_space<vmem>>, vector<1x1x1x14xf32>,
    %195 = vector.extract_strided_slice %174 {offsets = [4, 0], sizes = [1, 14], strides = [1, 1]} : vector<8x14xf32> to vector<1x14xf32>
    %196 = vector.shape_cast %195 : vector<1x14xf32> to vector<14xf32>
    %c0_144 = arith.constant 0 : index
    %c4_145 = arith.constant 4 : index
    %c3_146 = arith.constant 3 : index
    %c0_147 = arith.constant 0 : index
    %197 = vector.load %arg3[%c0_144, %c4_145, %c3_146, %c0_147] : memref<2x8x14x14xf32, #tpu.memory_space<vmem>>, vector<1x1x1x14xf32>
    %198 = vector.shape_cast %197 : vector<1x1x1x14xf32> to vector<14xf32>
    %199 = vector.shape_cast %196 : vector<14xf32> to vector<1x1x1x14xf32>
    tpu.vector_store %arg3[%c0_144, %c4_145, %c3_146, %c0_147], %199 {strides = array<i32>} : memref<2x8x14x14xf32, #tpu.memory_space<vmem>>, vector<1x1x1x14xf32>,
    %200 = vector.extract_strided_slice %174 {offsets = [5, 0], sizes = [1, 14], strides = [1, 1]} : vector<8x14xf32> to vector<1x14xf32>
    %201 = vector.shape_cast %200 : vector<1x14xf32> to vector<14xf32>
    %c0_148 = arith.constant 0 : index
    %c5_149 = arith.constant 5 : index
    %c3_150 = arith.constant 3 : index
    %c0_151 = arith.constant 0 : index
    %202 = vector.load %arg3[%c0_148, %c5_149, %c3_150, %c0_151] : memref<2x8x14x14xf32, #tpu.memory_space<vmem>>, vector<1x1x1x14xf32>
    %203 = vector.shape_cast %202 : vector<1x1x1x14xf32> to vector<14xf32>
    %204 = vector.shape_cast %201 : vector<14xf32> to vector<1x1x1x14xf32>
    tpu.vector_store %arg3[%c0_148, %c5_149, %c3_150, %c0_151], %204 {strides = array<i32>} : memref<2x8x14x14xf32, #tpu.memory_space<vmem>>, vector<1x1x1x14xf32>,
    %205 = vector.extract_strided_slice %174 {offsets = [6, 0], sizes = [1, 14], strides = [1, 1]} : vector<8x14xf32> to vector<1x14xf32>
    %206 = vector.shape_cast %205 : vector<1x14xf32> to vector<14xf32>
    %c0_152 = arith.constant 0 : index
    %c6_153 = arith.constant 6 : index
    %c3_154 = arith.constant 3 : index
    %c0_155 = arith.constant 0 : index
    %207 = vector.load %arg3[%c0_152, %c6_153, %c3_154, %c0_155] : memref<2x8x14x14xf32, #tpu.memory_space<vmem>>, vector<1x1x1x14xf32>
    %208 = vector.shape_cast %207 : vector<1x1x1x14xf32> to vector<14xf32>
    %209 = vector.shape_cast %206 : vector<14xf32> to vector<1x1x1x14xf32>
    tpu.vector_store %arg3[%c0_152, %c6_153, %c3_154, %c0_155], %209 {strides = array<i32>} : memref<2x8x14x14xf32, #tpu.memory_space<vmem>>, vector<1x1x1x14xf32>,
    %210 = vector.extract_strided_slice %174 {offsets = [7, 0], sizes = [1, 14], strides = [1, 1]} : vector<8x14xf32> to vector<1x14xf32>
    %211 = vector.shape_cast %210 : vector<1x14xf32> to vector<14xf32>
    %c0_156 = arith.constant 0 : index
    %c7_157 = arith.constant 7 : index
    %c3_158 = arith.constant 3 : index
    %c0_159 = arith.constant 0 : index
    %212 = vector.load %arg3[%c0_156, %c7_157, %c3_158, %c0_159] : memref<2x8x14x14xf32, #tpu.memory_space<vmem>>, vector<1x1x1x14xf32>
    %213 = vector.shape_cast %212 : vector<1x1x1x14xf32> to vector<14xf32>
    %214 = vector.shape_cast %211 : vector<14xf32> to vector<1x1x1x14xf32>
    tpu.vector_store %arg3[%c0_156, %c7_157, %c3_158, %c0_159], %214 {strides = array<i32>} : memref<2x8x14x14xf32, #tpu.memory_space<vmem>>, vector<1x1x1x14xf32>,
    %215 = vector.extract_strided_slice %50 {offsets = [0, 64], sizes = [8, 14], strides = [1, 1]} : vector<8x444xf32> to vector<8x14xf32>
    %216 = vector.extract_strided_slice %215 {offsets = [0, 0], sizes = [1, 14], strides = [1, 1]} : vector<8x14xf32> to vector<1x14xf32>
    %217 = vector.shape_cast %216 : vector<1x14xf32> to vector<14xf32>
    %c0_160 = arith.constant 0 : index
    %c0_161 = arith.constant 0 : index
    %c4_162 = arith.constant 4 : index
    %c0_163 = arith.constant 0 : index
    %218 = vector.load %arg3[%c0_160, %c0_161, %c4_162, %c0_163] : memref<2x8x14x14xf32, #tpu.memory_space<vmem>>, vector<1x1x1x14xf32>
    %219 = vector.shape_cast %218 : vector<1x1x1x14xf32> to vector<14xf32>
    %220 = vector.shape_cast %217 : vector<14xf32> to vector<1x1x1x14xf32>
    tpu.vector_store %arg3[%c0_160, %c0_161, %c4_162, %c0_163], %220 {strides = array<i32>} : memref<2x8x14x14xf32, #tpu.memory_space<vmem>>, vector<1x1x1x14xf32>,
    %221 = vector.extract_strided_slice %215 {offsets = [1, 0], sizes = [1, 14], strides = [1, 1]} : vector<8x14xf32> to vector<1x14xf32>
    %222 = vector.shape_cast %221 : vector<1x14xf32> to vector<14xf32>
    %c0_164 = arith.constant 0 : index
    %c1_165 = arith.constant 1 : index
    %c4_166 = arith.constant 4 : index
    %c0_167 = arith.constant 0 : index
    %223 = vector.load %arg3[%c0_164, %c1_165, %c4_166, %c0_167] : memref<2x8x14x14xf32, #tpu.memory_space<vmem>>, vector<1x1x1x14xf32>
    %224 = vector.shape_cast %223 : vector<1x1x1x14xf32> to vector<14xf32>
    %225 = vector.shape_cast %222 : vector<14xf32> to vector<1x1x1x14xf32>
    tpu.vector_store %arg3[%c0_164, %c1_165, %c4_166, %c0_167], %225 {strides = array<i32>} : memref<2x8x14x14xf32, #tpu.memory_space<vmem>>, vector<1x1x1x14xf32>,
    %226 = vector.extract_strided_slice %215 {offsets = [2, 0], sizes = [1, 14], strides = [1, 1]} : vector<8x14xf32> to vector<1x14xf32>
    %227 = vector.shape_cast %226 : vector<1x14xf32> to vector<14xf32>
    %c0_168 = arith.constant 0 : index
    %c2_169 = arith.constant 2 : index
    %c4_170 = arith.constant 4 : index
    %c0_171 = arith.constant 0 : index
    %228 = vector.load %arg3[%c0_168, %c2_169, %c4_170, %c0_171] : memref<2x8x14x14xf32, #tpu.memory_space<vmem>>, vector<1x1x1x14xf32>
    %229 = vector.shape_cast %228 : vector<1x1x1x14xf32> to vector<14xf32>
    %230 = vector.shape_cast %227 : vector<14xf32> to vector<1x1x1x14xf32>
    tpu.vector_store %arg3[%c0_168, %c2_169, %c4_170, %c0_171], %230 {strides = array<i32>} : memref<2x8x14x14xf32, #tpu.memory_space<vmem>>, vector<1x1x1x14xf32>,
    %231 = vector.extract_strided_slice %215 {offsets = [3, 0], sizes = [1, 14], strides = [1, 1]} : vector<8x14xf32> to vector<1x14xf32>
    %232 = vector.shape_cast %231 : vector<1x14xf32> to vector<14xf32>
    %c0_172 = arith.constant 0 : index
    %c3_173 = arith.constant 3 : index
    %c4_174 = arith.constant 4 : index
    %c0_175 = arith.constant 0 : index
    %233 = vector.load %arg3[%c0_172, %c3_173, %c4_174, %c0_175] : memref<2x8x14x14xf32, #tpu.memory_space<vmem>>, vector<1x1x1x14xf32>
    %234 = vector.shape_cast %233 : vector<1x1x1x14xf32> to vector<14xf32>
    %235 = vector.shape_cast %232 : vector<14xf32> to vector<1x1x1x14xf32>
    tpu.vector_store %arg3[%c0_172, %c3_173, %c4_174, %c0_175], %235 {strides = array<i32>} : memref<2x8x14x14xf32, #tpu.memory_space<vmem>>, vector<1x1x1x14xf32>,
    %236 = vector.extract_strided_slice %215 {offsets = [4, 0], sizes = [1, 14], strides = [1, 1]} : vector<8x14xf32> to vector<1x14xf32>
    %237 = vector.shape_cast %236 : vector<1x14xf32> to vector<14xf32>
    %c0_176 = arith.constant 0 : index
    %c4_177 = arith.constant 4 : index
    %c4_178 = arith.constant 4 : index
    %c0_179 = arith.constant 0 : index
    %238 = vector.load %arg3[%c0_176, %c4_177, %c4_178, %c0_179] : memref<2x8x14x14xf32, #tpu.memory_space<vmem>>, vector<1x1x1x14xf32>
    %239 = vector.shape_cast %238 : vector<1x1x1x14xf32> to vector<14xf32>
    %240 = vector.shape_cast %237 : vector<14xf32> to vector<1x1x1x14xf32>
    tpu.vector_store %arg3[%c0_176, %c4_177, %c4_178, %c0_179], %240 {strides = array<i32>} : memref<2x8x14x14xf32, #tpu.memory_space<vmem>>, vector<1x1x1x14xf32>,
    %241 = vector.extract_strided_slice %215 {offsets = [5, 0], sizes = [1, 14], strides = [1, 1]} : vector<8x14xf32> to vector<1x14xf32>
    %242 = vector.shape_cast %241 : vector<1x14xf32> to vector<14xf32>
    %c0_180 = arith.constant 0 : index
    %c5_181 = arith.constant 5 : index
    %c4_182 = arith.constant 4 : index
    %c0_183 = arith.constant 0 : index
    %243 = vector.load %arg3[%c0_180, %c5_181, %c4_182, %c0_183] : memref<2x8x14x14xf32, #tpu.memory_space<vmem>>, vector<1x1x1x14xf32>
    %244 = vector.shape_cast %243 : vector<1x1x1x14xf32> to vector<14xf32>
    %245 = vector.shape_cast %242 : vector<14xf32> to vector<1x1x1x14xf32>
    tpu.vector_store %arg3[%c0_180, %c5_181, %c4_182, %c0_183], %245 {strides = array<i32>} : memref<2x8x14x14xf32, #tpu.memory_space<vmem>>, vector<1x1x1x14xf32>,
    %246 = vector.extract_strided_slice %215 {offsets = [6, 0], sizes = [1, 14], strides = [1, 1]} : vector<8x14xf32> to vector<1x14xf32>
    %247 = vector.shape_cast %246 : vector<1x14xf32> to vector<14xf32>
    %c0_184 = arith.constant 0 : index
    %c6_185 = arith.constant 6 : index
    %c4_186 = arith.constant 4 : index
    %c0_187 = arith.constant 0 : index
    %248 = vector.load %arg3[%c0_184, %c6_185, %c4_186, %c0_187] : memref<2x8x14x14xf32, #tpu.memory_space<vmem>>, vector<1x1x1x14xf32>
    %249 = vector.shape_cast %248 : vector<1x1x1x14xf32> to vector<14xf32>
    %250 = vector.shape_cast %247 : vector<14xf32> to vector<1x1x1x14xf32>
    tpu.vector_store %arg3[%c0_184, %c6_185, %c4_186, %c0_187], %250 {strides = array<i32>} : memref<2x8x14x14xf32, #tpu.memory_space<vmem>>, vector<1x1x1x14xf32>,
    %251 = vector.extract_strided_slice %215 {offsets = [7, 0], sizes = [1, 14], strides = [1, 1]} : vector<8x14xf32> to vector<1x14xf32>
    %252 = vector.shape_cast %251 : vector<1x14xf32> to vector<14xf32>
    %c0_188 = arith.constant 0 : index
    %c7_189 = arith.constant 7 : index
    %c4_190 = arith.constant 4 : index
    %c0_191 = arith.constant 0 : index
    %253 = vector.load %arg3[%c0_188, %c7_189, %c4_190, %c0_191] : memref<2x8x14x14xf32, #tpu.memory_space<vmem>>, vector<1x1x1x14xf32>
    %254 = vector.shape_cast %253 : vector<1x1x1x14xf32> to vector<14xf32>
    %255 = vector.shape_cast %252 : vector<14xf32> to vector<1x1x1x14xf32>
    tpu.vector_store %arg3[%c0_188, %c7_189, %c4_190, %c0_191], %255 {strides = array<i32>} : memref<2x8x14x14xf32, #tpu.memory_space<vmem>>, vector<1x1x1x14xf32>,
    %256 = vector.extract_strided_slice %50 {offsets = [0, 80], sizes = [8, 14], strides = [1, 1]} : vector<8x444xf32> to vector<8x14xf32>
    %257 = vector.extract_strided_slice %256 {offsets = [0, 0], sizes = [1, 14], strides = [1, 1]} : vector<8x14xf32> to vector<1x14xf32>
    %258 = vector.shape_cast %257 : vector<1x14xf32> to vector<14xf32>
    %c0_192 = arith.constant 0 : index
    %c0_193 = arith.constant 0 : index
    %c5_194 = arith.constant 5 : index
    %c0_195 = arith.constant 0 : index
    %259 = vector.load %arg3[%c0_192, %c0_193, %c5_194, %c0_195] : memref<2x8x14x14xf32, #tpu.memory_space<vmem>>, vector<1x1x1x14xf32>
    %260 = vector.shape_cast %259 : vector<1x1x1x14xf32> to vector<14xf32>
    %261 = vector.shape_cast %258 : vector<14xf32> to vector<1x1x1x14xf32>
    tpu.vector_store %arg3[%c0_192, %c0_193, %c5_194, %c0_195], %261 {strides = array<i32>} : memref<2x8x14x14xf32, #tpu.memory_space<vmem>>, vector<1x1x1x14xf32>,
    %262 = vector.extract_strided_slice %256 {offsets = [1, 0], sizes = [1, 14], strides = [1, 1]} : vector<8x14xf32> to vector<1x14xf32>
    %263 = vector.shape_cast %262 : vector<1x14xf32> to vector<14xf32>
    %c0_196 = arith.constant 0 : index
    %c1_197 = arith.constant 1 : index
    %c5_198 = arith.constant 5 : index
    %c0_199 = arith.constant 0 : index
    %264 = vector.load %arg3[%c0_196, %c1_197, %c5_198, %c0_199] : memref<2x8x14x14xf32, #tpu.memory_space<vmem>>, vector<1x1x1x14xf32>
    %265 = vector.shape_cast %264 : vector<1x1x1x14xf32> to vector<14xf32>
    %266 = vector.shape_cast %263 : vector<14xf32> to vector<1x1x1x14xf32>
    tpu.vector_store %arg3[%c0_196, %c1_197, %c5_198, %c0_199], %266 {strides = array<i32>} : memref<2x8x14x14xf32, #tpu.memory_space<vmem>>, vector<1x1x1x14xf32>,
    %267 = vector.extract_strided_slice %256 {offsets = [2, 0], sizes = [1, 14], strides = [1, 1]} : vector<8x14xf32> to vector<1x14xf32>
    %268 = vector.shape_cast %267 : vector<1x14xf32> to vector<14xf32>
    %c0_200 = arith.constant 0 : index
    %c2_201 = arith.constant 2 : index
    %c5_202 = arith.constant 5 : index
    %c0_203 = arith.constant 0 : index
    %269 = vector.load %arg3[%c0_200, %c2_201, %c5_202, %c0_203] : memref<2x8x14x14xf32, #tpu.memory_space<vmem>>, vector<1x1x1x14xf32>
    %270 = vector.shape_cast %269 : vector<1x1x1x14xf32> to vector<14xf32>
    %271 = vector.shape_cast %268 : vector<14xf32> to vector<1x1x1x14xf32>
    tpu.vector_store %arg3[%c0_200, %c2_201, %c5_202, %c0_203], %271 {strides = array<i32>} : memref<2x8x14x14xf32, #tpu.memory_space<vmem>>, vector<1x1x1x14xf32>,
    %272 = vector.extract_strided_slice %256 {offsets = [3, 0], sizes = [1, 14], strides = [1, 1]} : vector<8x14xf32> to vector<1x14xf32>
    %273 = vector.shape_cast %272 : vector<1x14xf32> to vector<14xf32>
    %c0_204 = arith.constant 0 : index
    %c3_205 = arith.constant 3 : index
    %c5_206 = arith.constant 5 : index
    %c0_207 = arith.constant 0 : index
    %274 = vector.load %arg3[%c0_204, %c3_205, %c5_206, %c0_207] : memref<2x8x14x14xf32, #tpu.memory_space<vmem>>, vector<1x1x1x14xf32>
    %275 = vector.shape_cast %274 : vector<1x1x1x14xf32> to vector<14xf32>
    %276 = vector.shape_cast %273 : vector<14xf32> to vector<1x1x1x14xf32>
    tpu.vector_store %arg3[%c0_204, %c3_205, %c5_206, %c0_207], %276 {strides = array<i32>} : memref<2x8x14x14xf32, #tpu.memory_space<vmem>>, vector<1x1x1x14xf32>,
    %277 = vector.extract_strided_slice %256 {offsets = [4, 0], sizes = [1, 14], strides = [1, 1]} : vector<8x14xf32> to vector<1x14xf32>
    %278 = vector.shape_cast %277 : vector<1x14xf32> to vector<14xf32>
    %c0_208 = arith.constant 0 : index
    %c4_209 = arith.constant 4 : index
    %c5_210 = arith.constant 5 : index
    %c0_211 = arith.constant 0 : index
    %279 = vector.load %arg3[%c0_208, %c4_209, %c5_210, %c0_211] : memref<2x8x14x14xf32, #tpu.memory_space<vmem>>, vector<1x1x1x14xf32>
    %280 = vector.shape_cast %279 : vector<1x1x1x14xf32> to vector<14xf32>
    %281 = vector.shape_cast %278 : vector<14xf32> to vector<1x1x1x14xf32>
    tpu.vector_store %arg3[%c0_208, %c4_209, %c5_210, %c0_211], %281 {strides = array<i32>} : memref<2x8x14x14xf32, #tpu.memory_space<vmem>>, vector<1x1x1x14xf32>,
    %282 = vector.extract_strided_slice %256 {offsets = [5, 0], sizes = [1, 14], strides = [1, 1]} : vector<8x14xf32> to vector<1x14xf32>
    %283 = vector.shape_cast %282 : vector<1x14xf32> to vector<14xf32>
    %c0_212 = arith.constant 0 : index
    %c5_213 = arith.constant 5 : index
    %c5_214 = arith.constant 5 : index
    %c0_215 = arith.constant 0 : index
    %284 = vector.load %arg3[%c0_212, %c5_213, %c5_214, %c0_215] : memref<2x8x14x14xf32, #tpu.memory_space<vmem>>, vector<1x1x1x14xf32>
    %285 = vector.shape_cast %284 : vector<1x1x1x14xf32> to vector<14xf32>
    %286 = vector.shape_cast %283 : vector<14xf32> to vector<1x1x1x14xf32>
    tpu.vector_store %arg3[%c0_212, %c5_213, %c5_214, %c0_215], %286 {strides = array<i32>} : memref<2x8x14x14xf32, #tpu.memory_space<vmem>>, vector<1x1x1x14xf32>,
    %287 = vector.extract_strided_slice %256 {offsets = [6, 0], sizes = [1, 14], strides = [1, 1]} : vector<8x14xf32> to vector<1x14xf32>
    %288 = vector.shape_cast %287 : vector<1x14xf32> to vector<14xf32>
    %c0_216 = arith.constant 0 : index
    %c6_217 = arith.constant 6 : index
    %c5_218 = arith.constant 5 : index
    %c0_219 = arith.constant 0 : index
    %289 = vector.load %arg3[%c0_216, %c6_217, %c5_218, %c0_219] : memref<2x8x14x14xf32, #tpu.memory_space<vmem>>, vector<1x1x1x14xf32>
    %290 = vector.shape_cast %289 : vector<1x1x1x14xf32> to vector<14xf32>
    %291 = vector.shape_cast %288 : vector<14xf32> to vector<1x1x1x14xf32>
    tpu.vector_store %arg3[%c0_216, %c6_217, %c5_218, %c0_219], %291 {strides = array<i32>} : memref<2x8x14x14xf32, #tpu.memory_space<vmem>>, vector<1x1x1x14xf32>,
    %292 = vector.extract_strided_slice %256 {offsets = [7, 0], sizes = [1, 14], strides = [1, 1]} : vector<8x14xf32> to vector<1x14xf32>
    %293 = vector.shape_cast %292 : vector<1x14xf32> to vector<14xf32>
    %c0_220 = arith.constant 0 : index
    %c7_221 = arith.constant 7 : index
    %c5_222 = arith.constant 5 : index
    %c0_223 = arith.constant 0 : index
    %294 = vector.load %arg3[%c0_220, %c7_221, %c5_222, %c0_223] : memref<2x8x14x14xf32, #tpu.memory_space<vmem>>, vector<1x1x1x14xf32>
    %295 = vector.shape_cast %294 : vector<1x1x1x14xf32> to vector<14xf32>
    %296 = vector.shape_cast %293 : vector<14xf32> to vector<1x1x1x14xf32>
    tpu.vector_store %arg3[%c0_220, %c7_221, %c5_222, %c0_223], %296 {strides = array<i32>} : memref<2x8x14x14xf32, #tpu.memory_space<vmem>>, vector<1x1x1x14xf32>,
    %297 = vector.extract_strided_slice %50 {offsets = [0, 96], sizes = [8, 14], strides = [1, 1]} : vector<8x444xf32> to vector<8x14xf32>
    %298 = vector.extract_strided_slice %297 {offsets = [0, 0], sizes = [1, 14], strides = [1, 1]} : vector<8x14xf32> to vector<1x14xf32>
    %299 = vector.shape_cast %298 : vector<1x14xf32> to vector<14xf32>
    %c0_224 = arith.constant 0 : index
    %c0_225 = arith.constant 0 : index
    %c6_226 = arith.constant 6 : index
    %c0_227 = arith.constant 0 : index
    %300 = vector.load %arg3[%c0_224, %c0_225, %c6_226, %c0_227] : memref<2x8x14x14xf32, #tpu.memory_space<vmem>>, vector<1x1x1x14xf32>
    %301 = vector.shape_cast %300 : vector<1x1x1x14xf32> to vector<14xf32>
    %302 = vector.shape_cast %299 : vector<14xf32> to vector<1x1x1x14xf32>
    tpu.vector_store %arg3[%c0_224, %c0_225, %c6_226, %c0_227], %302 {strides = array<i32>} : memref<2x8x14x14xf32, #tpu.memory_space<vmem>>, vector<1x1x1x14xf32>,
    %303 = vector.extract_strided_slice %297 {offsets = [1, 0], sizes = [1, 14], strides = [1, 1]} : vector<8x14xf32> to vector<1x14xf32>
    %304 = vector.shape_cast %303 : vector<1x14xf32> to vector<14xf32>
    %c0_228 = arith.constant 0 : index
    %c1_229 = arith.constant 1 : index
    %c6_230 = arith.constant 6 : index
    %c0_231 = arith.constant 0 : index
    %305 = vector.load %arg3[%c0_228, %c1_229, %c6_230, %c0_231] : memref<2x8x14x14xf32, #tpu.memory_space<vmem>>, vector<1x1x1x14xf32>
    %306 = vector.shape_cast %305 : vector<1x1x1x14xf32> to vector<14xf32>
    %307 = vector.shape_cast %304 : vector<14xf32> to vector<1x1x1x14xf32>
    tpu.vector_store %arg3[%c0_228, %c1_229, %c6_230, %c0_231], %307 {strides = array<i32>} : memref<2x8x14x14xf32, #tpu.memory_space<vmem>>, vector<1x1x1x14xf32>,
    %308 = vector.extract_strided_slice %297 {offsets = [2, 0], sizes = [1, 14], strides = [1, 1]} : vector<8x14xf32> to vector<1x14xf32>
    %309 = vector.shape_cast %308 : vector<1x14xf32> to vector<14xf32>
    %c0_232 = arith.constant 0 : index
    %c2_233 = arith.constant 2 : index
    %c6_234 = arith.constant 6 : index
    %c0_235 = arith.constant 0 : index
    %310 = vector.load %arg3[%c0_232, %c2_233, %c6_234, %c0_235] : memref<2x8x14x14xf32, #tpu.memory_space<vmem>>, vector<1x1x1x14xf32>
    %311 = vector.shape_cast %310 : vector<1x1x1x14xf32> to vector<14xf32>
    %312 = vector.shape_cast %309 : vector<14xf32> to vector<1x1x1x14xf32>
    tpu.vector_store %arg3[%c0_232, %c2_233, %c6_234, %c0_235], %312 {strides = array<i32>} : memref<2x8x14x14xf32, #tpu.memory_space<vmem>>, vector<1x1x1x14xf32>,
    %313 = vector.extract_strided_slice %297 {offsets = [3, 0], sizes = [1, 14], strides = [1, 1]} : vector<8x14xf32> to vector<1x14xf32>
    %314 = vector.shape_cast %313 : vector<1x14xf32> to vector<14xf32>
    %c0_236 = arith.constant 0 : index
    %c3_237 = arith.constant 3 : index
    %c6_238 = arith.constant 6 : index
    %c0_239 = arith.constant 0 : index
    %315 = vector.load %arg3[%c0_236, %c3_237, %c6_238, %c0_239] : memref<2x8x14x14xf32, #tpu.memory_space<vmem>>, vector<1x1x1x14xf32>
    %316 = vector.shape_cast %315 : vector<1x1x1x14xf32> to vector<14xf32>
    %317 = vector.shape_cast %314 : vector<14xf32> to vector<1x1x1x14xf32>
    tpu.vector_store %arg3[%c0_236, %c3_237, %c6_238, %c0_239], %317 {strides = array<i32>} : memref<2x8x14x14xf32, #tpu.memory_space<vmem>>, vector<1x1x1x14xf32>,
    %318 = vector.extract_strided_slice %297 {offsets = [4, 0], sizes = [1, 14], strides = [1, 1]} : vector<8x14xf32> to vector<1x14xf32>
    %319 = vector.shape_cast %318 : vector<1x14xf32> to vector<14xf32>
    %c0_240 = arith.constant 0 : index
    %c4_241 = arith.constant 4 : index
    %c6_242 = arith.constant 6 : index
    %c0_243 = arith.constant 0 : index
    %320 = vector.load %arg3[%c0_240, %c4_241, %c6_242, %c0_243] : memref<2x8x14x14xf32, #tpu.memory_space<vmem>>, vector<1x1x1x14xf32>
    %321 = vector.shape_cast %320 : vector<1x1x1x14xf32> to vector<14xf32>
    %322 = vector.shape_cast %319 : vector<14xf32> to vector<1x1x1x14xf32>
    tpu.vector_store %arg3[%c0_240, %c4_241, %c6_242, %c0_243], %322 {strides = array<i32>} : memref<2x8x14x14xf32, #tpu.memory_space<vmem>>, vector<1x1x1x14xf32>,
    %323 = vector.extract_strided_slice %297 {offsets = [5, 0], sizes = [1, 14], strides = [1, 1]} : vector<8x14xf32> to vector<1x14xf32>
    %324 = vector.shape_cast %323 : vector<1x14xf32> to vector<14xf32>
    %c0_244 = arith.constant 0 : index
    %c5_245 = arith.constant 5 : index
    %c6_246 = arith.constant 6 : index
    %c0_247 = arith.constant 0 : index
    %325 = vector.load %arg3[%c0_244, %c5_245, %c6_246, %c0_247] : memref<2x8x14x14xf32, #tpu.memory_space<vmem>>, vector<1x1x1x14xf32>
    %326 = vector.shape_cast %325 : vector<1x1x1x14xf32> to vector<14xf32>
    %327 = vector.shape_cast %324 : vector<14xf32> to vector<1x1x1x14xf32>
    tpu.vector_store %arg3[%c0_244, %c5_245, %c6_246, %c0_247], %327 {strides = array<i32>} : memref<2x8x14x14xf32, #tpu.memory_space<vmem>>, vector<1x1x1x14xf32>,
    %328 = vector.extract_strided_slice %297 {offsets = [6, 0], sizes = [1, 14], strides = [1, 1]} : vector<8x14xf32> to vector<1x14xf32>
    %329 = vector.shape_cast %328 : vector<1x14xf32> to vector<14xf32>
    %c0_248 = arith.constant 0 : index
    %c6_249 = arith.constant 6 : index
    %c6_250 = arith.constant 6 : index
    %c0_251 = arith.constant 0 : index
    %330 = vector.load %arg3[%c0_248, %c6_249, %c6_250, %c0_251] : memref<2x8x14x14xf32, #tpu.memory_space<vmem>>, vector<1x1x1x14xf32>
    %331 = vector.shape_cast %330 : vector<1x1x1x14xf32> to vector<14xf32>
    %332 = vector.shape_cast %329 : vector<14xf32> to vector<1x1x1x14xf32>
    tpu.vector_store %arg3[%c0_248, %c6_249, %c6_250, %c0_251], %332 {strides = array<i32>} : memref<2x8x14x14xf32, #tpu.memory_space<vmem>>, vector<1x1x1x14xf32>,
    %333 = vector.extract_strided_slice %297 {offsets = [7, 0], sizes = [1, 14], strides = [1, 1]} : vector<8x14xf32> to vector<1x14xf32>
    %334 = vector.shape_cast %333 : vector<1x14xf32> to vector<14xf32>
    %c0_252 = arith.constant 0 : index
    %c7_253 = arith.constant 7 : index
    %c6_254 = arith.constant 6 : index
    %c0_255 = arith.constant 0 : index
    %335 = vector.load %arg3[%c0_252, %c7_253, %c6_254, %c0_255] : memref<2x8x14x14xf32, #tpu.memory_space<vmem>>, vector<1x1x1x14xf32>
    %336 = vector.shape_cast %335 : vector<1x1x1x14xf32> to vector<14xf32>
    %337 = vector.shape_cast %334 : vector<14xf32> to vector<1x1x1x14xf32>
    tpu.vector_store %arg3[%c0_252, %c7_253, %c6_254, %c0_255], %337 {strides = array<i32>} : memref<2x8x14x14xf32, #tpu.memory_space<vmem>>, vector<1x1x1x14xf32>,
    %338 = vector.extract_strided_slice %50 {offsets = [0, 112], sizes = [8, 14], strides = [1, 1]} : vector<8x444xf32> to vector<8x14xf32>
    %339 = vector.extract_strided_slice %338 {offsets = [0, 0], sizes = [1, 14], strides = [1, 1]} : vector<8x14xf32> to vector<1x14xf32>
    %340 = vector.shape_cast %339 : vector<1x14xf32> to vector<14xf32>
    %c0_256 = arith.constant 0 : index
    %c0_257 = arith.constant 0 : index
    %c7_258 = arith.constant 7 : index
    %c0_259 = arith.constant 0 : index
    %341 = vector.load %arg3[%c0_256, %c0_257, %c7_258, %c0_259] : memref<2x8x14x14xf32, #tpu.memory_space<vmem>>, vector<1x1x1x14xf32>
    %342 = vector.shape_cast %341 : vector<1x1x1x14xf32> to vector<14xf32>
    %343 = vector.shape_cast %340 : vector<14xf32> to vector<1x1x1x14xf32>
    tpu.vector_store %arg3[%c0_256, %c0_257, %c7_258, %c0_259], %343 {strides = array<i32>} : memref<2x8x14x14xf32, #tpu.memory_space<vmem>>, vector<1x1x1x14xf32>,
    %344 = vector.extract_strided_slice %338 {offsets = [1, 0], sizes = [1, 14], strides = [1, 1]} : vector<8x14xf32> to vector<1x14xf32>
    %345 = vector.shape_cast %344 : vector<1x14xf32> to vector<14xf32>
    %c0_260 = arith.constant 0 : index
    %c1_261 = arith.constant 1 : index
    %c7_262 = arith.constant 7 : index
    %c0_263 = arith.constant 0 : index
    %346 = vector.load %arg3[%c0_260, %c1_261, %c7_262, %c0_263] : memref<2x8x14x14xf32, #tpu.memory_space<vmem>>, vector<1x1x1x14xf32>
    %347 = vector.shape_cast %346 : vector<1x1x1x14xf32> to vector<14xf32>
    %348 = vector.shape_cast %345 : vector<14xf32> to vector<1x1x1x14xf32>
    tpu.vector_store %arg3[%c0_260, %c1_261, %c7_262, %c0_263], %348 {strides = array<i32>} : memref<2x8x14x14xf32, #tpu.memory_space<vmem>>, vector<1x1x1x14xf32>,
    %349 = vector.extract_strided_slice %338 {offsets = [2, 0], sizes = [1, 14], strides = [1, 1]} : vector<8x14xf32> to vector<1x14xf32>
    %350 = vector.shape_cast %349 : vector<1x14xf32> to vector<14xf32>
    %c0_264 = arith.constant 0 : index
    %c2_265 = arith.constant 2 : index
    %c7_266 = arith.constant 7 : index
    %c0_267 = arith.constant 0 : index
    %351 = vector.load %arg3[%c0_264, %c2_265, %c7_266, %c0_267] : memref<2x8x14x14xf32, #tpu.memory_space<vmem>>, vector<1x1x1x14xf32>
    %352 = vector.shape_cast %351 : vector<1x1x1x14xf32> to vector<14xf32>
    %353 = vector.shape_cast %350 : vector<14xf32> to vector<1x1x1x14xf32>
    tpu.vector_store %arg3[%c0_264, %c2_265, %c7_266, %c0_267], %353 {strides = array<i32>} : memref<2x8x14x14xf32, #tpu.memory_space<vmem>>, vector<1x1x1x14xf32>,
    %354 = vector.extract_strided_slice %338 {offsets = [3, 0], sizes = [1, 14], strides = [1, 1]} : vector<8x14xf32> to vector<1x14xf32>
    %355 = vector.shape_cast %354 : vector<1x14xf32> to vector<14xf32>
    %c0_268 = arith.constant 0 : index
    %c3_269 = arith.constant 3 : index
    %c7_270 = arith.constant 7 : index
    %c0_271 = arith.constant 0 : index
    %356 = vector.load %arg3[%c0_268, %c3_269, %c7_270, %c0_271] : memref<2x8x14x14xf32, #tpu.memory_space<vmem>>, vector<1x1x1x14xf32>
    %357 = vector.shape_cast %356 : vector<1x1x1x14xf32> to vector<14xf32>
    %358 = vector.shape_cast %355 : vector<14xf32> to vector<1x1x1x14xf32>
    tpu.vector_store %arg3[%c0_268, %c3_269, %c7_270, %c0_271], %358 {strides = array<i32>} : memref<2x8x14x14xf32, #tpu.memory_space<vmem>>, vector<1x1x1x14xf32>,
    %359 = vector.extract_strided_slice %338 {offsets = [4, 0], sizes = [1, 14], strides = [1, 1]} : vector<8x14xf32> to vector<1x14xf32>
    %360 = vector.shape_cast %359 : vector<1x14xf32> to vector<14xf32>
    %c0_272 = arith.constant 0 : index
    %c4_273 = arith.constant 4 : index
    %c7_274 = arith.constant 7 : index
    %c0_275 = arith.constant 0 : index
    %361 = vector.load %arg3[%c0_272, %c4_273, %c7_274, %c0_275] : memref<2x8x14x14xf32, #tpu.memory_space<vmem>>, vector<1x1x1x14xf32>
    %362 = vector.shape_cast %361 : vector<1x1x1x14xf32> to vector<14xf32>
    %363 = vector.shape_cast %360 : vector<14xf32> to vector<1x1x1x14xf32>
    tpu.vector_store %arg3[%c0_272, %c4_273, %c7_274, %c0_275], %363 {strides = array<i32>} : memref<2x8x14x14xf32, #tpu.memory_space<vmem>>, vector<1x1x1x14xf32>,
    %364 = vector.extract_strided_slice %338 {offsets = [5, 0], sizes = [1, 14], strides = [1, 1]} : vector<8x14xf32> to vector<1x14xf32>
    %365 = vector.shape_cast %364 : vector<1x14xf32> to vector<14xf32>
    %c0_276 = arith.constant 0 : index
    %c5_277 = arith.constant 5 : index
    %c7_278 = arith.constant 7 : index
    %c0_279 = arith.constant 0 : index
    %366 = vector.load %arg3[%c0_276, %c5_277, %c7_278, %c0_279] : memref<2x8x14x14xf32, #tpu.memory_space<vmem>>, vector<1x1x1x14xf32>
    %367 = vector.shape_cast %366 : vector<1x1x1x14xf32> to vector<14xf32>
    %368 = vector.shape_cast %365 : vector<14xf32> to vector<1x1x1x14xf32>
    tpu.vector_store %arg3[%c0_276, %c5_277, %c7_278, %c0_279], %368 {strides = array<i32>} : memref<2x8x14x14xf32, #tpu.memory_space<vmem>>, vector<1x1x1x14xf32>,
    %369 = vector.extract_strided_slice %338 {offsets = [6, 0], sizes = [1, 14], strides = [1, 1]} : vector<8x14xf32> to vector<1x14xf32>
    %370 = vector.shape_cast %369 : vector<1x14xf32> to vector<14xf32>
    %c0_280 = arith.constant 0 : index
    %c6_281 = arith.constant 6 : index
    %c7_282 = arith.constant 7 : index
    %c0_283 = arith.constant 0 : index
    %371 = vector.load %arg3[%c0_280, %c6_281, %c7_282, %c0_283] : memref<2x8x14x14xf32, #tpu.memory_space<vmem>>, vector<1x1x1x14xf32>
    %372 = vector.shape_cast %371 : vector<1x1x1x14xf32> to vector<14xf32>
    %373 = vector.shape_cast %370 : vector<14xf32> to vector<1x1x1x14xf32>
    tpu.vector_store %arg3[%c0_280, %c6_281, %c7_282, %c0_283], %373 {strides = array<i32>} : memref<2x8x14x14xf32, #tpu.memory_space<vmem>>, vector<1x1x1x14xf32>,
    %374 = vector.extract_strided_slice %338 {offsets = [7, 0], sizes = [1, 14], strides = [1, 1]} : vector<8x14xf32> to vector<1x14xf32>
    %375 = vector.shape_cast %374 : vector<1x14xf32> to vector<14xf32>
    %c0_284 = arith.constant 0 : index
    %c7_285 = arith.constant 7 : index
    %c7_286 = arith.constant 7 : index
    %c0_287 = arith.constant 0 : index
    %376 = vector.load %arg3[%c0_284, %c7_285, %c7_286, %c0_287] : memref<2x8x14x14xf32, #tpu.memory_space<vmem>>, vector<1x1x1x14xf32>
    %377 = vector.shape_cast %376 : vector<1x1x1x14xf32> to vector<14xf32>
    %378 = vector.shape_cast %375 : vector<14xf32> to vector<1x1x1x14xf32>
    tpu.vector_store %arg3[%c0_284, %c7_285, %c7_286, %c0_287], %378 {strides = array<i32>} : memref<2x8x14x14xf32, #tpu.memory_space<vmem>>, vector<1x1x1x14xf32>,
    %379 = vector.extract_strided_slice %50 {offsets = [0, 128], sizes = [8, 14], strides = [1, 1]} : vector<8x444xf32> to vector<8x14xf32>
    %380 = vector.extract_strided_slice %379 {offsets = [0, 0], sizes = [1, 14], strides = [1, 1]} : vector<8x14xf32> to vector<1x14xf32>
    %381 = vector.shape_cast %380 : vector<1x14xf32> to vector<14xf32>
    %c0_288 = arith.constant 0 : index
    %c0_289 = arith.constant 0 : index
    %c8_290 = arith.constant 8 : index
    %c0_291 = arith.constant 0 : index
    %382 = vector.load %arg3[%c0_288, %c0_289, %c8_290, %c0_291] : memref<2x8x14x14xf32, #tpu.memory_space<vmem>>, vector<1x1x1x14xf32>
    %383 = vector.shape_cast %382 : vector<1x1x1x14xf32> to vector<14xf32>
    %384 = vector.shape_cast %381 : vector<14xf32> to vector<1x1x1x14xf32>
    tpu.vector_store %arg3[%c0_288, %c0_289, %c8_290, %c0_291], %384 {strides = array<i32>} : memref<2x8x14x14xf32, #tpu.memory_space<vmem>>, vector<1x1x1x14xf32>,
    %385 = vector.extract_strided_slice %379 {offsets = [1, 0], sizes = [1, 14], strides = [1, 1]} : vector<8x14xf32> to vector<1x14xf32>
    %386 = vector.shape_cast %385 : vector<1x14xf32> to vector<14xf32>
    %c0_292 = arith.constant 0 : index
    %c1_293 = arith.constant 1 : index
    %c8_294 = arith.constant 8 : index
    %c0_295 = arith.constant 0 : index
    %387 = vector.load %arg3[%c0_292, %c1_293, %c8_294, %c0_295] : memref<2x8x14x14xf32, #tpu.memory_space<vmem>>, vector<1x1x1x14xf32>
    %388 = vector.shape_cast %387 : vector<1x1x1x14xf32> to vector<14xf32>
    %389 = vector.shape_cast %386 : vector<14xf32> to vector<1x1x1x14xf32>
    tpu.vector_store %arg3[%c0_292, %c1_293, %c8_294, %c0_295], %389 {strides = array<i32>} : memref<2x8x14x14xf32, #tpu.memory_space<vmem>>, vector<1x1x1x14xf32>,
    %390 = vector.extract_strided_slice %379 {offsets = [2, 0], sizes = [1, 14], strides = [1, 1]} : vector<8x14xf32> to vector<1x14xf32>
    %391 = vector.shape_cast %390 : vector<1x14xf32> to vector<14xf32>
    %c0_296 = arith.constant 0 : index
    %c2_297 = arith.constant 2 : index
    %c8_298 = arith.constant 8 : index
    %c0_299 = arith.constant 0 : index
    %392 = vector.load %arg3[%c0_296, %c2_297, %c8_298, %c0_299] : memref<2x8x14x14xf32, #tpu.memory_space<vmem>>, vector<1x1x1x14xf32>
    %393 = vector.shape_cast %392 : vector<1x1x1x14xf32> to vector<14xf32>
    %394 = vector.shape_cast %391 : vector<14xf32> to vector<1x1x1x14xf32>
    tpu.vector_store %arg3[%c0_296, %c2_297, %c8_298, %c0_299], %394 {strides = array<i32>} : memref<2x8x14x14xf32, #tpu.memory_space<vmem>>, vector<1x1x1x14xf32>,
    %395 = vector.extract_strided_slice %379 {offsets = [3, 0], sizes = [1, 14], strides = [1, 1]} : vector<8x14xf32> to vector<1x14xf32>
    %396 = vector.shape_cast %395 : vector<1x14xf32> to vector<14xf32>
    %c0_300 = arith.constant 0 : index
    %c3_301 = arith.constant 3 : index
    %c8_302 = arith.constant 8 : index
    %c0_303 = arith.constant 0 : index
    %397 = vector.load %arg3[%c0_300, %c3_301, %c8_302, %c0_303] : memref<2x8x14x14xf32, #tpu.memory_space<vmem>>, vector<1x1x1x14xf32>
    %398 = vector.shape_cast %397 : vector<1x1x1x14xf32> to vector<14xf32>
    %399 = vector.shape_cast %396 : vector<14xf32> to vector<1x1x1x14xf32>
    tpu.vector_store %arg3[%c0_300, %c3_301, %c8_302, %c0_303], %399 {strides = array<i32>} : memref<2x8x14x14xf32, #tpu.memory_space<vmem>>, vector<1x1x1x14xf32>,
    %400 = vector.extract_strided_slice %379 {offsets = [4, 0], sizes = [1, 14], strides = [1, 1]} : vector<8x14xf32> to vector<1x14xf32>
    %401 = vector.shape_cast %400 : vector<1x14xf32> to vector<14xf32>
    %c0_304 = arith.constant 0 : index
    %c4_305 = arith.constant 4 : index
    %c8_306 = arith.constant 8 : index
    %c0_307 = arith.constant 0 : index
    %402 = vector.load %arg3[%c0_304, %c4_305, %c8_306, %c0_307] : memref<2x8x14x14xf32, #tpu.memory_space<vmem>>, vector<1x1x1x14xf32>
    %403 = vector.shape_cast %402 : vector<1x1x1x14xf32> to vector<14xf32>
    %404 = vector.shape_cast %401 : vector<14xf32> to vector<1x1x1x14xf32>
    tpu.vector_store %arg3[%c0_304, %c4_305, %c8_306, %c0_307], %404 {strides = array<i32>} : memref<2x8x14x14xf32, #tpu.memory_space<vmem>>, vector<1x1x1x14xf32>,
    %405 = vector.extract_strided_slice %379 {offsets = [5, 0], sizes = [1, 14], strides = [1, 1]} : vector<8x14xf32> to vector<1x14xf32>
    %406 = vector.shape_cast %405 : vector<1x14xf32> to vector<14xf32>
    %c0_308 = arith.constant 0 : index
    %c5_309 = arith.constant 5 : index
    %c8_310 = arith.constant 8 : index
    %c0_311 = arith.constant 0 : index
    %407 = vector.load %arg3[%c0_308, %c5_309, %c8_310, %c0_311] : memref<2x8x14x14xf32, #tpu.memory_space<vmem>>, vector<1x1x1x14xf32>
    %408 = vector.shape_cast %407 : vector<1x1x1x14xf32> to vector<14xf32>
    %409 = vector.shape_cast %406 : vector<14xf32> to vector<1x1x1x14xf32>
    tpu.vector_store %arg3[%c0_308, %c5_309, %c8_310, %c0_311], %409 {strides = array<i32>} : memref<2x8x14x14xf32, #tpu.memory_space<vmem>>, vector<1x1x1x14xf32>,
    %410 = vector.extract_strided_slice %379 {offsets = [6, 0], sizes = [1, 14], strides = [1, 1]} : vector<8x14xf32> to vector<1x14xf32>
    %411 = vector.shape_cast %410 : vector<1x14xf32> to vector<14xf32>
    %c0_312 = arith.constant 0 : index
    %c6_313 = arith.constant 6 : index
    %c8_314 = arith.constant 8 : index
    %c0_315 = arith.constant 0 : index
    %412 = vector.load %arg3[%c0_312, %c6_313, %c8_314, %c0_315] : memref<2x8x14x14xf32, #tpu.memory_space<vmem>>, vector<1x1x1x14xf32>
    %413 = vector.shape_cast %412 : vector<1x1x1x14xf32> to vector<14xf32>
    %414 = vector.shape_cast %411 : vector<14xf32> to vector<1x1x1x14xf32>
    tpu.vector_store %arg3[%c0_312, %c6_313, %c8_314, %c0_315], %414 {strides = array<i32>} : memref<2x8x14x14xf32, #tpu.memory_space<vmem>>, vector<1x1x1x14xf32>,
    %415 = vector.extract_strided_slice %379 {offsets = [7, 0], sizes = [1, 14], strides = [1, 1]} : vector<8x14xf32> to vector<1x14xf32>
    %416 = vector.shape_cast %415 : vector<1x14xf32> to vector<14xf32>
    %c0_316 = arith.constant 0 : index
    %c7_317 = arith.constant 7 : index
    %c8_318 = arith.constant 8 : index
    %c0_319 = arith.constant 0 : index
    %417 = vector.load %arg3[%c0_316, %c7_317, %c8_318, %c0_319] : memref<2x8x14x14xf32, #tpu.memory_space<vmem>>, vector<1x1x1x14xf32>
    %418 = vector.shape_cast %417 : vector<1x1x1x14xf32> to vector<14xf32>
    %419 = vector.shape_cast %416 : vector<14xf32> to vector<1x1x1x14xf32>
    tpu.vector_store %arg3[%c0_316, %c7_317, %c8_318, %c0_319], %419 {strides = array<i32>} : memref<2x8x14x14xf32, #tpu.memory_space<vmem>>, vector<1x1x1x14xf32>,
    %420 = vector.extract_strided_slice %50 {offsets = [0, 144], sizes = [8, 14], strides = [1, 1]} : vector<8x444xf32> to vector<8x14xf32>
    %421 = vector.extract_strided_slice %420 {offsets = [0, 0], sizes = [1, 14], strides = [1, 1]} : vector<8x14xf32> to vector<1x14xf32>
    %422 = vector.shape_cast %421 : vector<1x14xf32> to vector<14xf32>
    %c0_320 = arith.constant 0 : index
    %c0_321 = arith.constant 0 : index
    %c9 = arith.constant 9 : index
    %c0_322 = arith.constant 0 : index
    %423 = vector.load %arg3[%c0_320, %c0_321, %c9, %c0_322] : memref<2x8x14x14xf32, #tpu.memory_space<vmem>>, vector<1x1x1x14xf32>
    %424 = vector.shape_cast %423 : vector<1x1x1x14xf32> to vector<14xf32>
    %425 = vector.shape_cast %422 : vector<14xf32> to vector<1x1x1x14xf32>
    tpu.vector_store %arg3[%c0_320, %c0_321, %c9, %c0_322], %425 {strides = array<i32>} : memref<2x8x14x14xf32, #tpu.memory_space<vmem>>, vector<1x1x1x14xf32>,
    %426 = vector.extract_strided_slice %420 {offsets = [1, 0], sizes = [1, 14], strides = [1, 1]} : vector<8x14xf32> to vector<1x14xf32>
    %427 = vector.shape_cast %426 : vector<1x14xf32> to vector<14xf32>
    %c0_323 = arith.constant 0 : index
    %c1_324 = arith.constant 1 : index
    %c9_325 = arith.constant 9 : index
    %c0_326 = arith.constant 0 : index
    %428 = vector.load %arg3[%c0_323, %c1_324, %c9_325, %c0_326] : memref<2x8x14x14xf32, #tpu.memory_space<vmem>>, vector<1x1x1x14xf32>
    %429 = vector.shape_cast %428 : vector<1x1x1x14xf32> to vector<14xf32>
    %430 = vector.shape_cast %427 : vector<14xf32> to vector<1x1x1x14xf32>
    tpu.vector_store %arg3[%c0_323, %c1_324, %c9_325, %c0_326], %430 {strides = array<i32>} : memref<2x8x14x14xf32, #tpu.memory_space<vmem>>, vector<1x1x1x14xf32>,
    %431 = vector.extract_strided_slice %420 {offsets = [2, 0], sizes = [1, 14], strides = [1, 1]} : vector<8x14xf32> to vector<1x14xf32>
    %432 = vector.shape_cast %431 : vector<1x14xf32> to vector<14xf32>
    %c0_327 = arith.constant 0 : index
    %c2_328 = arith.constant 2 : index
    %c9_329 = arith.constant 9 : index
    %c0_330 = arith.constant 0 : index
    %433 = vector.load %arg3[%c0_327, %c2_328, %c9_329, %c0_330] : memref<2x8x14x14xf32, #tpu.memory_space<vmem>>, vector<1x1x1x14xf32>
    %434 = vector.shape_cast %433 : vector<1x1x1x14xf32> to vector<14xf32>
    %435 = vector.shape_cast %432 : vector<14xf32> to vector<1x1x1x14xf32>
    tpu.vector_store %arg3[%c0_327, %c2_328, %c9_329, %c0_330], %435 {strides = array<i32>} : memref<2x8x14x14xf32, #tpu.memory_space<vmem>>, vector<1x1x1x14xf32>,
    %436 = vector.extract_strided_slice %420 {offsets = [3, 0], sizes = [1, 14], strides = [1, 1]} : vector<8x14xf32> to vector<1x14xf32>
    %437 = vector.shape_cast %436 : vector<1x14xf32> to vector<14xf32>
    %c0_331 = arith.constant 0 : index
    %c3_332 = arith.constant 3 : index
    %c9_333 = arith.constant 9 : index
    %c0_334 = arith.constant 0 : index
    %438 = vector.load %arg3[%c0_331, %c3_332, %c9_333, %c0_334] : memref<2x8x14x14xf32, #tpu.memory_space<vmem>>, vector<1x1x1x14xf32>
    %439 = vector.shape_cast %438 : vector<1x1x1x14xf32> to vector<14xf32>
    %440 = vector.shape_cast %437 : vector<14xf32> to vector<1x1x1x14xf32>
    tpu.vector_store %arg3[%c0_331, %c3_332, %c9_333, %c0_334], %440 {strides = array<i32>} : memref<2x8x14x14xf32, #tpu.memory_space<vmem>>, vector<1x1x1x14xf32>,
    %441 = vector.extract_strided_slice %420 {offsets = [4, 0], sizes = [1, 14], strides = [1, 1]} : vector<8x14xf32> to vector<1x14xf32>
    %442 = vector.shape_cast %441 : vector<1x14xf32> to vector<14xf32>
    %c0_335 = arith.constant 0 : index
    %c4_336 = arith.constant 4 : index
    %c9_337 = arith.constant 9 : index
    %c0_338 = arith.constant 0 : index
    %443 = vector.load %arg3[%c0_335, %c4_336, %c9_337, %c0_338] : memref<2x8x14x14xf32, #tpu.memory_space<vmem>>, vector<1x1x1x14xf32>
    %444 = vector.shape_cast %443 : vector<1x1x1x14xf32> to vector<14xf32>
    %445 = vector.shape_cast %442 : vector<14xf32> to vector<1x1x1x14xf32>
    tpu.vector_store %arg3[%c0_335, %c4_336, %c9_337, %c0_338], %445 {strides = array<i32>} : memref<2x8x14x14xf32, #tpu.memory_space<vmem>>, vector<1x1x1x14xf32>,
    %446 = vector.extract_strided_slice %420 {offsets = [5, 0], sizes = [1, 14], strides = [1, 1]} : vector<8x14xf32> to vector<1x14xf32>
    %447 = vector.shape_cast %446 : vector<1x14xf32> to vector<14xf32>
    %c0_339 = arith.constant 0 : index
    %c5_340 = arith.constant 5 : index
    %c9_341 = arith.constant 9 : index
    %c0_342 = arith.constant 0 : index
    %448 = vector.load %arg3[%c0_339, %c5_340, %c9_341, %c0_342] : memref<2x8x14x14xf32, #tpu.memory_space<vmem>>, vector<1x1x1x14xf32>
    %449 = vector.shape_cast %448 : vector<1x1x1x14xf32> to vector<14xf32>
    %450 = vector.shape_cast %447 : vector<14xf32> to vector<1x1x1x14xf32>
    tpu.vector_store %arg3[%c0_339, %c5_340, %c9_341, %c0_342], %450 {strides = array<i32>} : memref<2x8x14x14xf32, #tpu.memory_space<vmem>>, vector<1x1x1x14xf32>,
    %451 = vector.extract_strided_slice %420 {offsets = [6, 0], sizes = [1, 14], strides = [1, 1]} : vector<8x14xf32> to vector<1x14xf32>
    %452 = vector.shape_cast %451 : vector<1x14xf32> to vector<14xf32>
    %c0_343 = arith.constant 0 : index
    %c6_344 = arith.constant 6 : index
    %c9_345 = arith.constant 9 : index
    %c0_346 = arith.constant 0 : index
    %453 = vector.load %arg3[%c0_343, %c6_344, %c9_345, %c0_346] : memref<2x8x14x14xf32, #tpu.memory_space<vmem>>, vector<1x1x1x14xf32>
    %454 = vector.shape_cast %453 : vector<1x1x1x14xf32> to vector<14xf32>
    %455 = vector.shape_cast %452 : vector<14xf32> to vector<1x1x1x14xf32>
    tpu.vector_store %arg3[%c0_343, %c6_344, %c9_345, %c0_346], %455 {strides = array<i32>} : memref<2x8x14x14xf32, #tpu.memory_space<vmem>>, vector<1x1x1x14xf32>,
    %456 = vector.extract_strided_slice %420 {offsets = [7, 0], sizes = [1, 14], strides = [1, 1]} : vector<8x14xf32> to vector<1x14xf32>
    %457 = vector.shape_cast %456 : vector<1x14xf32> to vector<14xf32>
    %c0_347 = arith.constant 0 : index
    %c7_348 = arith.constant 7 : index
    %c9_349 = arith.constant 9 : index
    %c0_350 = arith.constant 0 : index
    %458 = vector.load %arg3[%c0_347, %c7_348, %c9_349, %c0_350] : memref<2x8x14x14xf32, #tpu.memory_space<vmem>>, vector<1x1x1x14xf32>
    %459 = vector.shape_cast %458 : vector<1x1x1x14xf32> to vector<14xf32>
    %460 = vector.shape_cast %457 : vector<14xf32> to vector<1x1x1x14xf32>
    tpu.vector_store %arg3[%c0_347, %c7_348, %c9_349, %c0_350], %460 {strides = array<i32>} : memref<2x8x14x14xf32, #tpu.memory_space<vmem>>, vector<1x1x1x14xf32>,
    %461 = vector.extract_strided_slice %50 {offsets = [0, 160], sizes = [8, 14], strides = [1, 1]} : vector<8x444xf32> to vector<8x14xf32>
    %462 = vector.extract_strided_slice %461 {offsets = [0, 0], sizes = [1, 14], strides = [1, 1]} : vector<8x14xf32> to vector<1x14xf32>
    %463 = vector.shape_cast %462 : vector<1x14xf32> to vector<14xf32>
    %c0_351 = arith.constant 0 : index
    %c0_352 = arith.constant 0 : index
    %c10 = arith.constant 10 : index
    %c0_353 = arith.constant 0 : index
    %464 = vector.load %arg3[%c0_351, %c0_352, %c10, %c0_353] : memref<2x8x14x14xf32, #tpu.memory_space<vmem>>, vector<1x1x1x14xf32>
    %465 = vector.shape_cast %464 : vector<1x1x1x14xf32> to vector<14xf32>
    %466 = vector.shape_cast %463 : vector<14xf32> to vector<1x1x1x14xf32>
    tpu.vector_store %arg3[%c0_351, %c0_352, %c10, %c0_353], %466 {strides = array<i32>} : memref<2x8x14x14xf32, #tpu.memory_space<vmem>>, vector<1x1x1x14xf32>,
    %467 = vector.extract_strided_slice %461 {offsets = [1, 0], sizes = [1, 14], strides = [1, 1]} : vector<8x14xf32> to vector<1x14xf32>
    %468 = vector.shape_cast %467 : vector<1x14xf32> to vector<14xf32>
    %c0_354 = arith.constant 0 : index
    %c1_355 = arith.constant 1 : index
    %c10_356 = arith.constant 10 : index
    %c0_357 = arith.constant 0 : index
    %469 = vector.load %arg3[%c0_354, %c1_355, %c10_356, %c0_357] : memref<2x8x14x14xf32, #tpu.memory_space<vmem>>, vector<1x1x1x14xf32>
    %470 = vector.shape_cast %469 : vector<1x1x1x14xf32> to vector<14xf32>
    %471 = vector.shape_cast %468 : vector<14xf32> to vector<1x1x1x14xf32>
    tpu.vector_store %arg3[%c0_354, %c1_355, %c10_356, %c0_357], %471 {strides = array<i32>} : memref<2x8x14x14xf32, #tpu.memory_space<vmem>>, vector<1x1x1x14xf32>,
    %472 = vector.extract_strided_slice %461 {offsets = [2, 0], sizes = [1, 14], strides = [1, 1]} : vector<8x14xf32> to vector<1x14xf32>
    %473 = vector.shape_cast %472 : vector<1x14xf32> to vector<14xf32>
    %c0_358 = arith.constant 0 : index
    %c2_359 = arith.constant 2 : index
    %c10_360 = arith.constant 10 : index
    %c0_361 = arith.constant 0 : index
    %474 = vector.load %arg3[%c0_358, %c2_359, %c10_360, %c0_361] : memref<2x8x14x14xf32, #tpu.memory_space<vmem>>, vector<1x1x1x14xf32>
    %475 = vector.shape_cast %474 : vector<1x1x1x14xf32> to vector<14xf32>
    %476 = vector.shape_cast %473 : vector<14xf32> to vector<1x1x1x14xf32>
    tpu.vector_store %arg3[%c0_358, %c2_359, %c10_360, %c0_361], %476 {strides = array<i32>} : memref<2x8x14x14xf32, #tpu.memory_space<vmem>>, vector<1x1x1x14xf32>,
    %477 = vector.extract_strided_slice %461 {offsets = [3, 0], sizes = [1, 14], strides = [1, 1]} : vector<8x14xf32> to vector<1x14xf32>
    %478 = vector.shape_cast %477 : vector<1x14xf32> to vector<14xf32>
    %c0_362 = arith.constant 0 : index
    %c3_363 = arith.constant 3 : index
    %c10_364 = arith.constant 10 : index
    %c0_365 = arith.constant 0 : index
    %479 = vector.load %arg3[%c0_362, %c3_363, %c10_364, %c0_365] : memref<2x8x14x14xf32, #tpu.memory_space<vmem>>, vector<1x1x1x14xf32>
    %480 = vector.shape_cast %479 : vector<1x1x1x14xf32> to vector<14xf32>
    %481 = vector.shape_cast %478 : vector<14xf32> to vector<1x1x1x14xf32>
    tpu.vector_store %arg3[%c0_362, %c3_363, %c10_364, %c0_365], %481 {strides = array<i32>} : memref<2x8x14x14xf32, #tpu.memory_space<vmem>>, vector<1x1x1x14xf32>,
    %482 = vector.extract_strided_slice %461 {offsets = [4, 0], sizes = [1, 14], strides = [1, 1]} : vector<8x14xf32> to vector<1x14xf32>
    %483 = vector.shape_cast %482 : vector<1x14xf32> to vector<14xf32>
    %c0_366 = arith.constant 0 : index
    %c4_367 = arith.constant 4 : index
    %c10_368 = arith.constant 10 : index
    %c0_369 = arith.constant 0 : index
    %484 = vector.load %arg3[%c0_366, %c4_367, %c10_368, %c0_369] : memref<2x8x14x14xf32, #tpu.memory_space<vmem>>, vector<1x1x1x14xf32>
    %485 = vector.shape_cast %484 : vector<1x1x1x14xf32> to vector<14xf32>
    %486 = vector.shape_cast %483 : vector<14xf32> to vector<1x1x1x14xf32>
    tpu.vector_store %arg3[%c0_366, %c4_367, %c10_368, %c0_369], %486 {strides = array<i32>} : memref<2x8x14x14xf32, #tpu.memory_space<vmem>>, vector<1x1x1x14xf32>,
    %487 = vector.extract_strided_slice %461 {offsets = [5, 0], sizes = [1, 14], strides = [1, 1]} : vector<8x14xf32> to vector<1x14xf32>
    %488 = vector.shape_cast %487 : vector<1x14xf32> to vector<14xf32>
    %c0_370 = arith.constant 0 : index
    %c5_371 = arith.constant 5 : index
    %c10_372 = arith.constant 10 : index
    %c0_373 = arith.constant 0 : index
    %489 = vector.load %arg3[%c0_370, %c5_371, %c10_372, %c0_373] : memref<2x8x14x14xf32, #tpu.memory_space<vmem>>, vector<1x1x1x14xf32>
    %490 = vector.shape_cast %489 : vector<1x1x1x14xf32> to vector<14xf32>
    %491 = vector.shape_cast %488 : vector<14xf32> to vector<1x1x1x14xf32>
    tpu.vector_store %arg3[%c0_370, %c5_371, %c10_372, %c0_373], %491 {strides = array<i32>} : memref<2x8x14x14xf32, #tpu.memory_space<vmem>>, vector<1x1x1x14xf32>,
    %492 = vector.extract_strided_slice %461 {offsets = [6, 0], sizes = [1, 14], strides = [1, 1]} : vector<8x14xf32> to vector<1x14xf32>
    %493 = vector.shape_cast %492 : vector<1x14xf32> to vector<14xf32>
    %c0_374 = arith.constant 0 : index
    %c6_375 = arith.constant 6 : index
    %c10_376 = arith.constant 10 : index
    %c0_377 = arith.constant 0 : index
    %494 = vector.load %arg3[%c0_374, %c6_375, %c10_376, %c0_377] : memref<2x8x14x14xf32, #tpu.memory_space<vmem>>, vector<1x1x1x14xf32>
    %495 = vector.shape_cast %494 : vector<1x1x1x14xf32> to vector<14xf32>
    %496 = vector.shape_cast %493 : vector<14xf32> to vector<1x1x1x14xf32>
    tpu.vector_store %arg3[%c0_374, %c6_375, %c10_376, %c0_377], %496 {strides = array<i32>} : memref<2x8x14x14xf32, #tpu.memory_space<vmem>>, vector<1x1x1x14xf32>,
    %497 = vector.extract_strided_slice %461 {offsets = [7, 0], sizes = [1, 14], strides = [1, 1]} : vector<8x14xf32> to vector<1x14xf32>
    %498 = vector.shape_cast %497 : vector<1x14xf32> to vector<14xf32>
    %c0_378 = arith.constant 0 : index
    %c7_379 = arith.constant 7 : index
    %c10_380 = arith.constant 10 : index
    %c0_381 = arith.constant 0 : index
    %499 = vector.load %arg3[%c0_378, %c7_379, %c10_380, %c0_381] : memref<2x8x14x14xf32, #tpu.memory_space<vmem>>, vector<1x1x1x14xf32>
    %500 = vector.shape_cast %499 : vector<1x1x1x14xf32> to vector<14xf32>
    %501 = vector.shape_cast %498 : vector<14xf32> to vector<1x1x1x14xf32>
    tpu.vector_store %arg3[%c0_378, %c7_379, %c10_380, %c0_381], %501 {strides = array<i32>} : memref<2x8x14x14xf32, #tpu.memory_space<vmem>>, vector<1x1x1x14xf32>,
    %502 = vector.extract_strided_slice %50 {offsets = [0, 176], sizes = [8, 14], strides = [1, 1]} : vector<8x444xf32> to vector<8x14xf32>
    %503 = vector.extract_strided_slice %502 {offsets = [0, 0], sizes = [1, 14], strides = [1, 1]} : vector<8x14xf32> to vector<1x14xf32>
    %504 = vector.shape_cast %503 : vector<1x14xf32> to vector<14xf32>
    %c0_382 = arith.constant 0 : index
    %c0_383 = arith.constant 0 : index
    %c11 = arith.constant 11 : index
    %c0_384 = arith.constant 0 : index
    %505 = vector.load %arg3[%c0_382, %c0_383, %c11, %c0_384] : memref<2x8x14x14xf32, #tpu.memory_space<vmem>>, vector<1x1x1x14xf32>
    %506 = vector.shape_cast %505 : vector<1x1x1x14xf32> to vector<14xf32>
    %507 = vector.shape_cast %504 : vector<14xf32> to vector<1x1x1x14xf32>
    tpu.vector_store %arg3[%c0_382, %c0_383, %c11, %c0_384], %507 {strides = array<i32>} : memref<2x8x14x14xf32, #tpu.memory_space<vmem>>, vector<1x1x1x14xf32>,
    %508 = vector.extract_strided_slice %502 {offsets = [1, 0], sizes = [1, 14], strides = [1, 1]} : vector<8x14xf32> to vector<1x14xf32>
    %509 = vector.shape_cast %508 : vector<1x14xf32> to vector<14xf32>
    %c0_385 = arith.constant 0 : index
    %c1_386 = arith.constant 1 : index
    %c11_387 = arith.constant 11 : index
    %c0_388 = arith.constant 0 : index
    %510 = vector.load %arg3[%c0_385, %c1_386, %c11_387, %c0_388] : memref<2x8x14x14xf32, #tpu.memory_space<vmem>>, vector<1x1x1x14xf32>
    %511 = vector.shape_cast %510 : vector<1x1x1x14xf32> to vector<14xf32>
    %512 = vector.shape_cast %509 : vector<14xf32> to vector<1x1x1x14xf32>
    tpu.vector_store %arg3[%c0_385, %c1_386, %c11_387, %c0_388], %512 {strides = array<i32>} : memref<2x8x14x14xf32, #tpu.memory_space<vmem>>, vector<1x1x1x14xf32>,
    %513 = vector.extract_strided_slice %502 {offsets = [2, 0], sizes = [1, 14], strides = [1, 1]} : vector<8x14xf32> to vector<1x14xf32>
    %514 = vector.shape_cast %513 : vector<1x14xf32> to vector<14xf32>
    %c0_389 = arith.constant 0 : index
    %c2_390 = arith.constant 2 : index
    %c11_391 = arith.constant 11 : index
    %c0_392 = arith.constant 0 : index
    %515 = vector.load %arg3[%c0_389, %c2_390, %c11_391, %c0_392] : memref<2x8x14x14xf32, #tpu.memory_space<vmem>>, vector<1x1x1x14xf32>
    %516 = vector.shape_cast %515 : vector<1x1x1x14xf32> to vector<14xf32>
    %517 = vector.shape_cast %514 : vector<14xf32> to vector<1x1x1x14xf32>
    tpu.vector_store %arg3[%c0_389, %c2_390, %c11_391, %c0_392], %517 {strides = array<i32>} : memref<2x8x14x14xf32, #tpu.memory_space<vmem>>, vector<1x1x1x14xf32>,
    %518 = vector.extract_strided_slice %502 {offsets = [3, 0], sizes = [1, 14], strides = [1, 1]} : vector<8x14xf32> to vector<1x14xf32>
    %519 = vector.shape_cast %518 : vector<1x14xf32> to vector<14xf32>
    %c0_393 = arith.constant 0 : index
    %c3_394 = arith.constant 3 : index
    %c11_395 = arith.constant 11 : index
    %c0_396 = arith.constant 0 : index
    %520 = vector.load %arg3[%c0_393, %c3_394, %c11_395, %c0_396] : memref<2x8x14x14xf32, #tpu.memory_space<vmem>>, vector<1x1x1x14xf32>
    %521 = vector.shape_cast %520 : vector<1x1x1x14xf32> to vector<14xf32>
    %522 = vector.shape_cast %519 : vector<14xf32> to vector<1x1x1x14xf32>
    tpu.vector_store %arg3[%c0_393, %c3_394, %c11_395, %c0_396], %522 {strides = array<i32>} : memref<2x8x14x14xf32, #tpu.memory_space<vmem>>, vector<1x1x1x14xf32>,
    %523 = vector.extract_strided_slice %502 {offsets = [4, 0], sizes = [1, 14], strides = [1, 1]} : vector<8x14xf32> to vector<1x14xf32>
    %524 = vector.shape_cast %523 : vector<1x14xf32> to vector<14xf32>
    %c0_397 = arith.constant 0 : index
    %c4_398 = arith.constant 4 : index
    %c11_399 = arith.constant 11 : index
    %c0_400 = arith.constant 0 : index
    %525 = vector.load %arg3[%c0_397, %c4_398, %c11_399, %c0_400] : memref<2x8x14x14xf32, #tpu.memory_space<vmem>>, vector<1x1x1x14xf32>
    %526 = vector.shape_cast %525 : vector<1x1x1x14xf32> to vector<14xf32>
    %527 = vector.shape_cast %524 : vector<14xf32> to vector<1x1x1x14xf32>
    tpu.vector_store %arg3[%c0_397, %c4_398, %c11_399, %c0_400], %527 {strides = array<i32>} : memref<2x8x14x14xf32, #tpu.memory_space<vmem>>, vector<1x1x1x14xf32>,
    %528 = vector.extract_strided_slice %502 {offsets = [5, 0], sizes = [1, 14], strides = [1, 1]} : vector<8x14xf32> to vector<1x14xf32>
    %529 = vector.shape_cast %528 : vector<1x14xf32> to vector<14xf32>
    %c0_401 = arith.constant 0 : index
    %c5_402 = arith.constant 5 : index
    %c11_403 = arith.constant 11 : index
    %c0_404 = arith.constant 0 : index
    %530 = vector.load %arg3[%c0_401, %c5_402, %c11_403, %c0_404] : memref<2x8x14x14xf32, #tpu.memory_space<vmem>>, vector<1x1x1x14xf32>
    %531 = vector.shape_cast %530 : vector<1x1x1x14xf32> to vector<14xf32>
    %532 = vector.shape_cast %529 : vector<14xf32> to vector<1x1x1x14xf32>
    tpu.vector_store %arg3[%c0_401, %c5_402, %c11_403, %c0_404], %532 {strides = array<i32>} : memref<2x8x14x14xf32, #tpu.memory_space<vmem>>, vector<1x1x1x14xf32>,
    %533 = vector.extract_strided_slice %502 {offsets = [6, 0], sizes = [1, 14], strides = [1, 1]} : vector<8x14xf32> to vector<1x14xf32>
    %534 = vector.shape_cast %533 : vector<1x14xf32> to vector<14xf32>
    %c0_405 = arith.constant 0 : index
    %c6_406 = arith.constant 6 : index
    %c11_407 = arith.constant 11 : index
    %c0_408 = arith.constant 0 : index
    %535 = vector.load %arg3[%c0_405, %c6_406, %c11_407, %c0_408] : memref<2x8x14x14xf32, #tpu.memory_space<vmem>>, vector<1x1x1x14xf32>
    %536 = vector.shape_cast %535 : vector<1x1x1x14xf32> to vector<14xf32>
    %537 = vector.shape_cast %534 : vector<14xf32> to vector<1x1x1x14xf32>
    tpu.vector_store %arg3[%c0_405, %c6_406, %c11_407, %c0_408], %537 {strides = array<i32>} : memref<2x8x14x14xf32, #tpu.memory_space<vmem>>, vector<1x1x1x14xf32>,
    %538 = vector.extract_strided_slice %502 {offsets = [7, 0], sizes = [1, 14], strides = [1, 1]} : vector<8x14xf32> to vector<1x14xf32>
    %539 = vector.shape_cast %538 : vector<1x14xf32> to vector<14xf32>
    %c0_409 = arith.constant 0 : index
    %c7_410 = arith.constant 7 : index
    %c11_411 = arith.constant 11 : index
    %c0_412 = arith.constant 0 : index
    %540 = vector.load %arg3[%c0_409, %c7_410, %c11_411, %c0_412] : memref<2x8x14x14xf32, #tpu.memory_space<vmem>>, vector<1x1x1x14xf32>
    %541 = vector.shape_cast %540 : vector<1x1x1x14xf32> to vector<14xf32>
    %542 = vector.shape_cast %539 : vector<14xf32> to vector<1x1x1x14xf32>
    tpu.vector_store %arg3[%c0_409, %c7_410, %c11_411, %c0_412], %542 {strides = array<i32>} : memref<2x8x14x14xf32, #tpu.memory_space<vmem>>, vector<1x1x1x14xf32>,
    %543 = vector.extract_strided_slice %50 {offsets = [0, 192], sizes = [8, 14], strides = [1, 1]} : vector<8x444xf32> to vector<8x14xf32>
    %544 = vector.extract_strided_slice %543 {offsets = [0, 0], sizes = [1, 14], strides = [1, 1]} : vector<8x14xf32> to vector<1x14xf32>
    %545 = vector.shape_cast %544 : vector<1x14xf32> to vector<14xf32>
    %c0_413 = arith.constant 0 : index
    %c0_414 = arith.constant 0 : index
    %c12_415 = arith.constant 12 : index
    %c0_416 = arith.constant 0 : index
    %546 = vector.load %arg3[%c0_413, %c0_414, %c12_415, %c0_416] : memref<2x8x14x14xf32, #tpu.memory_space<vmem>>, vector<1x1x1x14xf32>
    %547 = vector.shape_cast %546 : vector<1x1x1x14xf32> to vector<14xf32>
    %548 = vector.shape_cast %545 : vector<14xf32> to vector<1x1x1x14xf32>
    tpu.vector_store %arg3[%c0_413, %c0_414, %c12_415, %c0_416], %548 {strides = array<i32>} : memref<2x8x14x14xf32, #tpu.memory_space<vmem>>, vector<1x1x1x14xf32>,
    %549 = vector.extract_strided_slice %543 {offsets = [1, 0], sizes = [1, 14], strides = [1, 1]} : vector<8x14xf32> to vector<1x14xf32>
    %550 = vector.shape_cast %549 : vector<1x14xf32> to vector<14xf32>
    %c0_417 = arith.constant 0 : index
    %c1_418 = arith.constant 1 : index
    %c12_419 = arith.constant 12 : index
    %c0_420 = arith.constant 0 : index
    %551 = vector.load %arg3[%c0_417, %c1_418, %c12_419, %c0_420] : memref<2x8x14x14xf32, #tpu.memory_space<vmem>>, vector<1x1x1x14xf32>
    %552 = vector.shape_cast %551 : vector<1x1x1x14xf32> to vector<14xf32>
    %553 = vector.shape_cast %550 : vector<14xf32> to vector<1x1x1x14xf32>
    tpu.vector_store %arg3[%c0_417, %c1_418, %c12_419, %c0_420], %553 {strides = array<i32>} : memref<2x8x14x14xf32, #tpu.memory_space<vmem>>, vector<1x1x1x14xf32>,
    %554 = vector.extract_strided_slice %543 {offsets = [2, 0], sizes = [1, 14], strides = [1, 1]} : vector<8x14xf32> to vector<1x14xf32>
    %555 = vector.shape_cast %554 : vector<1x14xf32> to vector<14xf32>
    %c0_421 = arith.constant 0 : index
    %c2_422 = arith.constant 2 : index
    %c12_423 = arith.constant 12 : index
    %c0_424 = arith.constant 0 : index
    %556 = vector.load %arg3[%c0_421, %c2_422, %c12_423, %c0_424] : memref<2x8x14x14xf32, #tpu.memory_space<vmem>>, vector<1x1x1x14xf32>
    %557 = vector.shape_cast %556 : vector<1x1x1x14xf32> to vector<14xf32>
    %558 = vector.shape_cast %555 : vector<14xf32> to vector<1x1x1x14xf32>
    tpu.vector_store %arg3[%c0_421, %c2_422, %c12_423, %c0_424], %558 {strides = array<i32>} : memref<2x8x14x14xf32, #tpu.memory_space<vmem>>, vector<1x1x1x14xf32>,
    %559 = vector.extract_strided_slice %543 {offsets = [3, 0], sizes = [1, 14], strides = [1, 1]} : vector<8x14xf32> to vector<1x14xf32>
    %560 = vector.shape_cast %559 : vector<1x14xf32> to vector<14xf32>
    %c0_425 = arith.constant 0 : index
    %c3_426 = arith.constant 3 : index
    %c12_427 = arith.constant 12 : index
    %c0_428 = arith.constant 0 : index
    %561 = vector.load %arg3[%c0_425, %c3_426, %c12_427, %c0_428] : memref<2x8x14x14xf32, #tpu.memory_space<vmem>>, vector<1x1x1x14xf32>
    %562 = vector.shape_cast %561 : vector<1x1x1x14xf32> to vector<14xf32>
    %563 = vector.shape_cast %560 : vector<14xf32> to vector<1x1x1x14xf32>
    tpu.vector_store %arg3[%c0_425, %c3_426, %c12_427, %c0_428], %563 {strides = array<i32>} : memref<2x8x14x14xf32, #tpu.memory_space<vmem>>, vector<1x1x1x14xf32>,
    %564 = vector.extract_strided_slice %543 {offsets = [4, 0], sizes = [1, 14], strides = [1, 1]} : vector<8x14xf32> to vector<1x14xf32>
    %565 = vector.shape_cast %564 : vector<1x14xf32> to vector<14xf32>
    %c0_429 = arith.constant 0 : index
    %c4_430 = arith.constant 4 : index
    %c12_431 = arith.constant 12 : index
    %c0_432 = arith.constant 0 : index
    %566 = vector.load %arg3[%c0_429, %c4_430, %c12_431, %c0_432] : memref<2x8x14x14xf32, #tpu.memory_space<vmem>>, vector<1x1x1x14xf32>
    %567 = vector.shape_cast %566 : vector<1x1x1x14xf32> to vector<14xf32>
    %568 = vector.shape_cast %565 : vector<14xf32> to vector<1x1x1x14xf32>
    tpu.vector_store %arg3[%c0_429, %c4_430, %c12_431, %c0_432], %568 {strides = array<i32>} : memref<2x8x14x14xf32, #tpu.memory_space<vmem>>, vector<1x1x1x14xf32>,
    %569 = vector.extract_strided_slice %543 {offsets = [5, 0], sizes = [1, 14], strides = [1, 1]} : vector<8x14xf32> to vector<1x14xf32>
    %570 = vector.shape_cast %569 : vector<1x14xf32> to vector<14xf32>
    %c0_433 = arith.constant 0 : index
    %c5_434 = arith.constant 5 : index
    %c12_435 = arith.constant 12 : index
    %c0_436 = arith.constant 0 : index
    %571 = vector.load %arg3[%c0_433, %c5_434, %c12_435, %c0_436] : memref<2x8x14x14xf32, #tpu.memory_space<vmem>>, vector<1x1x1x14xf32>
    %572 = vector.shape_cast %571 : vector<1x1x1x14xf32> to vector<14xf32>
    %573 = vector.shape_cast %570 : vector<14xf32> to vector<1x1x1x14xf32>
    tpu.vector_store %arg3[%c0_433, %c5_434, %c12_435, %c0_436], %573 {strides = array<i32>} : memref<2x8x14x14xf32, #tpu.memory_space<vmem>>, vector<1x1x1x14xf32>,
    %574 = vector.extract_strided_slice %543 {offsets = [6, 0], sizes = [1, 14], strides = [1, 1]} : vector<8x14xf32> to vector<1x14xf32>
    %575 = vector.shape_cast %574 : vector<1x14xf32> to vector<14xf32>
    %c0_437 = arith.constant 0 : index
    %c6_438 = arith.constant 6 : index
    %c12_439 = arith.constant 12 : index
    %c0_440 = arith.constant 0 : index
    %576 = vector.load %arg3[%c0_437, %c6_438, %c12_439, %c0_440] : memref<2x8x14x14xf32, #tpu.memory_space<vmem>>, vector<1x1x1x14xf32>
    %577 = vector.shape_cast %576 : vector<1x1x1x14xf32> to vector<14xf32>
    %578 = vector.shape_cast %575 : vector<14xf32> to vector<1x1x1x14xf32>
    tpu.vector_store %arg3[%c0_437, %c6_438, %c12_439, %c0_440], %578 {strides = array<i32>} : memref<2x8x14x14xf32, #tpu.memory_space<vmem>>, vector<1x1x1x14xf32>,
    %579 = vector.extract_strided_slice %543 {offsets = [7, 0], sizes = [1, 14], strides = [1, 1]} : vector<8x14xf32> to vector<1x14xf32>
    %580 = vector.shape_cast %579 : vector<1x14xf32> to vector<14xf32>
    %c0_441 = arith.constant 0 : index
    %c7_442 = arith.constant 7 : index
    %c12_443 = arith.constant 12 : index
    %c0_444 = arith.constant 0 : index
    %581 = vector.load %arg3[%c0_441, %c7_442, %c12_443, %c0_444] : memref<2x8x14x14xf32, #tpu.memory_space<vmem>>, vector<1x1x1x14xf32>
    %582 = vector.shape_cast %581 : vector<1x1x1x14xf32> to vector<14xf32>
    %583 = vector.shape_cast %580 : vector<14xf32> to vector<1x1x1x14xf32>
    tpu.vector_store %arg3[%c0_441, %c7_442, %c12_443, %c0_444], %583 {strides = array<i32>} : memref<2x8x14x14xf32, #tpu.memory_space<vmem>>, vector<1x1x1x14xf32>,
    %584 = vector.extract_strided_slice %50 {offsets = [0, 208], sizes = [8, 14], strides = [1, 1]} : vector<8x444xf32> to vector<8x14xf32>
    %585 = vector.extract_strided_slice %584 {offsets = [0, 0], sizes = [1, 14], strides = [1, 1]} : vector<8x14xf32> to vector<1x14xf32>
    %586 = vector.shape_cast %585 : vector<1x14xf32> to vector<14xf32>
    %c0_445 = arith.constant 0 : index
    %c0_446 = arith.constant 0 : index
    %c13 = arith.constant 13 : index
    %c0_447 = arith.constant 0 : index
    %587 = vector.load %arg3[%c0_445, %c0_446, %c13, %c0_447] : memref<2x8x14x14xf32, #tpu.memory_space<vmem>>, vector<1x1x1x14xf32>
    %588 = vector.shape_cast %587 : vector<1x1x1x14xf32> to vector<14xf32>
    %589 = vector.shape_cast %586 : vector<14xf32> to vector<1x1x1x14xf32>
    tpu.vector_store %arg3[%c0_445, %c0_446, %c13, %c0_447], %589 {strides = array<i32>} : memref<2x8x14x14xf32, #tpu.memory_space<vmem>>, vector<1x1x1x14xf32>,
    %590 = vector.extract_strided_slice %584 {offsets = [1, 0], sizes = [1, 14], strides = [1, 1]} : vector<8x14xf32> to vector<1x14xf32>
    %591 = vector.shape_cast %590 : vector<1x14xf32> to vector<14xf32>
    %c0_448 = arith.constant 0 : index
    %c1_449 = arith.constant 1 : index
    %c13_450 = arith.constant 13 : index
    %c0_451 = arith.constant 0 : index
    %592 = vector.load %arg3[%c0_448, %c1_449, %c13_450, %c0_451] : memref<2x8x14x14xf32, #tpu.memory_space<vmem>>, vector<1x1x1x14xf32>
    %593 = vector.shape_cast %592 : vector<1x1x1x14xf32> to vector<14xf32>
    %594 = vector.shape_cast %591 : vector<14xf32> to vector<1x1x1x14xf32>
    tpu.vector_store %arg3[%c0_448, %c1_449, %c13_450, %c0_451], %594 {strides = array<i32>} : memref<2x8x14x14xf32, #tpu.memory_space<vmem>>, vector<1x1x1x14xf32>,
    %595 = vector.extract_strided_slice %584 {offsets = [2, 0], sizes = [1, 14], strides = [1, 1]} : vector<8x14xf32> to vector<1x14xf32>
    %596 = vector.shape_cast %595 : vector<1x14xf32> to vector<14xf32>
    %c0_452 = arith.constant 0 : index
    %c2_453 = arith.constant 2 : index
    %c13_454 = arith.constant 13 : index
    %c0_455 = arith.constant 0 : index
    %597 = vector.load %arg3[%c0_452, %c2_453, %c13_454, %c0_455] : memref<2x8x14x14xf32, #tpu.memory_space<vmem>>, vector<1x1x1x14xf32>
    %598 = vector.shape_cast %597 : vector<1x1x1x14xf32> to vector<14xf32>
    %599 = vector.shape_cast %596 : vector<14xf32> to vector<1x1x1x14xf32>
    tpu.vector_store %arg3[%c0_452, %c2_453, %c13_454, %c0_455], %599 {strides = array<i32>} : memref<2x8x14x14xf32, #tpu.memory_space<vmem>>, vector<1x1x1x14xf32>,
    %600 = vector.extract_strided_slice %584 {offsets = [3, 0], sizes = [1, 14], strides = [1, 1]} : vector<8x14xf32> to vector<1x14xf32>
    %601 = vector.shape_cast %600 : vector<1x14xf32> to vector<14xf32>
    %c0_456 = arith.constant 0 : index
    %c3_457 = arith.constant 3 : index
    %c13_458 = arith.constant 13 : index
    %c0_459 = arith.constant 0 : index
    %602 = vector.load %arg3[%c0_456, %c3_457, %c13_458, %c0_459] : memref<2x8x14x14xf32, #tpu.memory_space<vmem>>, vector<1x1x1x14xf32>
    %603 = vector.shape_cast %602 : vector<1x1x1x14xf32> to vector<14xf32>
    %604 = vector.shape_cast %601 : vector<14xf32> to vector<1x1x1x14xf32>
    tpu.vector_store %arg3[%c0_456, %c3_457, %c13_458, %c0_459], %604 {strides = array<i32>} : memref<2x8x14x14xf32, #tpu.memory_space<vmem>>, vector<1x1x1x14xf32>,
    %605 = vector.extract_strided_slice %584 {offsets = [4, 0], sizes = [1, 14], strides = [1, 1]} : vector<8x14xf32> to vector<1x14xf32>
    %606 = vector.shape_cast %605 : vector<1x14xf32> to vector<14xf32>
    %c0_460 = arith.constant 0 : index
    %c4_461 = arith.constant 4 : index
    %c13_462 = arith.constant 13 : index
    %c0_463 = arith.constant 0 : index
    %607 = vector.load %arg3[%c0_460, %c4_461, %c13_462, %c0_463] : memref<2x8x14x14xf32, #tpu.memory_space<vmem>>, vector<1x1x1x14xf32>
    %608 = vector.shape_cast %607 : vector<1x1x1x14xf32> to vector<14xf32>
    %609 = vector.shape_cast %606 : vector<14xf32> to vector<1x1x1x14xf32>
    tpu.vector_store %arg3[%c0_460, %c4_461, %c13_462, %c0_463], %609 {strides = array<i32>} : memref<2x8x14x14xf32, #tpu.memory_space<vmem>>, vector<1x1x1x14xf32>,
    %610 = vector.extract_strided_slice %584 {offsets = [5, 0], sizes = [1, 14], strides = [1, 1]} : vector<8x14xf32> to vector<1x14xf32>
    %611 = vector.shape_cast %610 : vector<1x14xf32> to vector<14xf32>
    %c0_464 = arith.constant 0 : index
    %c5_465 = arith.constant 5 : index
    %c13_466 = arith.constant 13 : index
    %c0_467 = arith.constant 0 : index
    %612 = vector.load %arg3[%c0_464, %c5_465, %c13_466, %c0_467] : memref<2x8x14x14xf32, #tpu.memory_space<vmem>>, vector<1x1x1x14xf32>
    %613 = vector.shape_cast %612 : vector<1x1x1x14xf32> to vector<14xf32>
    %614 = vector.shape_cast %611 : vector<14xf32> to vector<1x1x1x14xf32>
    tpu.vector_store %arg3[%c0_464, %c5_465, %c13_466, %c0_467], %614 {strides = array<i32>} : memref<2x8x14x14xf32, #tpu.memory_space<vmem>>, vector<1x1x1x14xf32>,
    %615 = vector.extract_strided_slice %584 {offsets = [6, 0], sizes = [1, 14], strides = [1, 1]} : vector<8x14xf32> to vector<1x14xf32>
    %616 = vector.shape_cast %615 : vector<1x14xf32> to vector<14xf32>
    %c0_468 = arith.constant 0 : index
    %c6_469 = arith.constant 6 : index
    %c13_470 = arith.constant 13 : index
    %c0_471 = arith.constant 0 : index
    %617 = vector.load %arg3[%c0_468, %c6_469, %c13_470, %c0_471] : memref<2x8x14x14xf32, #tpu.memory_space<vmem>>, vector<1x1x1x14xf32>
    %618 = vector.shape_cast %617 : vector<1x1x1x14xf32> to vector<14xf32>
    %619 = vector.shape_cast %616 : vector<14xf32> to vector<1x1x1x14xf32>
    tpu.vector_store %arg3[%c0_468, %c6_469, %c13_470, %c0_471], %619 {strides = array<i32>} : memref<2x8x14x14xf32, #tpu.memory_space<vmem>>, vector<1x1x1x14xf32>,
    %620 = vector.extract_strided_slice %584 {offsets = [7, 0], sizes = [1, 14], strides = [1, 1]} : vector<8x14xf32> to vector<1x14xf32>
    %621 = vector.shape_cast %620 : vector<1x14xf32> to vector<14xf32>
    %c0_472 = arith.constant 0 : index
    %c7_473 = arith.constant 7 : index
    %c13_474 = arith.constant 13 : index
    %c0_475 = arith.constant 0 : index
    %622 = vector.load %arg3[%c0_472, %c7_473, %c13_474, %c0_475] : memref<2x8x14x14xf32, #tpu.memory_space<vmem>>, vector<1x1x1x14xf32>
    %623 = vector.shape_cast %622 : vector<1x1x1x14xf32> to vector<14xf32>
    %624 = vector.shape_cast %621 : vector<14xf32> to vector<1x1x1x14xf32>
    tpu.vector_store %arg3[%c0_472, %c7_473, %c13_474, %c0_475], %624 {strides = array<i32>} : memref<2x8x14x14xf32, #tpu.memory_space<vmem>>, vector<1x1x1x14xf32>,
    %625 = vector.extract_strided_slice %50 {offsets = [0, 222], sizes = [8, 14], strides = [1, 1]} : vector<8x444xf32> to vector<8x14xf32>
    %626 = vector.extract_strided_slice %625 {offsets = [0, 0], sizes = [1, 14], strides = [1, 1]} : vector<8x14xf32> to vector<1x14xf32>
    %627 = vector.shape_cast %626 : vector<1x14xf32> to vector<14xf32>
    %c1_476 = arith.constant 1 : index
    %c0_477 = arith.constant 0 : index
    %c0_478 = arith.constant 0 : index
    %c0_479 = arith.constant 0 : index
    %628 = vector.load %arg3[%c1_476, %c0_477, %c0_478, %c0_479] : memref<2x8x14x14xf32, #tpu.memory_space<vmem>>, vector<1x1x1x14xf32>
    %629 = vector.shape_cast %628 : vector<1x1x1x14xf32> to vector<14xf32>
    %630 = vector.shape_cast %627 : vector<14xf32> to vector<1x1x1x14xf32>
    tpu.vector_store %arg3[%c1_476, %c0_477, %c0_478, %c0_479], %630 {strides = array<i32>} : memref<2x8x14x14xf32, #tpu.memory_space<vmem>>, vector<1x1x1x14xf32>,
    %631 = vector.extract_strided_slice %625 {offsets = [1, 0], sizes = [1, 14], strides = [1, 1]} : vector<8x14xf32> to vector<1x14xf32>
    %632 = vector.shape_cast %631 : vector<1x14xf32> to vector<14xf32>
    %c1_480 = arith.constant 1 : index
    %c1_481 = arith.constant 1 : index
    %c0_482 = arith.constant 0 : index
    %c0_483 = arith.constant 0 : index
    %633 = vector.load %arg3[%c1_480, %c1_481, %c0_482, %c0_483] : memref<2x8x14x14xf32, #tpu.memory_space<vmem>>, vector<1x1x1x14xf32>
    %634 = vector.shape_cast %633 : vector<1x1x1x14xf32> to vector<14xf32>
    %635 = vector.shape_cast %632 : vector<14xf32> to vector<1x1x1x14xf32>
    tpu.vector_store %arg3[%c1_480, %c1_481, %c0_482, %c0_483], %635 {strides = array<i32>} : memref<2x8x14x14xf32, #tpu.memory_space<vmem>>, vector<1x1x1x14xf32>,
    %636 = vector.extract_strided_slice %625 {offsets = [2, 0], sizes = [1, 14], strides = [1, 1]} : vector<8x14xf32> to vector<1x14xf32>
    %637 = vector.shape_cast %636 : vector<1x14xf32> to vector<14xf32>
    %c1_484 = arith.constant 1 : index
    %c2_485 = arith.constant 2 : index
    %c0_486 = arith.constant 0 : index
    %c0_487 = arith.constant 0 : index
    %638 = vector.load %arg3[%c1_484, %c2_485, %c0_486, %c0_487] : memref<2x8x14x14xf32, #tpu.memory_space<vmem>>, vector<1x1x1x14xf32>
    %639 = vector.shape_cast %638 : vector<1x1x1x14xf32> to vector<14xf32>
    %640 = vector.shape_cast %637 : vector<14xf32> to vector<1x1x1x14xf32>
    tpu.vector_store %arg3[%c1_484, %c2_485, %c0_486, %c0_487], %640 {strides = array<i32>} : memref<2x8x14x14xf32, #tpu.memory_space<vmem>>, vector<1x1x1x14xf32>,
    %641 = vector.extract_strided_slice %625 {offsets = [3, 0], sizes = [1, 14], strides = [1, 1]} : vector<8x14xf32> to vector<1x14xf32>
    %642 = vector.shape_cast %641 : vector<1x14xf32> to vector<14xf32>
    %c1_488 = arith.constant 1 : index
    %c3_489 = arith.constant 3 : index
    %c0_490 = arith.constant 0 : index
    %c0_491 = arith.constant 0 : index
    %643 = vector.load %arg3[%c1_488, %c3_489, %c0_490, %c0_491] : memref<2x8x14x14xf32, #tpu.memory_space<vmem>>, vector<1x1x1x14xf32>
    %644 = vector.shape_cast %643 : vector<1x1x1x14xf32> to vector<14xf32>
    %645 = vector.shape_cast %642 : vector<14xf32> to vector<1x1x1x14xf32>
    tpu.vector_store %arg3[%c1_488, %c3_489, %c0_490, %c0_491], %645 {strides = array<i32>} : memref<2x8x14x14xf32, #tpu.memory_space<vmem>>, vector<1x1x1x14xf32>,
    %646 = vector.extract_strided_slice %625 {offsets = [4, 0], sizes = [1, 14], strides = [1, 1]} : vector<8x14xf32> to vector<1x14xf32>
    %647 = vector.shape_cast %646 : vector<1x14xf32> to vector<14xf32>
    %c1_492 = arith.constant 1 : index
    %c4_493 = arith.constant 4 : index
    %c0_494 = arith.constant 0 : index
    %c0_495 = arith.constant 0 : index
    %648 = vector.load %arg3[%c1_492, %c4_493, %c0_494, %c0_495] : memref<2x8x14x14xf32, #tpu.memory_space<vmem>>, vector<1x1x1x14xf32>
    %649 = vector.shape_cast %648 : vector<1x1x1x14xf32> to vector<14xf32>
    %650 = vector.shape_cast %647 : vector<14xf32> to vector<1x1x1x14xf32>
    tpu.vector_store %arg3[%c1_492, %c4_493, %c0_494, %c0_495], %650 {strides = array<i32>} : memref<2x8x14x14xf32, #tpu.memory_space<vmem>>, vector<1x1x1x14xf32>,
    %651 = vector.extract_strided_slice %625 {offsets = [5, 0], sizes = [1, 14], strides = [1, 1]} : vector<8x14xf32> to vector<1x14xf32>
    %652 = vector.shape_cast %651 : vector<1x14xf32> to vector<14xf32>
    %c1_496 = arith.constant 1 : index
    %c5_497 = arith.constant 5 : index
    %c0_498 = arith.constant 0 : index
    %c0_499 = arith.constant 0 : index
    %653 = vector.load %arg3[%c1_496, %c5_497, %c0_498, %c0_499] : memref<2x8x14x14xf32, #tpu.memory_space<vmem>>, vector<1x1x1x14xf32>
    %654 = vector.shape_cast %653 : vector<1x1x1x14xf32> to vector<14xf32>
    %655 = vector.shape_cast %652 : vector<14xf32> to vector<1x1x1x14xf32>
    tpu.vector_store %arg3[%c1_496, %c5_497, %c0_498, %c0_499], %655 {strides = array<i32>} : memref<2x8x14x14xf32, #tpu.memory_space<vmem>>, vector<1x1x1x14xf32>,
    %656 = vector.extract_strided_slice %625 {offsets = [6, 0], sizes = [1, 14], strides = [1, 1]} : vector<8x14xf32> to vector<1x14xf32>
    %657 = vector.shape_cast %656 : vector<1x14xf32> to vector<14xf32>
    %c1_500 = arith.constant 1 : index
    %c6_501 = arith.constant 6 : index
    %c0_502 = arith.constant 0 : index
    %c0_503 = arith.constant 0 : index
    %658 = vector.load %arg3[%c1_500, %c6_501, %c0_502, %c0_503] : memref<2x8x14x14xf32, #tpu.memory_space<vmem>>, vector<1x1x1x14xf32>
    %659 = vector.shape_cast %658 : vector<1x1x1x14xf32> to vector<14xf32>
    %660 = vector.shape_cast %657 : vector<14xf32> to vector<1x1x1x14xf32>
    tpu.vector_store %arg3[%c1_500, %c6_501, %c0_502, %c0_503], %660 {strides = array<i32>} : memref<2x8x14x14xf32, #tpu.memory_space<vmem>>, vector<1x1x1x14xf32>,
    %661 = vector.extract_strided_slice %625 {offsets = [7, 0], sizes = [1, 14], strides = [1, 1]} : vector<8x14xf32> to vector<1x14xf32>
    %662 = vector.shape_cast %661 : vector<1x14xf32> to vector<14xf32>
    %c1_504 = arith.constant 1 : index
    %c7_505 = arith.constant 7 : index
    %c0_506 = arith.constant 0 : index
    %c0_507 = arith.constant 0 : index
    %663 = vector.load %arg3[%c1_504, %c7_505, %c0_506, %c0_507] : memref<2x8x14x14xf32, #tpu.memory_space<vmem>>, vector<1x1x1x14xf32>
    %664 = vector.shape_cast %663 : vector<1x1x1x14xf32> to vector<14xf32>
    %665 = vector.shape_cast %662 : vector<14xf32> to vector<1x1x1x14xf32>
    tpu.vector_store %arg3[%c1_504, %c7_505, %c0_506, %c0_507], %665 {strides = array<i32>} : memref<2x8x14x14xf32, #tpu.memory_space<vmem>>, vector<1x1x1x14xf32>,
    %666 = vector.extract_strided_slice %50 {offsets = [0, 238], sizes = [8, 14], strides = [1, 1]} : vector<8x444xf32> to vector<8x14xf32>
    %667 = vector.extract_strided_slice %666 {offsets = [0, 0], sizes = [1, 14], strides = [1, 1]} : vector<8x14xf32> to vector<1x14xf32>
    %668 = vector.shape_cast %667 : vector<1x14xf32> to vector<14xf32>
    %c1_508 = arith.constant 1 : index
    %c0_509 = arith.constant 0 : index
    %c1_510 = arith.constant 1 : index
    %c0_511 = arith.constant 0 : index
    %669 = vector.load %arg3[%c1_508, %c0_509, %c1_510, %c0_511] : memref<2x8x14x14xf32, #tpu.memory_space<vmem>>, vector<1x1x1x14xf32>
    %670 = vector.shape_cast %669 : vector<1x1x1x14xf32> to vector<14xf32>
    %671 = vector.shape_cast %668 : vector<14xf32> to vector<1x1x1x14xf32>
    tpu.vector_store %arg3[%c1_508, %c0_509, %c1_510, %c0_511], %671 {strides = array<i32>} : memref<2x8x14x14xf32, #tpu.memory_space<vmem>>, vector<1x1x1x14xf32>,
    %672 = vector.extract_strided_slice %666 {offsets = [1, 0], sizes = [1, 14], strides = [1, 1]} : vector<8x14xf32> to vector<1x14xf32>
    %673 = vector.shape_cast %672 : vector<1x14xf32> to vector<14xf32>
    %c1_512 = arith.constant 1 : index
    %c1_513 = arith.constant 1 : index
    %c1_514 = arith.constant 1 : index
    %c0_515 = arith.constant 0 : index
    %674 = vector.load %arg3[%c1_512, %c1_513, %c1_514, %c0_515] : memref<2x8x14x14xf32, #tpu.memory_space<vmem>>, vector<1x1x1x14xf32>
    %675 = vector.shape_cast %674 : vector<1x1x1x14xf32> to vector<14xf32>
    %676 = vector.shape_cast %673 : vector<14xf32> to vector<1x1x1x14xf32>
    tpu.vector_store %arg3[%c1_512, %c1_513, %c1_514, %c0_515], %676 {strides = array<i32>} : memref<2x8x14x14xf32, #tpu.memory_space<vmem>>, vector<1x1x1x14xf32>,
    %677 = vector.extract_strided_slice %666 {offsets = [2, 0], sizes = [1, 14], strides = [1, 1]} : vector<8x14xf32> to vector<1x14xf32>
    %678 = vector.shape_cast %677 : vector<1x14xf32> to vector<14xf32>
    %c1_516 = arith.constant 1 : index
    %c2_517 = arith.constant 2 : index
    %c1_518 = arith.constant 1 : index
    %c0_519 = arith.constant 0 : index
    %679 = vector.load %arg3[%c1_516, %c2_517, %c1_518, %c0_519] : memref<2x8x14x14xf32, #tpu.memory_space<vmem>>, vector<1x1x1x14xf32>
    %680 = vector.shape_cast %679 : vector<1x1x1x14xf32> to vector<14xf32>
    %681 = vector.shape_cast %678 : vector<14xf32> to vector<1x1x1x14xf32>
    tpu.vector_store %arg3[%c1_516, %c2_517, %c1_518, %c0_519], %681 {strides = array<i32>} : memref<2x8x14x14xf32, #tpu.memory_space<vmem>>, vector<1x1x1x14xf32>,
    %682 = vector.extract_strided_slice %666 {offsets = [3, 0], sizes = [1, 14], strides = [1, 1]} : vector<8x14xf32> to vector<1x14xf32>
    %683 = vector.shape_cast %682 : vector<1x14xf32> to vector<14xf32>
    %c1_520 = arith.constant 1 : index
    %c3_521 = arith.constant 3 : index
    %c1_522 = arith.constant 1 : index
    %c0_523 = arith.constant 0 : index
    %684 = vector.load %arg3[%c1_520, %c3_521, %c1_522, %c0_523] : memref<2x8x14x14xf32, #tpu.memory_space<vmem>>, vector<1x1x1x14xf32>
    %685 = vector.shape_cast %684 : vector<1x1x1x14xf32> to vector<14xf32>
    %686 = vector.shape_cast %683 : vector<14xf32> to vector<1x1x1x14xf32>
    tpu.vector_store %arg3[%c1_520, %c3_521, %c1_522, %c0_523], %686 {strides = array<i32>} : memref<2x8x14x14xf32, #tpu.memory_space<vmem>>, vector<1x1x1x14xf32>,
    %687 = vector.extract_strided_slice %666 {offsets = [4, 0], sizes = [1, 14], strides = [1, 1]} : vector<8x14xf32> to vector<1x14xf32>
    %688 = vector.shape_cast %687 : vector<1x14xf32> to vector<14xf32>
    %c1_524 = arith.constant 1 : index
    %c4_525 = arith.constant 4 : index
    %c1_526 = arith.constant 1 : index
    %c0_527 = arith.constant 0 : index
    %689 = vector.load %arg3[%c1_524, %c4_525, %c1_526, %c0_527] : memref<2x8x14x14xf32, #tpu.memory_space<vmem>>, vector<1x1x1x14xf32>
    %690 = vector.shape_cast %689 : vector<1x1x1x14xf32> to vector<14xf32>
    %691 = vector.shape_cast %688 : vector<14xf32> to vector<1x1x1x14xf32>
    tpu.vector_store %arg3[%c1_524, %c4_525, %c1_526, %c0_527], %691 {strides = array<i32>} : memref<2x8x14x14xf32, #tpu.memory_space<vmem>>, vector<1x1x1x14xf32>,
    %692 = vector.extract_strided_slice %666 {offsets = [5, 0], sizes = [1, 14], strides = [1, 1]} : vector<8x14xf32> to vector<1x14xf32>
    %693 = vector.shape_cast %692 : vector<1x14xf32> to vector<14xf32>
    %c1_528 = arith.constant 1 : index
    %c5_529 = arith.constant 5 : index
    %c1_530 = arith.constant 1 : index
    %c0_531 = arith.constant 0 : index
    %694 = vector.load %arg3[%c1_528, %c5_529, %c1_530, %c0_531] : memref<2x8x14x14xf32, #tpu.memory_space<vmem>>, vector<1x1x1x14xf32>
    %695 = vector.shape_cast %694 : vector<1x1x1x14xf32> to vector<14xf32>
    %696 = vector.shape_cast %693 : vector<14xf32> to vector<1x1x1x14xf32>
    tpu.vector_store %arg3[%c1_528, %c5_529, %c1_530, %c0_531], %696 {strides = array<i32>} : memref<2x8x14x14xf32, #tpu.memory_space<vmem>>, vector<1x1x1x14xf32>,
    %697 = vector.extract_strided_slice %666 {offsets = [6, 0], sizes = [1, 14], strides = [1, 1]} : vector<8x14xf32> to vector<1x14xf32>
    %698 = vector.shape_cast %697 : vector<1x14xf32> to vector<14xf32>
    %c1_532 = arith.constant 1 : index
    %c6_533 = arith.constant 6 : index
    %c1_534 = arith.constant 1 : index
    %c0_535 = arith.constant 0 : index
    %699 = vector.load %arg3[%c1_532, %c6_533, %c1_534, %c0_535] : memref<2x8x14x14xf32, #tpu.memory_space<vmem>>, vector<1x1x1x14xf32>
    %700 = vector.shape_cast %699 : vector<1x1x1x14xf32> to vector<14xf32>
    %701 = vector.shape_cast %698 : vector<14xf32> to vector<1x1x1x14xf32>
    tpu.vector_store %arg3[%c1_532, %c6_533, %c1_534, %c0_535], %701 {strides = array<i32>} : memref<2x8x14x14xf32, #tpu.memory_space<vmem>>, vector<1x1x1x14xf32>,
    %702 = vector.extract_strided_slice %666 {offsets = [7, 0], sizes = [1, 14], strides = [1, 1]} : vector<8x14xf32> to vector<1x14xf32>
    %703 = vector.shape_cast %702 : vector<1x14xf32> to vector<14xf32>
    %c1_536 = arith.constant 1 : index
    %c7_537 = arith.constant 7 : index
    %c1_538 = arith.constant 1 : index
    %c0_539 = arith.constant 0 : index
    %704 = vector.load %arg3[%c1_536, %c7_537, %c1_538, %c0_539] : memref<2x8x14x14xf32, #tpu.memory_space<vmem>>, vector<1x1x1x14xf32>
    %705 = vector.shape_cast %704 : vector<1x1x1x14xf32> to vector<14xf32>
    %706 = vector.shape_cast %703 : vector<14xf32> to vector<1x1x1x14xf32>
    tpu.vector_store %arg3[%c1_536, %c7_537, %c1_538, %c0_539], %706 {strides = array<i32>} : memref<2x8x14x14xf32, #tpu.memory_space<vmem>>, vector<1x1x1x14xf32>,
    %707 = vector.extract_strided_slice %50 {offsets = [0, 254], sizes = [8, 14], strides = [1, 1]} : vector<8x444xf32> to vector<8x14xf32>
    %708 = vector.extract_strided_slice %707 {offsets = [0, 0], sizes = [1, 14], strides = [1, 1]} : vector<8x14xf32> to vector<1x14xf32>
    %709 = vector.shape_cast %708 : vector<1x14xf32> to vector<14xf32>
    %c1_540 = arith.constant 1 : index
    %c0_541 = arith.constant 0 : index
    %c2_542 = arith.constant 2 : index
    %c0_543 = arith.constant 0 : index
    %710 = vector.load %arg3[%c1_540, %c0_541, %c2_542, %c0_543] : memref<2x8x14x14xf32, #tpu.memory_space<vmem>>, vector<1x1x1x14xf32>
    %711 = vector.shape_cast %710 : vector<1x1x1x14xf32> to vector<14xf32>
    %712 = vector.shape_cast %709 : vector<14xf32> to vector<1x1x1x14xf32>
    tpu.vector_store %arg3[%c1_540, %c0_541, %c2_542, %c0_543], %712 {strides = array<i32>} : memref<2x8x14x14xf32, #tpu.memory_space<vmem>>, vector<1x1x1x14xf32>,
    %713 = vector.extract_strided_slice %707 {offsets = [1, 0], sizes = [1, 14], strides = [1, 1]} : vector<8x14xf32> to vector<1x14xf32>
    %714 = vector.shape_cast %713 : vector<1x14xf32> to vector<14xf32>
    %c1_544 = arith.constant 1 : index
    %c1_545 = arith.constant 1 : index
    %c2_546 = arith.constant 2 : index
    %c0_547 = arith.constant 0 : index
    %715 = vector.load %arg3[%c1_544, %c1_545, %c2_546, %c0_547] : memref<2x8x14x14xf32, #tpu.memory_space<vmem>>, vector<1x1x1x14xf32>
    %716 = vector.shape_cast %715 : vector<1x1x1x14xf32> to vector<14xf32>
    %717 = vector.shape_cast %714 : vector<14xf32> to vector<1x1x1x14xf32>
    tpu.vector_store %arg3[%c1_544, %c1_545, %c2_546, %c0_547], %717 {strides = array<i32>} : memref<2x8x14x14xf32, #tpu.memory_space<vmem>>, vector<1x1x1x14xf32>,
    %718 = vector.extract_strided_slice %707 {offsets = [2, 0], sizes = [1, 14], strides = [1, 1]} : vector<8x14xf32> to vector<1x14xf32>
    %719 = vector.shape_cast %718 : vector<1x14xf32> to vector<14xf32>
    %c1_548 = arith.constant 1 : index
    %c2_549 = arith.constant 2 : index
    %c2_550 = arith.constant 2 : index
    %c0_551 = arith.constant 0 : index
    %720 = vector.load %arg3[%c1_548, %c2_549, %c2_550, %c0_551] : memref<2x8x14x14xf32, #tpu.memory_space<vmem>>, vector<1x1x1x14xf32>
    %721 = vector.shape_cast %720 : vector<1x1x1x14xf32> to vector<14xf32>
    %722 = vector.shape_cast %719 : vector<14xf32> to vector<1x1x1x14xf32>
    tpu.vector_store %arg3[%c1_548, %c2_549, %c2_550, %c0_551], %722 {strides = array<i32>} : memref<2x8x14x14xf32, #tpu.memory_space<vmem>>, vector<1x1x1x14xf32>,
    %723 = vector.extract_strided_slice %707 {offsets = [3, 0], sizes = [1, 14], strides = [1, 1]} : vector<8x14xf32> to vector<1x14xf32>
    %724 = vector.shape_cast %723 : vector<1x14xf32> to vector<14xf32>
    %c1_552 = arith.constant 1 : index
    %c3_553 = arith.constant 3 : index
    %c2_554 = arith.constant 2 : index
    %c0_555 = arith.constant 0 : index
    %725 = vector.load %arg3[%c1_552, %c3_553, %c2_554, %c0_555] : memref<2x8x14x14xf32, #tpu.memory_space<vmem>>, vector<1x1x1x14xf32>
    %726 = vector.shape_cast %725 : vector<1x1x1x14xf32> to vector<14xf32>
    %727 = vector.shape_cast %724 : vector<14xf32> to vector<1x1x1x14xf32>
    tpu.vector_store %arg3[%c1_552, %c3_553, %c2_554, %c0_555], %727 {strides = array<i32>} : memref<2x8x14x14xf32, #tpu.memory_space<vmem>>, vector<1x1x1x14xf32>,
    %728 = vector.extract_strided_slice %707 {offsets = [4, 0], sizes = [1, 14], strides = [1, 1]} : vector<8x14xf32> to vector<1x14xf32>
    %729 = vector.shape_cast %728 : vector<1x14xf32> to vector<14xf32>
    %c1_556 = arith.constant 1 : index
    %c4_557 = arith.constant 4 : index
    %c2_558 = arith.constant 2 : index
    %c0_559 = arith.constant 0 : index
    %730 = vector.load %arg3[%c1_556, %c4_557, %c2_558, %c0_559] : memref<2x8x14x14xf32, #tpu.memory_space<vmem>>, vector<1x1x1x14xf32>
    %731 = vector.shape_cast %730 : vector<1x1x1x14xf32> to vector<14xf32>
    %732 = vector.shape_cast %729 : vector<14xf32> to vector<1x1x1x14xf32>
    tpu.vector_store %arg3[%c1_556, %c4_557, %c2_558, %c0_559], %732 {strides = array<i32>} : memref<2x8x14x14xf32, #tpu.memory_space<vmem>>, vector<1x1x1x14xf32>,
    %733 = vector.extract_strided_slice %707 {offsets = [5, 0], sizes = [1, 14], strides = [1, 1]} : vector<8x14xf32> to vector<1x14xf32>
    %734 = vector.shape_cast %733 : vector<1x14xf32> to vector<14xf32>
    %c1_560 = arith.constant 1 : index
    %c5_561 = arith.constant 5 : index
    %c2_562 = arith.constant 2 : index
    %c0_563 = arith.constant 0 : index
    %735 = vector.load %arg3[%c1_560, %c5_561, %c2_562, %c0_563] : memref<2x8x14x14xf32, #tpu.memory_space<vmem>>, vector<1x1x1x14xf32>
    %736 = vector.shape_cast %735 : vector<1x1x1x14xf32> to vector<14xf32>
    %737 = vector.shape_cast %734 : vector<14xf32> to vector<1x1x1x14xf32>
    tpu.vector_store %arg3[%c1_560, %c5_561, %c2_562, %c0_563], %737 {strides = array<i32>} : memref<2x8x14x14xf32, #tpu.memory_space<vmem>>, vector<1x1x1x14xf32>,
    %738 = vector.extract_strided_slice %707 {offsets = [6, 0], sizes = [1, 14], strides = [1, 1]} : vector<8x14xf32> to vector<1x14xf32>
    %739 = vector.shape_cast %738 : vector<1x14xf32> to vector<14xf32>
    %c1_564 = arith.constant 1 : index
    %c6_565 = arith.constant 6 : index
    %c2_566 = arith.constant 2 : index
    %c0_567 = arith.constant 0 : index
    %740 = vector.load %arg3[%c1_564, %c6_565, %c2_566, %c0_567] : memref<2x8x14x14xf32, #tpu.memory_space<vmem>>, vector<1x1x1x14xf32>
    %741 = vector.shape_cast %740 : vector<1x1x1x14xf32> to vector<14xf32>
    %742 = vector.shape_cast %739 : vector<14xf32> to vector<1x1x1x14xf32>
    tpu.vector_store %arg3[%c1_564, %c6_565, %c2_566, %c0_567], %742 {strides = array<i32>} : memref<2x8x14x14xf32, #tpu.memory_space<vmem>>, vector<1x1x1x14xf32>,
    %743 = vector.extract_strided_slice %707 {offsets = [7, 0], sizes = [1, 14], strides = [1, 1]} : vector<8x14xf32> to vector<1x14xf32>
    %744 = vector.shape_cast %743 : vector<1x14xf32> to vector<14xf32>
    %c1_568 = arith.constant 1 : index
    %c7_569 = arith.constant 7 : index
    %c2_570 = arith.constant 2 : index
    %c0_571 = arith.constant 0 : index
    %745 = vector.load %arg3[%c1_568, %c7_569, %c2_570, %c0_571] : memref<2x8x14x14xf32, #tpu.memory_space<vmem>>, vector<1x1x1x14xf32>
    %746 = vector.shape_cast %745 : vector<1x1x1x14xf32> to vector<14xf32>
    %747 = vector.shape_cast %744 : vector<14xf32> to vector<1x1x1x14xf32>
    tpu.vector_store %arg3[%c1_568, %c7_569, %c2_570, %c0_571], %747 {strides = array<i32>} : memref<2x8x14x14xf32, #tpu.memory_space<vmem>>, vector<1x1x1x14xf32>,
    %748 = vector.extract_strided_slice %50 {offsets = [0, 270], sizes = [8, 14], strides = [1, 1]} : vector<8x444xf32> to vector<8x14xf32>
    %749 = vector.extract_strided_slice %748 {offsets = [0, 0], sizes = [1, 14], strides = [1, 1]} : vector<8x14xf32> to vector<1x14xf32>
    %750 = vector.shape_cast %749 : vector<1x14xf32> to vector<14xf32>
    %c1_572 = arith.constant 1 : index
    %c0_573 = arith.constant 0 : index
    %c3_574 = arith.constant 3 : index
    %c0_575 = arith.constant 0 : index
    %751 = vector.load %arg3[%c1_572, %c0_573, %c3_574, %c0_575] : memref<2x8x14x14xf32, #tpu.memory_space<vmem>>, vector<1x1x1x14xf32>
    %752 = vector.shape_cast %751 : vector<1x1x1x14xf32> to vector<14xf32>
    %753 = vector.shape_cast %750 : vector<14xf32> to vector<1x1x1x14xf32>
    tpu.vector_store %arg3[%c1_572, %c0_573, %c3_574, %c0_575], %753 {strides = array<i32>} : memref<2x8x14x14xf32, #tpu.memory_space<vmem>>, vector<1x1x1x14xf32>,
    %754 = vector.extract_strided_slice %748 {offsets = [1, 0], sizes = [1, 14], strides = [1, 1]} : vector<8x14xf32> to vector<1x14xf32>
    %755 = vector.shape_cast %754 : vector<1x14xf32> to vector<14xf32>
    %c1_576 = arith.constant 1 : index
    %c1_577 = arith.constant 1 : index
    %c3_578 = arith.constant 3 : index
    %c0_579 = arith.constant 0 : index
    %756 = vector.load %arg3[%c1_576, %c1_577, %c3_578, %c0_579] : memref<2x8x14x14xf32, #tpu.memory_space<vmem>>, vector<1x1x1x14xf32>
    %757 = vector.shape_cast %756 : vector<1x1x1x14xf32> to vector<14xf32>
    %758 = vector.shape_cast %755 : vector<14xf32> to vector<1x1x1x14xf32>
    tpu.vector_store %arg3[%c1_576, %c1_577, %c3_578, %c0_579], %758 {strides = array<i32>} : memref<2x8x14x14xf32, #tpu.memory_space<vmem>>, vector<1x1x1x14xf32>,
    %759 = vector.extract_strided_slice %748 {offsets = [2, 0], sizes = [1, 14], strides = [1, 1]} : vector<8x14xf32> to vector<1x14xf32>
    %760 = vector.shape_cast %759 : vector<1x14xf32> to vector<14xf32>
    %c1_580 = arith.constant 1 : index
    %c2_581 = arith.constant 2 : index
    %c3_582 = arith.constant 3 : index
    %c0_583 = arith.constant 0 : index
    %761 = vector.load %arg3[%c1_580, %c2_581, %c3_582, %c0_583] : memref<2x8x14x14xf32, #tpu.memory_space<vmem>>, vector<1x1x1x14xf32>
    %762 = vector.shape_cast %761 : vector<1x1x1x14xf32> to vector<14xf32>
    %763 = vector.shape_cast %760 : vector<14xf32> to vector<1x1x1x14xf32>
    tpu.vector_store %arg3[%c1_580, %c2_581, %c3_582, %c0_583], %763 {strides = array<i32>} : memref<2x8x14x14xf32, #tpu.memory_space<vmem>>, vector<1x1x1x14xf32>,
    %764 = vector.extract_strided_slice %748 {offsets = [3, 0], sizes = [1, 14], strides = [1, 1]} : vector<8x14xf32> to vector<1x14xf32>
    %765 = vector.shape_cast %764 : vector<1x14xf32> to vector<14xf32>
    %c1_584 = arith.constant 1 : index
    %c3_585 = arith.constant 3 : index
    %c3_586 = arith.constant 3 : index
    %c0_587 = arith.constant 0 : index
    %766 = vector.load %arg3[%c1_584, %c3_585, %c3_586, %c0_587] : memref<2x8x14x14xf32, #tpu.memory_space<vmem>>, vector<1x1x1x14xf32>
    %767 = vector.shape_cast %766 : vector<1x1x1x14xf32> to vector<14xf32>
    %768 = vector.shape_cast %765 : vector<14xf32> to vector<1x1x1x14xf32>
    tpu.vector_store %arg3[%c1_584, %c3_585, %c3_586, %c0_587], %768 {strides = array<i32>} : memref<2x8x14x14xf32, #tpu.memory_space<vmem>>, vector<1x1x1x14xf32>,
    %769 = vector.extract_strided_slice %748 {offsets = [4, 0], sizes = [1, 14], strides = [1, 1]} : vector<8x14xf32> to vector<1x14xf32>
    %770 = vector.shape_cast %769 : vector<1x14xf32> to vector<14xf32>
    %c1_588 = arith.constant 1 : index
    %c4_589 = arith.constant 4 : index
    %c3_590 = arith.constant 3 : index
    %c0_591 = arith.constant 0 : index
    %771 = vector.load %arg3[%c1_588, %c4_589, %c3_590, %c0_591] : memref<2x8x14x14xf32, #tpu.memory_space<vmem>>, vector<1x1x1x14xf32>
    %772 = vector.shape_cast %771 : vector<1x1x1x14xf32> to vector<14xf32>
    %773 = vector.shape_cast %770 : vector<14xf32> to vector<1x1x1x14xf32>
    tpu.vector_store %arg3[%c1_588, %c4_589, %c3_590, %c0_591], %773 {strides = array<i32>} : memref<2x8x14x14xf32, #tpu.memory_space<vmem>>, vector<1x1x1x14xf32>,
    %774 = vector.extract_strided_slice %748 {offsets = [5, 0], sizes = [1, 14], strides = [1, 1]} : vector<8x14xf32> to vector<1x14xf32>
    %775 = vector.shape_cast %774 : vector<1x14xf32> to vector<14xf32>
    %c1_592 = arith.constant 1 : index
    %c5_593 = arith.constant 5 : index
    %c3_594 = arith.constant 3 : index
    %c0_595 = arith.constant 0 : index
    %776 = vector.load %arg3[%c1_592, %c5_593, %c3_594, %c0_595] : memref<2x8x14x14xf32, #tpu.memory_space<vmem>>, vector<1x1x1x14xf32>
    %777 = vector.shape_cast %776 : vector<1x1x1x14xf32> to vector<14xf32>
    %778 = vector.shape_cast %775 : vector<14xf32> to vector<1x1x1x14xf32>
    tpu.vector_store %arg3[%c1_592, %c5_593, %c3_594, %c0_595], %778 {strides = array<i32>} : memref<2x8x14x14xf32, #tpu.memory_space<vmem>>, vector<1x1x1x14xf32>,
    %779 = vector.extract_strided_slice %748 {offsets = [6, 0], sizes = [1, 14], strides = [1, 1]} : vector<8x14xf32> to vector<1x14xf32>
    %780 = vector.shape_cast %779 : vector<1x14xf32> to vector<14xf32>
    %c1_596 = arith.constant 1 : index
    %c6_597 = arith.constant 6 : index
    %c3_598 = arith.constant 3 : index
    %c0_599 = arith.constant 0 : index
    %781 = vector.load %arg3[%c1_596, %c6_597, %c3_598, %c0_599] : memref<2x8x14x14xf32, #tpu.memory_space<vmem>>, vector<1x1x1x14xf32>
    %782 = vector.shape_cast %781 : vector<1x1x1x14xf32> to vector<14xf32>
    %783 = vector.shape_cast %780 : vector<14xf32> to vector<1x1x1x14xf32>
    tpu.vector_store %arg3[%c1_596, %c6_597, %c3_598, %c0_599], %783 {strides = array<i32>} : memref<2x8x14x14xf32, #tpu.memory_space<vmem>>, vector<1x1x1x14xf32>,
    %784 = vector.extract_strided_slice %748 {offsets = [7, 0], sizes = [1, 14], strides = [1, 1]} : vector<8x14xf32> to vector<1x14xf32>
    %785 = vector.shape_cast %784 : vector<1x14xf32> to vector<14xf32>
    %c1_600 = arith.constant 1 : index
    %c7_601 = arith.constant 7 : index
    %c3_602 = arith.constant 3 : index
    %c0_603 = arith.constant 0 : index
    %786 = vector.load %arg3[%c1_600, %c7_601, %c3_602, %c0_603] : memref<2x8x14x14xf32, #tpu.memory_space<vmem>>, vector<1x1x1x14xf32>
    %787 = vector.shape_cast %786 : vector<1x1x1x14xf32> to vector<14xf32>
    %788 = vector.shape_cast %785 : vector<14xf32> to vector<1x1x1x14xf32>
    tpu.vector_store %arg3[%c1_600, %c7_601, %c3_602, %c0_603], %788 {strides = array<i32>} : memref<2x8x14x14xf32, #tpu.memory_space<vmem>>, vector<1x1x1x14xf32>,
    %789 = vector.extract_strided_slice %50 {offsets = [0, 286], sizes = [8, 14], strides = [1, 1]} : vector<8x444xf32> to vector<8x14xf32>
    %790 = vector.extract_strided_slice %789 {offsets = [0, 0], sizes = [1, 14], strides = [1, 1]} : vector<8x14xf32> to vector<1x14xf32>
    %791 = vector.shape_cast %790 : vector<1x14xf32> to vector<14xf32>
    %c1_604 = arith.constant 1 : index
    %c0_605 = arith.constant 0 : index
    %c4_606 = arith.constant 4 : index
    %c0_607 = arith.constant 0 : index
    %792 = vector.load %arg3[%c1_604, %c0_605, %c4_606, %c0_607] : memref<2x8x14x14xf32, #tpu.memory_space<vmem>>, vector<1x1x1x14xf32>
    %793 = vector.shape_cast %792 : vector<1x1x1x14xf32> to vector<14xf32>
    %794 = vector.shape_cast %791 : vector<14xf32> to vector<1x1x1x14xf32>
    tpu.vector_store %arg3[%c1_604, %c0_605, %c4_606, %c0_607], %794 {strides = array<i32>} : memref<2x8x14x14xf32, #tpu.memory_space<vmem>>, vector<1x1x1x14xf32>,
    %795 = vector.extract_strided_slice %789 {offsets = [1, 0], sizes = [1, 14], strides = [1, 1]} : vector<8x14xf32> to vector<1x14xf32>
    %796 = vector.shape_cast %795 : vector<1x14xf32> to vector<14xf32>
    %c1_608 = arith.constant 1 : index
    %c1_609 = arith.constant 1 : index
    %c4_610 = arith.constant 4 : index
    %c0_611 = arith.constant 0 : index
    %797 = vector.load %arg3[%c1_608, %c1_609, %c4_610, %c0_611] : memref<2x8x14x14xf32, #tpu.memory_space<vmem>>, vector<1x1x1x14xf32>
    %798 = vector.shape_cast %797 : vector<1x1x1x14xf32> to vector<14xf32>
    %799 = vector.shape_cast %796 : vector<14xf32> to vector<1x1x1x14xf32>
    tpu.vector_store %arg3[%c1_608, %c1_609, %c4_610, %c0_611], %799 {strides = array<i32>} : memref<2x8x14x14xf32, #tpu.memory_space<vmem>>, vector<1x1x1x14xf32>,
    %800 = vector.extract_strided_slice %789 {offsets = [2, 0], sizes = [1, 14], strides = [1, 1]} : vector<8x14xf32> to vector<1x14xf32>
    %801 = vector.shape_cast %800 : vector<1x14xf32> to vector<14xf32>
    %c1_612 = arith.constant 1 : index
    %c2_613 = arith.constant 2 : index
    %c4_614 = arith.constant 4 : index
    %c0_615 = arith.constant 0 : index
    %802 = vector.load %arg3[%c1_612, %c2_613, %c4_614, %c0_615] : memref<2x8x14x14xf32, #tpu.memory_space<vmem>>, vector<1x1x1x14xf32>
    %803 = vector.shape_cast %802 : vector<1x1x1x14xf32> to vector<14xf32>
    %804 = vector.shape_cast %801 : vector<14xf32> to vector<1x1x1x14xf32>
    tpu.vector_store %arg3[%c1_612, %c2_613, %c4_614, %c0_615], %804 {strides = array<i32>} : memref<2x8x14x14xf32, #tpu.memory_space<vmem>>, vector<1x1x1x14xf32>,
    %805 = vector.extract_strided_slice %789 {offsets = [3, 0], sizes = [1, 14], strides = [1, 1]} : vector<8x14xf32> to vector<1x14xf32>
    %806 = vector.shape_cast %805 : vector<1x14xf32> to vector<14xf32>
    %c1_616 = arith.constant 1 : index
    %c3_617 = arith.constant 3 : index
    %c4_618 = arith.constant 4 : index
    %c0_619 = arith.constant 0 : index
    %807 = vector.load %arg3[%c1_616, %c3_617, %c4_618, %c0_619] : memref<2x8x14x14xf32, #tpu.memory_space<vmem>>, vector<1x1x1x14xf32>
    %808 = vector.shape_cast %807 : vector<1x1x1x14xf32> to vector<14xf32>
    %809 = vector.shape_cast %806 : vector<14xf32> to vector<1x1x1x14xf32>
    tpu.vector_store %arg3[%c1_616, %c3_617, %c4_618, %c0_619], %809 {strides = array<i32>} : memref<2x8x14x14xf32, #tpu.memory_space<vmem>>, vector<1x1x1x14xf32>,
    %810 = vector.extract_strided_slice %789 {offsets = [4, 0], sizes = [1, 14], strides = [1, 1]} : vector<8x14xf32> to vector<1x14xf32>
    %811 = vector.shape_cast %810 : vector<1x14xf32> to vector<14xf32>
    %c1_620 = arith.constant 1 : index
    %c4_621 = arith.constant 4 : index
    %c4_622 = arith.constant 4 : index
    %c0_623 = arith.constant 0 : index
    %812 = vector.load %arg3[%c1_620, %c4_621, %c4_622, %c0_623] : memref<2x8x14x14xf32, #tpu.memory_space<vmem>>, vector<1x1x1x14xf32>
    %813 = vector.shape_cast %812 : vector<1x1x1x14xf32> to vector<14xf32>
    %814 = vector.shape_cast %811 : vector<14xf32> to vector<1x1x1x14xf32>
    tpu.vector_store %arg3[%c1_620, %c4_621, %c4_622, %c0_623], %814 {strides = array<i32>} : memref<2x8x14x14xf32, #tpu.memory_space<vmem>>, vector<1x1x1x14xf32>,
    %815 = vector.extract_strided_slice %789 {offsets = [5, 0], sizes = [1, 14], strides = [1, 1]} : vector<8x14xf32> to vector<1x14xf32>
    %816 = vector.shape_cast %815 : vector<1x14xf32> to vector<14xf32>
    %c1_624 = arith.constant 1 : index
    %c5_625 = arith.constant 5 : index
    %c4_626 = arith.constant 4 : index
    %c0_627 = arith.constant 0 : index
    %817 = vector.load %arg3[%c1_624, %c5_625, %c4_626, %c0_627] : memref<2x8x14x14xf32, #tpu.memory_space<vmem>>, vector<1x1x1x14xf32>
    %818 = vector.shape_cast %817 : vector<1x1x1x14xf32> to vector<14xf32>
    %819 = vector.shape_cast %816 : vector<14xf32> to vector<1x1x1x14xf32>
    tpu.vector_store %arg3[%c1_624, %c5_625, %c4_626, %c0_627], %819 {strides = array<i32>} : memref<2x8x14x14xf32, #tpu.memory_space<vmem>>, vector<1x1x1x14xf32>,
    %820 = vector.extract_strided_slice %789 {offsets = [6, 0], sizes = [1, 14], strides = [1, 1]} : vector<8x14xf32> to vector<1x14xf32>
    %821 = vector.shape_cast %820 : vector<1x14xf32> to vector<14xf32>
    %c1_628 = arith.constant 1 : index
    %c6_629 = arith.constant 6 : index
    %c4_630 = arith.constant 4 : index
    %c0_631 = arith.constant 0 : index
    %822 = vector.load %arg3[%c1_628, %c6_629, %c4_630, %c0_631] : memref<2x8x14x14xf32, #tpu.memory_space<vmem>>, vector<1x1x1x14xf32>
    %823 = vector.shape_cast %822 : vector<1x1x1x14xf32> to vector<14xf32>
    %824 = vector.shape_cast %821 : vector<14xf32> to vector<1x1x1x14xf32>
    tpu.vector_store %arg3[%c1_628, %c6_629, %c4_630, %c0_631], %824 {strides = array<i32>} : memref<2x8x14x14xf32, #tpu.memory_space<vmem>>, vector<1x1x1x14xf32>,
    %825 = vector.extract_strided_slice %789 {offsets = [7, 0], sizes = [1, 14], strides = [1, 1]} : vector<8x14xf32> to vector<1x14xf32>
    %826 = vector.shape_cast %825 : vector<1x14xf32> to vector<14xf32>
    %c1_632 = arith.constant 1 : index
    %c7_633 = arith.constant 7 : index
    %c4_634 = arith.constant 4 : index
    %c0_635 = arith.constant 0 : index
    %827 = vector.load %arg3[%c1_632, %c7_633, %c4_634, %c0_635] : memref<2x8x14x14xf32, #tpu.memory_space<vmem>>, vector<1x1x1x14xf32>
    %828 = vector.shape_cast %827 : vector<1x1x1x14xf32> to vector<14xf32>
    %829 = vector.shape_cast %826 : vector<14xf32> to vector<1x1x1x14xf32>
    tpu.vector_store %arg3[%c1_632, %c7_633, %c4_634, %c0_635], %829 {strides = array<i32>} : memref<2x8x14x14xf32, #tpu.memory_space<vmem>>, vector<1x1x1x14xf32>,
    %830 = vector.extract_strided_slice %50 {offsets = [0, 302], sizes = [8, 14], strides = [1, 1]} : vector<8x444xf32> to vector<8x14xf32>
    %831 = vector.extract_strided_slice %830 {offsets = [0, 0], sizes = [1, 14], strides = [1, 1]} : vector<8x14xf32> to vector<1x14xf32>
    %832 = vector.shape_cast %831 : vector<1x14xf32> to vector<14xf32>
    %c1_636 = arith.constant 1 : index
    %c0_637 = arith.constant 0 : index
    %c5_638 = arith.constant 5 : index
    %c0_639 = arith.constant 0 : index
    %833 = vector.load %arg3[%c1_636, %c0_637, %c5_638, %c0_639] : memref<2x8x14x14xf32, #tpu.memory_space<vmem>>, vector<1x1x1x14xf32>
    %834 = vector.shape_cast %833 : vector<1x1x1x14xf32> to vector<14xf32>
    %835 = vector.shape_cast %832 : vector<14xf32> to vector<1x1x1x14xf32>
    tpu.vector_store %arg3[%c1_636, %c0_637, %c5_638, %c0_639], %835 {strides = array<i32>} : memref<2x8x14x14xf32, #tpu.memory_space<vmem>>, vector<1x1x1x14xf32>,
    %836 = vector.extract_strided_slice %830 {offsets = [1, 0], sizes = [1, 14], strides = [1, 1]} : vector<8x14xf32> to vector<1x14xf32>
    %837 = vector.shape_cast %836 : vector<1x14xf32> to vector<14xf32>
    %c1_640 = arith.constant 1 : index
    %c1_641 = arith.constant 1 : index
    %c5_642 = arith.constant 5 : index
    %c0_643 = arith.constant 0 : index
    %838 = vector.load %arg3[%c1_640, %c1_641, %c5_642, %c0_643] : memref<2x8x14x14xf32, #tpu.memory_space<vmem>>, vector<1x1x1x14xf32>
    %839 = vector.shape_cast %838 : vector<1x1x1x14xf32> to vector<14xf32>
    %840 = vector.shape_cast %837 : vector<14xf32> to vector<1x1x1x14xf32>
    tpu.vector_store %arg3[%c1_640, %c1_641, %c5_642, %c0_643], %840 {strides = array<i32>} : memref<2x8x14x14xf32, #tpu.memory_space<vmem>>, vector<1x1x1x14xf32>,
    %841 = vector.extract_strided_slice %830 {offsets = [2, 0], sizes = [1, 14], strides = [1, 1]} : vector<8x14xf32> to vector<1x14xf32>
    %842 = vector.shape_cast %841 : vector<1x14xf32> to vector<14xf32>
    %c1_644 = arith.constant 1 : index
    %c2_645 = arith.constant 2 : index
    %c5_646 = arith.constant 5 : index
    %c0_647 = arith.constant 0 : index
    %843 = vector.load %arg3[%c1_644, %c2_645, %c5_646, %c0_647] : memref<2x8x14x14xf32, #tpu.memory_space<vmem>>, vector<1x1x1x14xf32>
    %844 = vector.shape_cast %843 : vector<1x1x1x14xf32> to vector<14xf32>
    %845 = vector.shape_cast %842 : vector<14xf32> to vector<1x1x1x14xf32>
    tpu.vector_store %arg3[%c1_644, %c2_645, %c5_646, %c0_647], %845 {strides = array<i32>} : memref<2x8x14x14xf32, #tpu.memory_space<vmem>>, vector<1x1x1x14xf32>,
    %846 = vector.extract_strided_slice %830 {offsets = [3, 0], sizes = [1, 14], strides = [1, 1]} : vector<8x14xf32> to vector<1x14xf32>
    %847 = vector.shape_cast %846 : vector<1x14xf32> to vector<14xf32>
    %c1_648 = arith.constant 1 : index
    %c3_649 = arith.constant 3 : index
    %c5_650 = arith.constant 5 : index
    %c0_651 = arith.constant 0 : index
    %848 = vector.load %arg3[%c1_648, %c3_649, %c5_650, %c0_651] : memref<2x8x14x14xf32, #tpu.memory_space<vmem>>, vector<1x1x1x14xf32>
    %849 = vector.shape_cast %848 : vector<1x1x1x14xf32> to vector<14xf32>
    %850 = vector.shape_cast %847 : vector<14xf32> to vector<1x1x1x14xf32>
    tpu.vector_store %arg3[%c1_648, %c3_649, %c5_650, %c0_651], %850 {strides = array<i32>} : memref<2x8x14x14xf32, #tpu.memory_space<vmem>>, vector<1x1x1x14xf32>,
    %851 = vector.extract_strided_slice %830 {offsets = [4, 0], sizes = [1, 14], strides = [1, 1]} : vector<8x14xf32> to vector<1x14xf32>
    %852 = vector.shape_cast %851 : vector<1x14xf32> to vector<14xf32>
    %c1_652 = arith.constant 1 : index
    %c4_653 = arith.constant 4 : index
    %c5_654 = arith.constant 5 : index
    %c0_655 = arith.constant 0 : index
    %853 = vector.load %arg3[%c1_652, %c4_653, %c5_654, %c0_655] : memref<2x8x14x14xf32, #tpu.memory_space<vmem>>, vector<1x1x1x14xf32>
    %854 = vector.shape_cast %853 : vector<1x1x1x14xf32> to vector<14xf32>
    %855 = vector.shape_cast %852 : vector<14xf32> to vector<1x1x1x14xf32>
    tpu.vector_store %arg3[%c1_652, %c4_653, %c5_654, %c0_655], %855 {strides = array<i32>} : memref<2x8x14x14xf32, #tpu.memory_space<vmem>>, vector<1x1x1x14xf32>,
    %856 = vector.extract_strided_slice %830 {offsets = [5, 0], sizes = [1, 14], strides = [1, 1]} : vector<8x14xf32> to vector<1x14xf32>
    %857 = vector.shape_cast %856 : vector<1x14xf32> to vector<14xf32>
    %c1_656 = arith.constant 1 : index
    %c5_657 = arith.constant 5 : index
    %c5_658 = arith.constant 5 : index
    %c0_659 = arith.constant 0 : index
    %858 = vector.load %arg3[%c1_656, %c5_657, %c5_658, %c0_659] : memref<2x8x14x14xf32, #tpu.memory_space<vmem>>, vector<1x1x1x14xf32>
    %859 = vector.shape_cast %858 : vector<1x1x1x14xf32> to vector<14xf32>
    %860 = vector.shape_cast %857 : vector<14xf32> to vector<1x1x1x14xf32>
    tpu.vector_store %arg3[%c1_656, %c5_657, %c5_658, %c0_659], %860 {strides = array<i32>} : memref<2x8x14x14xf32, #tpu.memory_space<vmem>>, vector<1x1x1x14xf32>,
    %861 = vector.extract_strided_slice %830 {offsets = [6, 0], sizes = [1, 14], strides = [1, 1]} : vector<8x14xf32> to vector<1x14xf32>
    %862 = vector.shape_cast %861 : vector<1x14xf32> to vector<14xf32>
    %c1_660 = arith.constant 1 : index
    %c6_661 = arith.constant 6 : index
    %c5_662 = arith.constant 5 : index
    %c0_663 = arith.constant 0 : index
    %863 = vector.load %arg3[%c1_660, %c6_661, %c5_662, %c0_663] : memref<2x8x14x14xf32, #tpu.memory_space<vmem>>, vector<1x1x1x14xf32>
    %864 = vector.shape_cast %863 : vector<1x1x1x14xf32> to vector<14xf32>
    %865 = vector.shape_cast %862 : vector<14xf32> to vector<1x1x1x14xf32>
    tpu.vector_store %arg3[%c1_660, %c6_661, %c5_662, %c0_663], %865 {strides = array<i32>} : memref<2x8x14x14xf32, #tpu.memory_space<vmem>>, vector<1x1x1x14xf32>,
    %866 = vector.extract_strided_slice %830 {offsets = [7, 0], sizes = [1, 14], strides = [1, 1]} : vector<8x14xf32> to vector<1x14xf32>
    %867 = vector.shape_cast %866 : vector<1x14xf32> to vector<14xf32>
    %c1_664 = arith.constant 1 : index
    %c7_665 = arith.constant 7 : index
    %c5_666 = arith.constant 5 : index
    %c0_667 = arith.constant 0 : index
    %868 = vector.load %arg3[%c1_664, %c7_665, %c5_666, %c0_667] : memref<2x8x14x14xf32, #tpu.memory_space<vmem>>, vector<1x1x1x14xf32>
    %869 = vector.shape_cast %868 : vector<1x1x1x14xf32> to vector<14xf32>
    %870 = vector.shape_cast %867 : vector<14xf32> to vector<1x1x1x14xf32>
    tpu.vector_store %arg3[%c1_664, %c7_665, %c5_666, %c0_667], %870 {strides = array<i32>} : memref<2x8x14x14xf32, #tpu.memory_space<vmem>>, vector<1x1x1x14xf32>,
    %871 = vector.extract_strided_slice %50 {offsets = [0, 318], sizes = [8, 14], strides = [1, 1]} : vector<8x444xf32> to vector<8x14xf32>
    %872 = vector.extract_strided_slice %871 {offsets = [0, 0], sizes = [1, 14], strides = [1, 1]} : vector<8x14xf32> to vector<1x14xf32>
    %873 = vector.shape_cast %872 : vector<1x14xf32> to vector<14xf32>
    %c1_668 = arith.constant 1 : index
    %c0_669 = arith.constant 0 : index
    %c6_670 = arith.constant 6 : index
    %c0_671 = arith.constant 0 : index
    %874 = vector.load %arg3[%c1_668, %c0_669, %c6_670, %c0_671] : memref<2x8x14x14xf32, #tpu.memory_space<vmem>>, vector<1x1x1x14xf32>
    %875 = vector.shape_cast %874 : vector<1x1x1x14xf32> to vector<14xf32>
    %876 = vector.shape_cast %873 : vector<14xf32> to vector<1x1x1x14xf32>
    tpu.vector_store %arg3[%c1_668, %c0_669, %c6_670, %c0_671], %876 {strides = array<i32>} : memref<2x8x14x14xf32, #tpu.memory_space<vmem>>, vector<1x1x1x14xf32>,
    %877 = vector.extract_strided_slice %871 {offsets = [1, 0], sizes = [1, 14], strides = [1, 1]} : vector<8x14xf32> to vector<1x14xf32>
    %878 = vector.shape_cast %877 : vector<1x14xf32> to vector<14xf32>
    %c1_672 = arith.constant 1 : index
    %c1_673 = arith.constant 1 : index
    %c6_674 = arith.constant 6 : index
    %c0_675 = arith.constant 0 : index
    %879 = vector.load %arg3[%c1_672, %c1_673, %c6_674, %c0_675] : memref<2x8x14x14xf32, #tpu.memory_space<vmem>>, vector<1x1x1x14xf32>
    %880 = vector.shape_cast %879 : vector<1x1x1x14xf32> to vector<14xf32>
    %881 = vector.shape_cast %878 : vector<14xf32> to vector<1x1x1x14xf32>
    tpu.vector_store %arg3[%c1_672, %c1_673, %c6_674, %c0_675], %881 {strides = array<i32>} : memref<2x8x14x14xf32, #tpu.memory_space<vmem>>, vector<1x1x1x14xf32>,
    %882 = vector.extract_strided_slice %871 {offsets = [2, 0], sizes = [1, 14], strides = [1, 1]} : vector<8x14xf32> to vector<1x14xf32>
    %883 = vector.shape_cast %882 : vector<1x14xf32> to vector<14xf32>
    %c1_676 = arith.constant 1 : index
    %c2_677 = arith.constant 2 : index
    %c6_678 = arith.constant 6 : index
    %c0_679 = arith.constant 0 : index
    %884 = vector.load %arg3[%c1_676, %c2_677, %c6_678, %c0_679] : memref<2x8x14x14xf32, #tpu.memory_space<vmem>>, vector<1x1x1x14xf32>
    %885 = vector.shape_cast %884 : vector<1x1x1x14xf32> to vector<14xf32>
    %886 = vector.shape_cast %883 : vector<14xf32> to vector<1x1x1x14xf32>
    tpu.vector_store %arg3[%c1_676, %c2_677, %c6_678, %c0_679], %886 {strides = array<i32>} : memref<2x8x14x14xf32, #tpu.memory_space<vmem>>, vector<1x1x1x14xf32>,
    %887 = vector.extract_strided_slice %871 {offsets = [3, 0], sizes = [1, 14], strides = [1, 1]} : vector<8x14xf32> to vector<1x14xf32>
    %888 = vector.shape_cast %887 : vector<1x14xf32> to vector<14xf32>
    %c1_680 = arith.constant 1 : index
    %c3_681 = arith.constant 3 : index
    %c6_682 = arith.constant 6 : index
    %c0_683 = arith.constant 0 : index
    %889 = vector.load %arg3[%c1_680, %c3_681, %c6_682, %c0_683] : memref<2x8x14x14xf32, #tpu.memory_space<vmem>>, vector<1x1x1x14xf32>
    %890 = vector.shape_cast %889 : vector<1x1x1x14xf32> to vector<14xf32>
    %891 = vector.shape_cast %888 : vector<14xf32> to vector<1x1x1x14xf32>
    tpu.vector_store %arg3[%c1_680, %c3_681, %c6_682, %c0_683], %891 {strides = array<i32>} : memref<2x8x14x14xf32, #tpu.memory_space<vmem>>, vector<1x1x1x14xf32>,
    %892 = vector.extract_strided_slice %871 {offsets = [4, 0], sizes = [1, 14], strides = [1, 1]} : vector<8x14xf32> to vector<1x14xf32>
    %893 = vector.shape_cast %892 : vector<1x14xf32> to vector<14xf32>
    %c1_684 = arith.constant 1 : index
    %c4_685 = arith.constant 4 : index
    %c6_686 = arith.constant 6 : index
    %c0_687 = arith.constant 0 : index
    %894 = vector.load %arg3[%c1_684, %c4_685, %c6_686, %c0_687] : memref<2x8x14x14xf32, #tpu.memory_space<vmem>>, vector<1x1x1x14xf32>
    %895 = vector.shape_cast %894 : vector<1x1x1x14xf32> to vector<14xf32>
    %896 = vector.shape_cast %893 : vector<14xf32> to vector<1x1x1x14xf32>
    tpu.vector_store %arg3[%c1_684, %c4_685, %c6_686, %c0_687], %896 {strides = array<i32>} : memref<2x8x14x14xf32, #tpu.memory_space<vmem>>, vector<1x1x1x14xf32>,
    %897 = vector.extract_strided_slice %871 {offsets = [5, 0], sizes = [1, 14], strides = [1, 1]} : vector<8x14xf32> to vector<1x14xf32>
    %898 = vector.shape_cast %897 : vector<1x14xf32> to vector<14xf32>
    %c1_688 = arith.constant 1 : index
    %c5_689 = arith.constant 5 : index
    %c6_690 = arith.constant 6 : index
    %c0_691 = arith.constant 0 : index
    %899 = vector.load %arg3[%c1_688, %c5_689, %c6_690, %c0_691] : memref<2x8x14x14xf32, #tpu.memory_space<vmem>>, vector<1x1x1x14xf32>
    %900 = vector.shape_cast %899 : vector<1x1x1x14xf32> to vector<14xf32>
    %901 = vector.shape_cast %898 : vector<14xf32> to vector<1x1x1x14xf32>
    tpu.vector_store %arg3[%c1_688, %c5_689, %c6_690, %c0_691], %901 {strides = array<i32>} : memref<2x8x14x14xf32, #tpu.memory_space<vmem>>, vector<1x1x1x14xf32>,
    %902 = vector.extract_strided_slice %871 {offsets = [6, 0], sizes = [1, 14], strides = [1, 1]} : vector<8x14xf32> to vector<1x14xf32>
    %903 = vector.shape_cast %902 : vector<1x14xf32> to vector<14xf32>
    %c1_692 = arith.constant 1 : index
    %c6_693 = arith.constant 6 : index
    %c6_694 = arith.constant 6 : index
    %c0_695 = arith.constant 0 : index
    %904 = vector.load %arg3[%c1_692, %c6_693, %c6_694, %c0_695] : memref<2x8x14x14xf32, #tpu.memory_space<vmem>>, vector<1x1x1x14xf32>
    %905 = vector.shape_cast %904 : vector<1x1x1x14xf32> to vector<14xf32>
    %906 = vector.shape_cast %903 : vector<14xf32> to vector<1x1x1x14xf32>
    tpu.vector_store %arg3[%c1_692, %c6_693, %c6_694, %c0_695], %906 {strides = array<i32>} : memref<2x8x14x14xf32, #tpu.memory_space<vmem>>, vector<1x1x1x14xf32>,
    %907 = vector.extract_strided_slice %871 {offsets = [7, 0], sizes = [1, 14], strides = [1, 1]} : vector<8x14xf32> to vector<1x14xf32>
    %908 = vector.shape_cast %907 : vector<1x14xf32> to vector<14xf32>
    %c1_696 = arith.constant 1 : index
    %c7_697 = arith.constant 7 : index
    %c6_698 = arith.constant 6 : index
    %c0_699 = arith.constant 0 : index
    %909 = vector.load %arg3[%c1_696, %c7_697, %c6_698, %c0_699] : memref<2x8x14x14xf32, #tpu.memory_space<vmem>>, vector<1x1x1x14xf32>
    %910 = vector.shape_cast %909 : vector<1x1x1x14xf32> to vector<14xf32>
    %911 = vector.shape_cast %908 : vector<14xf32> to vector<1x1x1x14xf32>
    tpu.vector_store %arg3[%c1_696, %c7_697, %c6_698, %c0_699], %911 {strides = array<i32>} : memref<2x8x14x14xf32, #tpu.memory_space<vmem>>, vector<1x1x1x14xf32>,
    %912 = vector.extract_strided_slice %50 {offsets = [0, 334], sizes = [8, 14], strides = [1, 1]} : vector<8x444xf32> to vector<8x14xf32>
    %913 = vector.extract_strided_slice %912 {offsets = [0, 0], sizes = [1, 14], strides = [1, 1]} : vector<8x14xf32> to vector<1x14xf32>
    %914 = vector.shape_cast %913 : vector<1x14xf32> to vector<14xf32>
    %c1_700 = arith.constant 1 : index
    %c0_701 = arith.constant 0 : index
    %c7_702 = arith.constant 7 : index
    %c0_703 = arith.constant 0 : index
    %915 = vector.load %arg3[%c1_700, %c0_701, %c7_702, %c0_703] : memref<2x8x14x14xf32, #tpu.memory_space<vmem>>, vector<1x1x1x14xf32>
    %916 = vector.shape_cast %915 : vector<1x1x1x14xf32> to vector<14xf32>
    %917 = vector.shape_cast %914 : vector<14xf32> to vector<1x1x1x14xf32>
    tpu.vector_store %arg3[%c1_700, %c0_701, %c7_702, %c0_703], %917 {strides = array<i32>} : memref<2x8x14x14xf32, #tpu.memory_space<vmem>>, vector<1x1x1x14xf32>,
    %918 = vector.extract_strided_slice %912 {offsets = [1, 0], sizes = [1, 14], strides = [1, 1]} : vector<8x14xf32> to vector<1x14xf32>
    %919 = vector.shape_cast %918 : vector<1x14xf32> to vector<14xf32>
    %c1_704 = arith.constant 1 : index
    %c1_705 = arith.constant 1 : index
    %c7_706 = arith.constant 7 : index
    %c0_707 = arith.constant 0 : index
    %920 = vector.load %arg3[%c1_704, %c1_705, %c7_706, %c0_707] : memref<2x8x14x14xf32, #tpu.memory_space<vmem>>, vector<1x1x1x14xf32>
    %921 = vector.shape_cast %920 : vector<1x1x1x14xf32> to vector<14xf32>
    %922 = vector.shape_cast %919 : vector<14xf32> to vector<1x1x1x14xf32>
    tpu.vector_store %arg3[%c1_704, %c1_705, %c7_706, %c0_707], %922 {strides = array<i32>} : memref<2x8x14x14xf32, #tpu.memory_space<vmem>>, vector<1x1x1x14xf32>,
    %923 = vector.extract_strided_slice %912 {offsets = [2, 0], sizes = [1, 14], strides = [1, 1]} : vector<8x14xf32> to vector<1x14xf32>
    %924 = vector.shape_cast %923 : vector<1x14xf32> to vector<14xf32>
    %c1_708 = arith.constant 1 : index
    %c2_709 = arith.constant 2 : index
    %c7_710 = arith.constant 7 : index
    %c0_711 = arith.constant 0 : index
    %925 = vector.load %arg3[%c1_708, %c2_709, %c7_710, %c0_711] : memref<2x8x14x14xf32, #tpu.memory_space<vmem>>, vector<1x1x1x14xf32>
    %926 = vector.shape_cast %925 : vector<1x1x1x14xf32> to vector<14xf32>
    %927 = vector.shape_cast %924 : vector<14xf32> to vector<1x1x1x14xf32>
    tpu.vector_store %arg3[%c1_708, %c2_709, %c7_710, %c0_711], %927 {strides = array<i32>} : memref<2x8x14x14xf32, #tpu.memory_space<vmem>>, vector<1x1x1x14xf32>,
    %928 = vector.extract_strided_slice %912 {offsets = [3, 0], sizes = [1, 14], strides = [1, 1]} : vector<8x14xf32> to vector<1x14xf32>
    %929 = vector.shape_cast %928 : vector<1x14xf32> to vector<14xf32>
    %c1_712 = arith.constant 1 : index
    %c3_713 = arith.constant 3 : index
    %c7_714 = arith.constant 7 : index
    %c0_715 = arith.constant 0 : index
    %930 = vector.load %arg3[%c1_712, %c3_713, %c7_714, %c0_715] : memref<2x8x14x14xf32, #tpu.memory_space<vmem>>, vector<1x1x1x14xf32>
    %931 = vector.shape_cast %930 : vector<1x1x1x14xf32> to vector<14xf32>
    %932 = vector.shape_cast %929 : vector<14xf32> to vector<1x1x1x14xf32>
    tpu.vector_store %arg3[%c1_712, %c3_713, %c7_714, %c0_715], %932 {strides = array<i32>} : memref<2x8x14x14xf32, #tpu.memory_space<vmem>>, vector<1x1x1x14xf32>,
    %933 = vector.extract_strided_slice %912 {offsets = [4, 0], sizes = [1, 14], strides = [1, 1]} : vector<8x14xf32> to vector<1x14xf32>
    %934 = vector.shape_cast %933 : vector<1x14xf32> to vector<14xf32>
    %c1_716 = arith.constant 1 : index
    %c4_717 = arith.constant 4 : index
    %c7_718 = arith.constant 7 : index
    %c0_719 = arith.constant 0 : index
    %935 = vector.load %arg3[%c1_716, %c4_717, %c7_718, %c0_719] : memref<2x8x14x14xf32, #tpu.memory_space<vmem>>, vector<1x1x1x14xf32>
    %936 = vector.shape_cast %935 : vector<1x1x1x14xf32> to vector<14xf32>
    %937 = vector.shape_cast %934 : vector<14xf32> to vector<1x1x1x14xf32>
    tpu.vector_store %arg3[%c1_716, %c4_717, %c7_718, %c0_719], %937 {strides = array<i32>} : memref<2x8x14x14xf32, #tpu.memory_space<vmem>>, vector<1x1x1x14xf32>,
    %938 = vector.extract_strided_slice %912 {offsets = [5, 0], sizes = [1, 14], strides = [1, 1]} : vector<8x14xf32> to vector<1x14xf32>
    %939 = vector.shape_cast %938 : vector<1x14xf32> to vector<14xf32>
    %c1_720 = arith.constant 1 : index
    %c5_721 = arith.constant 5 : index
    %c7_722 = arith.constant 7 : index
    %c0_723 = arith.constant 0 : index
    %940 = vector.load %arg3[%c1_720, %c5_721, %c7_722, %c0_723] : memref<2x8x14x14xf32, #tpu.memory_space<vmem>>, vector<1x1x1x14xf32>
    %941 = vector.shape_cast %940 : vector<1x1x1x14xf32> to vector<14xf32>
    %942 = vector.shape_cast %939 : vector<14xf32> to vector<1x1x1x14xf32>
    tpu.vector_store %arg3[%c1_720, %c5_721, %c7_722, %c0_723], %942 {strides = array<i32>} : memref<2x8x14x14xf32, #tpu.memory_space<vmem>>, vector<1x1x1x14xf32>,
    %943 = vector.extract_strided_slice %912 {offsets = [6, 0], sizes = [1, 14], strides = [1, 1]} : vector<8x14xf32> to vector<1x14xf32>
    %944 = vector.shape_cast %943 : vector<1x14xf32> to vector<14xf32>
    %c1_724 = arith.constant 1 : index
    %c6_725 = arith.constant 6 : index
    %c7_726 = arith.constant 7 : index
    %c0_727 = arith.constant 0 : index
    %945 = vector.load %arg3[%c1_724, %c6_725, %c7_726, %c0_727] : memref<2x8x14x14xf32, #tpu.memory_space<vmem>>, vector<1x1x1x14xf32>
    %946 = vector.shape_cast %945 : vector<1x1x1x14xf32> to vector<14xf32>
    %947 = vector.shape_cast %944 : vector<14xf32> to vector<1x1x1x14xf32>
    tpu.vector_store %arg3[%c1_724, %c6_725, %c7_726, %c0_727], %947 {strides = array<i32>} : memref<2x8x14x14xf32, #tpu.memory_space<vmem>>, vector<1x1x1x14xf32>,
    %948 = vector.extract_strided_slice %912 {offsets = [7, 0], sizes = [1, 14], strides = [1, 1]} : vector<8x14xf32> to vector<1x14xf32>
    %949 = vector.shape_cast %948 : vector<1x14xf32> to vector<14xf32>
    %c1_728 = arith.constant 1 : index
    %c7_729 = arith.constant 7 : index
    %c7_730 = arith.constant 7 : index
    %c0_731 = arith.constant 0 : index
    %950 = vector.load %arg3[%c1_728, %c7_729, %c7_730, %c0_731] : memref<2x8x14x14xf32, #tpu.memory_space<vmem>>, vector<1x1x1x14xf32>
    %951 = vector.shape_cast %950 : vector<1x1x1x14xf32> to vector<14xf32>
    %952 = vector.shape_cast %949 : vector<14xf32> to vector<1x1x1x14xf32>
    tpu.vector_store %arg3[%c1_728, %c7_729, %c7_730, %c0_731], %952 {strides = array<i32>} : memref<2x8x14x14xf32, #tpu.memory_space<vmem>>, vector<1x1x1x14xf32>,
    %953 = vector.extract_strided_slice %50 {offsets = [0, 350], sizes = [8, 14], strides = [1, 1]} : vector<8x444xf32> to vector<8x14xf32>
    %954 = vector.extract_strided_slice %953 {offsets = [0, 0], sizes = [1, 14], strides = [1, 1]} : vector<8x14xf32> to vector<1x14xf32>
    %955 = vector.shape_cast %954 : vector<1x14xf32> to vector<14xf32>
    %c1_732 = arith.constant 1 : index
    %c0_733 = arith.constant 0 : index
    %c8_734 = arith.constant 8 : index
    %c0_735 = arith.constant 0 : index
    %956 = vector.load %arg3[%c1_732, %c0_733, %c8_734, %c0_735] : memref<2x8x14x14xf32, #tpu.memory_space<vmem>>, vector<1x1x1x14xf32>
    %957 = vector.shape_cast %956 : vector<1x1x1x14xf32> to vector<14xf32>
    %958 = vector.shape_cast %955 : vector<14xf32> to vector<1x1x1x14xf32>
    tpu.vector_store %arg3[%c1_732, %c0_733, %c8_734, %c0_735], %958 {strides = array<i32>} : memref<2x8x14x14xf32, #tpu.memory_space<vmem>>, vector<1x1x1x14xf32>,
    %959 = vector.extract_strided_slice %953 {offsets = [1, 0], sizes = [1, 14], strides = [1, 1]} : vector<8x14xf32> to vector<1x14xf32>
    %960 = vector.shape_cast %959 : vector<1x14xf32> to vector<14xf32>
    %c1_736 = arith.constant 1 : index
    %c1_737 = arith.constant 1 : index
    %c8_738 = arith.constant 8 : index
    %c0_739 = arith.constant 0 : index
    %961 = vector.load %arg3[%c1_736, %c1_737, %c8_738, %c0_739] : memref<2x8x14x14xf32, #tpu.memory_space<vmem>>, vector<1x1x1x14xf32>
    %962 = vector.shape_cast %961 : vector<1x1x1x14xf32> to vector<14xf32>
    %963 = vector.shape_cast %960 : vector<14xf32> to vector<1x1x1x14xf32>
    tpu.vector_store %arg3[%c1_736, %c1_737, %c8_738, %c0_739], %963 {strides = array<i32>} : memref<2x8x14x14xf32, #tpu.memory_space<vmem>>, vector<1x1x1x14xf32>,
    %964 = vector.extract_strided_slice %953 {offsets = [2, 0], sizes = [1, 14], strides = [1, 1]} : vector<8x14xf32> to vector<1x14xf32>
    %965 = vector.shape_cast %964 : vector<1x14xf32> to vector<14xf32>
    %c1_740 = arith.constant 1 : index
    %c2_741 = arith.constant 2 : index
    %c8_742 = arith.constant 8 : index
    %c0_743 = arith.constant 0 : index
    %966 = vector.load %arg3[%c1_740, %c2_741, %c8_742, %c0_743] : memref<2x8x14x14xf32, #tpu.memory_space<vmem>>, vector<1x1x1x14xf32>
    %967 = vector.shape_cast %966 : vector<1x1x1x14xf32> to vector<14xf32>
    %968 = vector.shape_cast %965 : vector<14xf32> to vector<1x1x1x14xf32>
    tpu.vector_store %arg3[%c1_740, %c2_741, %c8_742, %c0_743], %968 {strides = array<i32>} : memref<2x8x14x14xf32, #tpu.memory_space<vmem>>, vector<1x1x1x14xf32>,
    %969 = vector.extract_strided_slice %953 {offsets = [3, 0], sizes = [1, 14], strides = [1, 1]} : vector<8x14xf32> to vector<1x14xf32>
    %970 = vector.shape_cast %969 : vector<1x14xf32> to vector<14xf32>
    %c1_744 = arith.constant 1 : index
    %c3_745 = arith.constant 3 : index
    %c8_746 = arith.constant 8 : index
    %c0_747 = arith.constant 0 : index
    %971 = vector.load %arg3[%c1_744, %c3_745, %c8_746, %c0_747] : memref<2x8x14x14xf32, #tpu.memory_space<vmem>>, vector<1x1x1x14xf32>
    %972 = vector.shape_cast %971 : vector<1x1x1x14xf32> to vector<14xf32>
    %973 = vector.shape_cast %970 : vector<14xf32> to vector<1x1x1x14xf32>
    tpu.vector_store %arg3[%c1_744, %c3_745, %c8_746, %c0_747], %973 {strides = array<i32>} : memref<2x8x14x14xf32, #tpu.memory_space<vmem>>, vector<1x1x1x14xf32>,
    %974 = vector.extract_strided_slice %953 {offsets = [4, 0], sizes = [1, 14], strides = [1, 1]} : vector<8x14xf32> to vector<1x14xf32>
    %975 = vector.shape_cast %974 : vector<1x14xf32> to vector<14xf32>
    %c1_748 = arith.constant 1 : index
    %c4_749 = arith.constant 4 : index
    %c8_750 = arith.constant 8 : index
    %c0_751 = arith.constant 0 : index
    %976 = vector.load %arg3[%c1_748, %c4_749, %c8_750, %c0_751] : memref<2x8x14x14xf32, #tpu.memory_space<vmem>>, vector<1x1x1x14xf32>
    %977 = vector.shape_cast %976 : vector<1x1x1x14xf32> to vector<14xf32>
    %978 = vector.shape_cast %975 : vector<14xf32> to vector<1x1x1x14xf32>
    tpu.vector_store %arg3[%c1_748, %c4_749, %c8_750, %c0_751], %978 {strides = array<i32>} : memref<2x8x14x14xf32, #tpu.memory_space<vmem>>, vector<1x1x1x14xf32>,
    %979 = vector.extract_strided_slice %953 {offsets = [5, 0], sizes = [1, 14], strides = [1, 1]} : vector<8x14xf32> to vector<1x14xf32>
    %980 = vector.shape_cast %979 : vector<1x14xf32> to vector<14xf32>
    %c1_752 = arith.constant 1 : index
    %c5_753 = arith.constant 5 : index
    %c8_754 = arith.constant 8 : index
    %c0_755 = arith.constant 0 : index
    %981 = vector.load %arg3[%c1_752, %c5_753, %c8_754, %c0_755] : memref<2x8x14x14xf32, #tpu.memory_space<vmem>>, vector<1x1x1x14xf32>
    %982 = vector.shape_cast %981 : vector<1x1x1x14xf32> to vector<14xf32>
    %983 = vector.shape_cast %980 : vector<14xf32> to vector<1x1x1x14xf32>
    tpu.vector_store %arg3[%c1_752, %c5_753, %c8_754, %c0_755], %983 {strides = array<i32>} : memref<2x8x14x14xf32, #tpu.memory_space<vmem>>, vector<1x1x1x14xf32>,
    %984 = vector.extract_strided_slice %953 {offsets = [6, 0], sizes = [1, 14], strides = [1, 1]} : vector<8x14xf32> to vector<1x14xf32>
    %985 = vector.shape_cast %984 : vector<1x14xf32> to vector<14xf32>
    %c1_756 = arith.constant 1 : index
    %c6_757 = arith.constant 6 : index
    %c8_758 = arith.constant 8 : index
    %c0_759 = arith.constant 0 : index
    %986 = vector.load %arg3[%c1_756, %c6_757, %c8_758, %c0_759] : memref<2x8x14x14xf32, #tpu.memory_space<vmem>>, vector<1x1x1x14xf32>
    %987 = vector.shape_cast %986 : vector<1x1x1x14xf32> to vector<14xf32>
    %988 = vector.shape_cast %985 : vector<14xf32> to vector<1x1x1x14xf32>
    tpu.vector_store %arg3[%c1_756, %c6_757, %c8_758, %c0_759], %988 {strides = array<i32>} : memref<2x8x14x14xf32, #tpu.memory_space<vmem>>, vector<1x1x1x14xf32>,
    %989 = vector.extract_strided_slice %953 {offsets = [7, 0], sizes = [1, 14], strides = [1, 1]} : vector<8x14xf32> to vector<1x14xf32>
    %990 = vector.shape_cast %989 : vector<1x14xf32> to vector<14xf32>
    %c1_760 = arith.constant 1 : index
    %c7_761 = arith.constant 7 : index
    %c8_762 = arith.constant 8 : index
    %c0_763 = arith.constant 0 : index
    %991 = vector.load %arg3[%c1_760, %c7_761, %c8_762, %c0_763] : memref<2x8x14x14xf32, #tpu.memory_space<vmem>>, vector<1x1x1x14xf32>
    %992 = vector.shape_cast %991 : vector<1x1x1x14xf32> to vector<14xf32>
    %993 = vector.shape_cast %990 : vector<14xf32> to vector<1x1x1x14xf32>
    tpu.vector_store %arg3[%c1_760, %c7_761, %c8_762, %c0_763], %993 {strides = array<i32>} : memref<2x8x14x14xf32, #tpu.memory_space<vmem>>, vector<1x1x1x14xf32>,
    %994 = vector.extract_strided_slice %50 {offsets = [0, 366], sizes = [8, 14], strides = [1, 1]} : vector<8x444xf32> to vector<8x14xf32>
    %995 = vector.extract_strided_slice %994 {offsets = [0, 0], sizes = [1, 14], strides = [1, 1]} : vector<8x14xf32> to vector<1x14xf32>
    %996 = vector.shape_cast %995 : vector<1x14xf32> to vector<14xf32>
    %c1_764 = arith.constant 1 : index
    %c0_765 = arith.constant 0 : index
    %c9_766 = arith.constant 9 : index
    %c0_767 = arith.constant 0 : index
    %997 = vector.load %arg3[%c1_764, %c0_765, %c9_766, %c0_767] : memref<2x8x14x14xf32, #tpu.memory_space<vmem>>, vector<1x1x1x14xf32>
    %998 = vector.shape_cast %997 : vector<1x1x1x14xf32> to vector<14xf32>
    %999 = vector.shape_cast %996 : vector<14xf32> to vector<1x1x1x14xf32>
    tpu.vector_store %arg3[%c1_764, %c0_765, %c9_766, %c0_767], %999 {strides = array<i32>} : memref<2x8x14x14xf32, #tpu.memory_space<vmem>>, vector<1x1x1x14xf32>,
    %1000 = vector.extract_strided_slice %994 {offsets = [1, 0], sizes = [1, 14], strides = [1, 1]} : vector<8x14xf32> to vector<1x14xf32>
    %1001 = vector.shape_cast %1000 : vector<1x14xf32> to vector<14xf32>
    %c1_768 = arith.constant 1 : index
    %c1_769 = arith.constant 1 : index
    %c9_770 = arith.constant 9 : index
    %c0_771 = arith.constant 0 : index
    %1002 = vector.load %arg3[%c1_768, %c1_769, %c9_770, %c0_771] : memref<2x8x14x14xf32, #tpu.memory_space<vmem>>, vector<1x1x1x14xf32>
    %1003 = vector.shape_cast %1002 : vector<1x1x1x14xf32> to vector<14xf32>
    %1004 = vector.shape_cast %1001 : vector<14xf32> to vector<1x1x1x14xf32>
    tpu.vector_store %arg3[%c1_768, %c1_769, %c9_770, %c0_771], %1004 {strides = array<i32>} : memref<2x8x14x14xf32, #tpu.memory_space<vmem>>, vector<1x1x1x14xf32>,
    %1005 = vector.extract_strided_slice %994 {offsets = [2, 0], sizes = [1, 14], strides = [1, 1]} : vector<8x14xf32> to vector<1x14xf32>
    %1006 = vector.shape_cast %1005 : vector<1x14xf32> to vector<14xf32>
    %c1_772 = arith.constant 1 : index
    %c2_773 = arith.constant 2 : index
    %c9_774 = arith.constant 9 : index
    %c0_775 = arith.constant 0 : index
    %1007 = vector.load %arg3[%c1_772, %c2_773, %c9_774, %c0_775] : memref<2x8x14x14xf32, #tpu.memory_space<vmem>>, vector<1x1x1x14xf32>
    %1008 = vector.shape_cast %1007 : vector<1x1x1x14xf32> to vector<14xf32>
    %1009 = vector.shape_cast %1006 : vector<14xf32> to vector<1x1x1x14xf32>
    tpu.vector_store %arg3[%c1_772, %c2_773, %c9_774, %c0_775], %1009 {strides = array<i32>} : memref<2x8x14x14xf32, #tpu.memory_space<vmem>>, vector<1x1x1x14xf32>,
    %1010 = vector.extract_strided_slice %994 {offsets = [3, 0], sizes = [1, 14], strides = [1, 1]} : vector<8x14xf32> to vector<1x14xf32>
    %1011 = vector.shape_cast %1010 : vector<1x14xf32> to vector<14xf32>
    %c1_776 = arith.constant 1 : index
    %c3_777 = arith.constant 3 : index
    %c9_778 = arith.constant 9 : index
    %c0_779 = arith.constant 0 : index
    %1012 = vector.load %arg3[%c1_776, %c3_777, %c9_778, %c0_779] : memref<2x8x14x14xf32, #tpu.memory_space<vmem>>, vector<1x1x1x14xf32>
    %1013 = vector.shape_cast %1012 : vector<1x1x1x14xf32> to vector<14xf32>
    %1014 = vector.shape_cast %1011 : vector<14xf32> to vector<1x1x1x14xf32>
    tpu.vector_store %arg3[%c1_776, %c3_777, %c9_778, %c0_779], %1014 {strides = array<i32>} : memref<2x8x14x14xf32, #tpu.memory_space<vmem>>, vector<1x1x1x14xf32>,
    %1015 = vector.extract_strided_slice %994 {offsets = [4, 0], sizes = [1, 14], strides = [1, 1]} : vector<8x14xf32> to vector<1x14xf32>
    %1016 = vector.shape_cast %1015 : vector<1x14xf32> to vector<14xf32>
    %c1_780 = arith.constant 1 : index
    %c4_781 = arith.constant 4 : index
    %c9_782 = arith.constant 9 : index
    %c0_783 = arith.constant 0 : index
    %1017 = vector.load %arg3[%c1_780, %c4_781, %c9_782, %c0_783] : memref<2x8x14x14xf32, #tpu.memory_space<vmem>>, vector<1x1x1x14xf32>
    %1018 = vector.shape_cast %1017 : vector<1x1x1x14xf32> to vector<14xf32>
    %1019 = vector.shape_cast %1016 : vector<14xf32> to vector<1x1x1x14xf32>
    tpu.vector_store %arg3[%c1_780, %c4_781, %c9_782, %c0_783], %1019 {strides = array<i32>} : memref<2x8x14x14xf32, #tpu.memory_space<vmem>>, vector<1x1x1x14xf32>,
    %1020 = vector.extract_strided_slice %994 {offsets = [5, 0], sizes = [1, 14], strides = [1, 1]} : vector<8x14xf32> to vector<1x14xf32>
    %1021 = vector.shape_cast %1020 : vector<1x14xf32> to vector<14xf32>
    %c1_784 = arith.constant 1 : index
    %c5_785 = arith.constant 5 : index
    %c9_786 = arith.constant 9 : index
    %c0_787 = arith.constant 0 : index
    %1022 = vector.load %arg3[%c1_784, %c5_785, %c9_786, %c0_787] : memref<2x8x14x14xf32, #tpu.memory_space<vmem>>, vector<1x1x1x14xf32>
    %1023 = vector.shape_cast %1022 : vector<1x1x1x14xf32> to vector<14xf32>
    %1024 = vector.shape_cast %1021 : vector<14xf32> to vector<1x1x1x14xf32>
    tpu.vector_store %arg3[%c1_784, %c5_785, %c9_786, %c0_787], %1024 {strides = array<i32>} : memref<2x8x14x14xf32, #tpu.memory_space<vmem>>, vector<1x1x1x14xf32>,
    %1025 = vector.extract_strided_slice %994 {offsets = [6, 0], sizes = [1, 14], strides = [1, 1]} : vector<8x14xf32> to vector<1x14xf32>
    %1026 = vector.shape_cast %1025 : vector<1x14xf32> to vector<14xf32>
    %c1_788 = arith.constant 1 : index
    %c6_789 = arith.constant 6 : index
    %c9_790 = arith.constant 9 : index
    %c0_791 = arith.constant 0 : index
    %1027 = vector.load %arg3[%c1_788, %c6_789, %c9_790, %c0_791] : memref<2x8x14x14xf32, #tpu.memory_space<vmem>>, vector<1x1x1x14xf32>
    %1028 = vector.shape_cast %1027 : vector<1x1x1x14xf32> to vector<14xf32>
    %1029 = vector.shape_cast %1026 : vector<14xf32> to vector<1x1x1x14xf32>
    tpu.vector_store %arg3[%c1_788, %c6_789, %c9_790, %c0_791], %1029 {strides = array<i32>} : memref<2x8x14x14xf32, #tpu.memory_space<vmem>>, vector<1x1x1x14xf32>,
    %1030 = vector.extract_strided_slice %994 {offsets = [7, 0], sizes = [1, 14], strides = [1, 1]} : vector<8x14xf32> to vector<1x14xf32>
    %1031 = vector.shape_cast %1030 : vector<1x14xf32> to vector<14xf32>
    %c1_792 = arith.constant 1 : index
    %c7_793 = arith.constant 7 : index
    %c9_794 = arith.constant 9 : index
    %c0_795 = arith.constant 0 : index
    %1032 = vector.load %arg3[%c1_792, %c7_793, %c9_794, %c0_795] : memref<2x8x14x14xf32, #tpu.memory_space<vmem>>, vector<1x1x1x14xf32>
    %1033 = vector.shape_cast %1032 : vector<1x1x1x14xf32> to vector<14xf32>
    %1034 = vector.shape_cast %1031 : vector<14xf32> to vector<1x1x1x14xf32>
    tpu.vector_store %arg3[%c1_792, %c7_793, %c9_794, %c0_795], %1034 {strides = array<i32>} : memref<2x8x14x14xf32, #tpu.memory_space<vmem>>, vector<1x1x1x14xf32>,
    %1035 = vector.extract_strided_slice %50 {offsets = [0, 382], sizes = [8, 14], strides = [1, 1]} : vector<8x444xf32> to vector<8x14xf32>
    %1036 = vector.extract_strided_slice %1035 {offsets = [0, 0], sizes = [1, 14], strides = [1, 1]} : vector<8x14xf32> to vector<1x14xf32>
    %1037 = vector.shape_cast %1036 : vector<1x14xf32> to vector<14xf32>
    %c1_796 = arith.constant 1 : index
    %c0_797 = arith.constant 0 : index
    %c10_798 = arith.constant 10 : index
    %c0_799 = arith.constant 0 : index
    %1038 = vector.load %arg3[%c1_796, %c0_797, %c10_798, %c0_799] : memref<2x8x14x14xf32, #tpu.memory_space<vmem>>, vector<1x1x1x14xf32>
    %1039 = vector.shape_cast %1038 : vector<1x1x1x14xf32> to vector<14xf32>
    %1040 = vector.shape_cast %1037 : vector<14xf32> to vector<1x1x1x14xf32>
    tpu.vector_store %arg3[%c1_796, %c0_797, %c10_798, %c0_799], %1040 {strides = array<i32>} : memref<2x8x14x14xf32, #tpu.memory_space<vmem>>, vector<1x1x1x14xf32>,
    %1041 = vector.extract_strided_slice %1035 {offsets = [1, 0], sizes = [1, 14], strides = [1, 1]} : vector<8x14xf32> to vector<1x14xf32>
    %1042 = vector.shape_cast %1041 : vector<1x14xf32> to vector<14xf32>
    %c1_800 = arith.constant 1 : index
    %c1_801 = arith.constant 1 : index
    %c10_802 = arith.constant 10 : index
    %c0_803 = arith.constant 0 : index
    %1043 = vector.load %arg3[%c1_800, %c1_801, %c10_802, %c0_803] : memref<2x8x14x14xf32, #tpu.memory_space<vmem>>, vector<1x1x1x14xf32>
    %1044 = vector.shape_cast %1043 : vector<1x1x1x14xf32> to vector<14xf32>
    %1045 = vector.shape_cast %1042 : vector<14xf32> to vector<1x1x1x14xf32>
    tpu.vector_store %arg3[%c1_800, %c1_801, %c10_802, %c0_803], %1045 {strides = array<i32>} : memref<2x8x14x14xf32, #tpu.memory_space<vmem>>, vector<1x1x1x14xf32>,
    %1046 = vector.extract_strided_slice %1035 {offsets = [2, 0], sizes = [1, 14], strides = [1, 1]} : vector<8x14xf32> to vector<1x14xf32>
    %1047 = vector.shape_cast %1046 : vector<1x14xf32> to vector<14xf32>
    %c1_804 = arith.constant 1 : index
    %c2_805 = arith.constant 2 : index
    %c10_806 = arith.constant 10 : index
    %c0_807 = arith.constant 0 : index
    %1048 = vector.load %arg3[%c1_804, %c2_805, %c10_806, %c0_807] : memref<2x8x14x14xf32, #tpu.memory_space<vmem>>, vector<1x1x1x14xf32>
    %1049 = vector.shape_cast %1048 : vector<1x1x1x14xf32> to vector<14xf32>
    %1050 = vector.shape_cast %1047 : vector<14xf32> to vector<1x1x1x14xf32>
    tpu.vector_store %arg3[%c1_804, %c2_805, %c10_806, %c0_807], %1050 {strides = array<i32>} : memref<2x8x14x14xf32, #tpu.memory_space<vmem>>, vector<1x1x1x14xf32>,
    %1051 = vector.extract_strided_slice %1035 {offsets = [3, 0], sizes = [1, 14], strides = [1, 1]} : vector<8x14xf32> to vector<1x14xf32>
    %1052 = vector.shape_cast %1051 : vector<1x14xf32> to vector<14xf32>
    %c1_808 = arith.constant 1 : index
    %c3_809 = arith.constant 3 : index
    %c10_810 = arith.constant 10 : index
    %c0_811 = arith.constant 0 : index
    %1053 = vector.load %arg3[%c1_808, %c3_809, %c10_810, %c0_811] : memref<2x8x14x14xf32, #tpu.memory_space<vmem>>, vector<1x1x1x14xf32>
    %1054 = vector.shape_cast %1053 : vector<1x1x1x14xf32> to vector<14xf32>
    %1055 = vector.shape_cast %1052 : vector<14xf32> to vector<1x1x1x14xf32>
    tpu.vector_store %arg3[%c1_808, %c3_809, %c10_810, %c0_811], %1055 {strides = array<i32>} : memref<2x8x14x14xf32, #tpu.memory_space<vmem>>, vector<1x1x1x14xf32>,
    %1056 = vector.extract_strided_slice %1035 {offsets = [4, 0], sizes = [1, 14], strides = [1, 1]} : vector<8x14xf32> to vector<1x14xf32>
    %1057 = vector.shape_cast %1056 : vector<1x14xf32> to vector<14xf32>
    %c1_812 = arith.constant 1 : index
    %c4_813 = arith.constant 4 : index
    %c10_814 = arith.constant 10 : index
    %c0_815 = arith.constant 0 : index
    %1058 = vector.load %arg3[%c1_812, %c4_813, %c10_814, %c0_815] : memref<2x8x14x14xf32, #tpu.memory_space<vmem>>, vector<1x1x1x14xf32>
    %1059 = vector.shape_cast %1058 : vector<1x1x1x14xf32> to vector<14xf32>
    %1060 = vector.shape_cast %1057 : vector<14xf32> to vector<1x1x1x14xf32>
    tpu.vector_store %arg3[%c1_812, %c4_813, %c10_814, %c0_815], %1060 {strides = array<i32>} : memref<2x8x14x14xf32, #tpu.memory_space<vmem>>, vector<1x1x1x14xf32>,
    %1061 = vector.extract_strided_slice %1035 {offsets = [5, 0], sizes = [1, 14], strides = [1, 1]} : vector<8x14xf32> to vector<1x14xf32>
    %1062 = vector.shape_cast %1061 : vector<1x14xf32> to vector<14xf32>
    %c1_816 = arith.constant 1 : index
    %c5_817 = arith.constant 5 : index
    %c10_818 = arith.constant 10 : index
    %c0_819 = arith.constant 0 : index
    %1063 = vector.load %arg3[%c1_816, %c5_817, %c10_818, %c0_819] : memref<2x8x14x14xf32, #tpu.memory_space<vmem>>, vector<1x1x1x14xf32>
    %1064 = vector.shape_cast %1063 : vector<1x1x1x14xf32> to vector<14xf32>
    %1065 = vector.shape_cast %1062 : vector<14xf32> to vector<1x1x1x14xf32>
    tpu.vector_store %arg3[%c1_816, %c5_817, %c10_818, %c0_819], %1065 {strides = array<i32>} : memref<2x8x14x14xf32, #tpu.memory_space<vmem>>, vector<1x1x1x14xf32>,
    %1066 = vector.extract_strided_slice %1035 {offsets = [6, 0], sizes = [1, 14], strides = [1, 1]} : vector<8x14xf32> to vector<1x14xf32>
    %1067 = vector.shape_cast %1066 : vector<1x14xf32> to vector<14xf32>
    %c1_820 = arith.constant 1 : index
    %c6_821 = arith.constant 6 : index
    %c10_822 = arith.constant 10 : index
    %c0_823 = arith.constant 0 : index
    %1068 = vector.load %arg3[%c1_820, %c6_821, %c10_822, %c0_823] : memref<2x8x14x14xf32, #tpu.memory_space<vmem>>, vector<1x1x1x14xf32>
    %1069 = vector.shape_cast %1068 : vector<1x1x1x14xf32> to vector<14xf32>
    %1070 = vector.shape_cast %1067 : vector<14xf32> to vector<1x1x1x14xf32>
    tpu.vector_store %arg3[%c1_820, %c6_821, %c10_822, %c0_823], %1070 {strides = array<i32>} : memref<2x8x14x14xf32, #tpu.memory_space<vmem>>, vector<1x1x1x14xf32>,
    %1071 = vector.extract_strided_slice %1035 {offsets = [7, 0], sizes = [1, 14], strides = [1, 1]} : vector<8x14xf32> to vector<1x14xf32>
    %1072 = vector.shape_cast %1071 : vector<1x14xf32> to vector<14xf32>
    %c1_824 = arith.constant 1 : index
    %c7_825 = arith.constant 7 : index
    %c10_826 = arith.constant 10 : index
    %c0_827 = arith.constant 0 : index
    %1073 = vector.load %arg3[%c1_824, %c7_825, %c10_826, %c0_827] : memref<2x8x14x14xf32, #tpu.memory_space<vmem>>, vector<1x1x1x14xf32>
    %1074 = vector.shape_cast %1073 : vector<1x1x1x14xf32> to vector<14xf32>
    %1075 = vector.shape_cast %1072 : vector<14xf32> to vector<1x1x1x14xf32>
    tpu.vector_store %arg3[%c1_824, %c7_825, %c10_826, %c0_827], %1075 {strides = array<i32>} : memref<2x8x14x14xf32, #tpu.memory_space<vmem>>, vector<1x1x1x14xf32>,
    %1076 = vector.extract_strided_slice %50 {offsets = [0, 398], sizes = [8, 14], strides = [1, 1]} : vector<8x444xf32> to vector<8x14xf32>
    %1077 = vector.extract_strided_slice %1076 {offsets = [0, 0], sizes = [1, 14], strides = [1, 1]} : vector<8x14xf32> to vector<1x14xf32>
    %1078 = vector.shape_cast %1077 : vector<1x14xf32> to vector<14xf32>
    %c1_828 = arith.constant 1 : index
    %c0_829 = arith.constant 0 : index
    %c11_830 = arith.constant 11 : index
    %c0_831 = arith.constant 0 : index
    %1079 = vector.load %arg3[%c1_828, %c0_829, %c11_830, %c0_831] : memref<2x8x14x14xf32, #tpu.memory_space<vmem>>, vector<1x1x1x14xf32>
    %1080 = vector.shape_cast %1079 : vector<1x1x1x14xf32> to vector<14xf32>
    %1081 = vector.shape_cast %1078 : vector<14xf32> to vector<1x1x1x14xf32>
    tpu.vector_store %arg3[%c1_828, %c0_829, %c11_830, %c0_831], %1081 {strides = array<i32>} : memref<2x8x14x14xf32, #tpu.memory_space<vmem>>, vector<1x1x1x14xf32>,
    %1082 = vector.extract_strided_slice %1076 {offsets = [1, 0], sizes = [1, 14], strides = [1, 1]} : vector<8x14xf32> to vector<1x14xf32>
    %1083 = vector.shape_cast %1082 : vector<1x14xf32> to vector<14xf32>
    %c1_832 = arith.constant 1 : index
    %c1_833 = arith.constant 1 : index
    %c11_834 = arith.constant 11 : index
    %c0_835 = arith.constant 0 : index
    %1084 = vector.load %arg3[%c1_832, %c1_833, %c11_834, %c0_835] : memref<2x8x14x14xf32, #tpu.memory_space<vmem>>, vector<1x1x1x14xf32>
    %1085 = vector.shape_cast %1084 : vector<1x1x1x14xf32> to vector<14xf32>
    %1086 = vector.shape_cast %1083 : vector<14xf32> to vector<1x1x1x14xf32>
    tpu.vector_store %arg3[%c1_832, %c1_833, %c11_834, %c0_835], %1086 {strides = array<i32>} : memref<2x8x14x14xf32, #tpu.memory_space<vmem>>, vector<1x1x1x14xf32>,
    %1087 = vector.extract_strided_slice %1076 {offsets = [2, 0], sizes = [1, 14], strides = [1, 1]} : vector<8x14xf32> to vector<1x14xf32>
    %1088 = vector.shape_cast %1087 : vector<1x14xf32> to vector<14xf32>
    %c1_836 = arith.constant 1 : index
    %c2_837 = arith.constant 2 : index
    %c11_838 = arith.constant 11 : index
    %c0_839 = arith.constant 0 : index
    %1089 = vector.load %arg3[%c1_836, %c2_837, %c11_838, %c0_839] : memref<2x8x14x14xf32, #tpu.memory_space<vmem>>, vector<1x1x1x14xf32>
    %1090 = vector.shape_cast %1089 : vector<1x1x1x14xf32> to vector<14xf32>
    %1091 = vector.shape_cast %1088 : vector<14xf32> to vector<1x1x1x14xf32>
    tpu.vector_store %arg3[%c1_836, %c2_837, %c11_838, %c0_839], %1091 {strides = array<i32>} : memref<2x8x14x14xf32, #tpu.memory_space<vmem>>, vector<1x1x1x14xf32>,
    %1092 = vector.extract_strided_slice %1076 {offsets = [3, 0], sizes = [1, 14], strides = [1, 1]} : vector<8x14xf32> to vector<1x14xf32>
    %1093 = vector.shape_cast %1092 : vector<1x14xf32> to vector<14xf32>
    %c1_840 = arith.constant 1 : index
    %c3_841 = arith.constant 3 : index
    %c11_842 = arith.constant 11 : index
    %c0_843 = arith.constant 0 : index
    %1094 = vector.load %arg3[%c1_840, %c3_841, %c11_842, %c0_843] : memref<2x8x14x14xf32, #tpu.memory_space<vmem>>, vector<1x1x1x14xf32>
    %1095 = vector.shape_cast %1094 : vector<1x1x1x14xf32> to vector<14xf32>
    %1096 = vector.shape_cast %1093 : vector<14xf32> to vector<1x1x1x14xf32>
    tpu.vector_store %arg3[%c1_840, %c3_841, %c11_842, %c0_843], %1096 {strides = array<i32>} : memref<2x8x14x14xf32, #tpu.memory_space<vmem>>, vector<1x1x1x14xf32>,
    %1097 = vector.extract_strided_slice %1076 {offsets = [4, 0], sizes = [1, 14], strides = [1, 1]} : vector<8x14xf32> to vector<1x14xf32>
    %1098 = vector.shape_cast %1097 : vector<1x14xf32> to vector<14xf32>
    %c1_844 = arith.constant 1 : index
    %c4_845 = arith.constant 4 : index
    %c11_846 = arith.constant 11 : index
    %c0_847 = arith.constant 0 : index
    %1099 = vector.load %arg3[%c1_844, %c4_845, %c11_846, %c0_847] : memref<2x8x14x14xf32, #tpu.memory_space<vmem>>, vector<1x1x1x14xf32>
    %1100 = vector.shape_cast %1099 : vector<1x1x1x14xf32> to vector<14xf32>
    %1101 = vector.shape_cast %1098 : vector<14xf32> to vector<1x1x1x14xf32>
    tpu.vector_store %arg3[%c1_844, %c4_845, %c11_846, %c0_847], %1101 {strides = array<i32>} : memref<2x8x14x14xf32, #tpu.memory_space<vmem>>, vector<1x1x1x14xf32>,
    %1102 = vector.extract_strided_slice %1076 {offsets = [5, 0], sizes = [1, 14], strides = [1, 1]} : vector<8x14xf32> to vector<1x14xf32>
    %1103 = vector.shape_cast %1102 : vector<1x14xf32> to vector<14xf32>
    %c1_848 = arith.constant 1 : index
    %c5_849 = arith.constant 5 : index
    %c11_850 = arith.constant 11 : index
    %c0_851 = arith.constant 0 : index
    %1104 = vector.load %arg3[%c1_848, %c5_849, %c11_850, %c0_851] : memref<2x8x14x14xf32, #tpu.memory_space<vmem>>, vector<1x1x1x14xf32>
    %1105 = vector.shape_cast %1104 : vector<1x1x1x14xf32> to vector<14xf32>
    %1106 = vector.shape_cast %1103 : vector<14xf32> to vector<1x1x1x14xf32>
    tpu.vector_store %arg3[%c1_848, %c5_849, %c11_850, %c0_851], %1106 {strides = array<i32>} : memref<2x8x14x14xf32, #tpu.memory_space<vmem>>, vector<1x1x1x14xf32>,
    %1107 = vector.extract_strided_slice %1076 {offsets = [6, 0], sizes = [1, 14], strides = [1, 1]} : vector<8x14xf32> to vector<1x14xf32>
    %1108 = vector.shape_cast %1107 : vector<1x14xf32> to vector<14xf32>
    %c1_852 = arith.constant 1 : index
    %c6_853 = arith.constant 6 : index
    %c11_854 = arith.constant 11 : index
    %c0_855 = arith.constant 0 : index
    %1109 = vector.load %arg3[%c1_852, %c6_853, %c11_854, %c0_855] : memref<2x8x14x14xf32, #tpu.memory_space<vmem>>, vector<1x1x1x14xf32>
    %1110 = vector.shape_cast %1109 : vector<1x1x1x14xf32> to vector<14xf32>
    %1111 = vector.shape_cast %1108 : vector<14xf32> to vector<1x1x1x14xf32>
    tpu.vector_store %arg3[%c1_852, %c6_853, %c11_854, %c0_855], %1111 {strides = array<i32>} : memref<2x8x14x14xf32, #tpu.memory_space<vmem>>, vector<1x1x1x14xf32>,
    %1112 = vector.extract_strided_slice %1076 {offsets = [7, 0], sizes = [1, 14], strides = [1, 1]} : vector<8x14xf32> to vector<1x14xf32>
    %1113 = vector.shape_cast %1112 : vector<1x14xf32> to vector<14xf32>
    %c1_856 = arith.constant 1 : index
    %c7_857 = arith.constant 7 : index
    %c11_858 = arith.constant 11 : index
    %c0_859 = arith.constant 0 : index
    %1114 = vector.load %arg3[%c1_856, %c7_857, %c11_858, %c0_859] : memref<2x8x14x14xf32, #tpu.memory_space<vmem>>, vector<1x1x1x14xf32>
    %1115 = vector.shape_cast %1114 : vector<1x1x1x14xf32> to vector<14xf32>
    %1116 = vector.shape_cast %1113 : vector<14xf32> to vector<1x1x1x14xf32>
    tpu.vector_store %arg3[%c1_856, %c7_857, %c11_858, %c0_859], %1116 {strides = array<i32>} : memref<2x8x14x14xf32, #tpu.memory_space<vmem>>, vector<1x1x1x14xf32>,
    %1117 = vector.extract_strided_slice %50 {offsets = [0, 414], sizes = [8, 14], strides = [1, 1]} : vector<8x444xf32> to vector<8x14xf32>
    %1118 = vector.extract_strided_slice %1117 {offsets = [0, 0], sizes = [1, 14], strides = [1, 1]} : vector<8x14xf32> to vector<1x14xf32>
    %1119 = vector.shape_cast %1118 : vector<1x14xf32> to vector<14xf32>
    %c1_860 = arith.constant 1 : index
    %c0_861 = arith.constant 0 : index
    %c12_862 = arith.constant 12 : index
    %c0_863 = arith.constant 0 : index
    %1120 = vector.load %arg3[%c1_860, %c0_861, %c12_862, %c0_863] : memref<2x8x14x14xf32, #tpu.memory_space<vmem>>, vector<1x1x1x14xf32>
    %1121 = vector.shape_cast %1120 : vector<1x1x1x14xf32> to vector<14xf32>
    %1122 = vector.shape_cast %1119 : vector<14xf32> to vector<1x1x1x14xf32>
    tpu.vector_store %arg3[%c1_860, %c0_861, %c12_862, %c0_863], %1122 {strides = array<i32>} : memref<2x8x14x14xf32, #tpu.memory_space<vmem>>, vector<1x1x1x14xf32>,
    %1123 = vector.extract_strided_slice %1117 {offsets = [1, 0], sizes = [1, 14], strides = [1, 1]} : vector<8x14xf32> to vector<1x14xf32>
    %1124 = vector.shape_cast %1123 : vector<1x14xf32> to vector<14xf32>
    %c1_864 = arith.constant 1 : index
    %c1_865 = arith.constant 1 : index
    %c12_866 = arith.constant 12 : index
    %c0_867 = arith.constant 0 : index
    %1125 = vector.load %arg3[%c1_864, %c1_865, %c12_866, %c0_867] : memref<2x8x14x14xf32, #tpu.memory_space<vmem>>, vector<1x1x1x14xf32>
    %1126 = vector.shape_cast %1125 : vector<1x1x1x14xf32> to vector<14xf32>
    %1127 = vector.shape_cast %1124 : vector<14xf32> to vector<1x1x1x14xf32>
    tpu.vector_store %arg3[%c1_864, %c1_865, %c12_866, %c0_867], %1127 {strides = array<i32>} : memref<2x8x14x14xf32, #tpu.memory_space<vmem>>, vector<1x1x1x14xf32>,
    %1128 = vector.extract_strided_slice %1117 {offsets = [2, 0], sizes = [1, 14], strides = [1, 1]} : vector<8x14xf32> to vector<1x14xf32>
    %1129 = vector.shape_cast %1128 : vector<1x14xf32> to vector<14xf32>
    %c1_868 = arith.constant 1 : index
    %c2_869 = arith.constant 2 : index
    %c12_870 = arith.constant 12 : index
    %c0_871 = arith.constant 0 : index
    %1130 = vector.load %arg3[%c1_868, %c2_869, %c12_870, %c0_871] : memref<2x8x14x14xf32, #tpu.memory_space<vmem>>, vector<1x1x1x14xf32>
    %1131 = vector.shape_cast %1130 : vector<1x1x1x14xf32> to vector<14xf32>
    %1132 = vector.shape_cast %1129 : vector<14xf32> to vector<1x1x1x14xf32>
    tpu.vector_store %arg3[%c1_868, %c2_869, %c12_870, %c0_871], %1132 {strides = array<i32>} : memref<2x8x14x14xf32, #tpu.memory_space<vmem>>, vector<1x1x1x14xf32>,
    %1133 = vector.extract_strided_slice %1117 {offsets = [3, 0], sizes = [1, 14], strides = [1, 1]} : vector<8x14xf32> to vector<1x14xf32>
    %1134 = vector.shape_cast %1133 : vector<1x14xf32> to vector<14xf32>
    %c1_872 = arith.constant 1 : index
    %c3_873 = arith.constant 3 : index
    %c12_874 = arith.constant 12 : index
    %c0_875 = arith.constant 0 : index
    %1135 = vector.load %arg3[%c1_872, %c3_873, %c12_874, %c0_875] : memref<2x8x14x14xf32, #tpu.memory_space<vmem>>, vector<1x1x1x14xf32>
    %1136 = vector.shape_cast %1135 : vector<1x1x1x14xf32> to vector<14xf32>
    %1137 = vector.shape_cast %1134 : vector<14xf32> to vector<1x1x1x14xf32>
    tpu.vector_store %arg3[%c1_872, %c3_873, %c12_874, %c0_875], %1137 {strides = array<i32>} : memref<2x8x14x14xf32, #tpu.memory_space<vmem>>, vector<1x1x1x14xf32>,
    %1138 = vector.extract_strided_slice %1117 {offsets = [4, 0], sizes = [1, 14], strides = [1, 1]} : vector<8x14xf32> to vector<1x14xf32>
    %1139 = vector.shape_cast %1138 : vector<1x14xf32> to vector<14xf32>
    %c1_876 = arith.constant 1 : index
    %c4_877 = arith.constant 4 : index
    %c12_878 = arith.constant 12 : index
    %c0_879 = arith.constant 0 : index
    %1140 = vector.load %arg3[%c1_876, %c4_877, %c12_878, %c0_879] : memref<2x8x14x14xf32, #tpu.memory_space<vmem>>, vector<1x1x1x14xf32>
    %1141 = vector.shape_cast %1140 : vector<1x1x1x14xf32> to vector<14xf32>
    %1142 = vector.shape_cast %1139 : vector<14xf32> to vector<1x1x1x14xf32>
    tpu.vector_store %arg3[%c1_876, %c4_877, %c12_878, %c0_879], %1142 {strides = array<i32>} : memref<2x8x14x14xf32, #tpu.memory_space<vmem>>, vector<1x1x1x14xf32>,
    %1143 = vector.extract_strided_slice %1117 {offsets = [5, 0], sizes = [1, 14], strides = [1, 1]} : vector<8x14xf32> to vector<1x14xf32>
    %1144 = vector.shape_cast %1143 : vector<1x14xf32> to vector<14xf32>
    %c1_880 = arith.constant 1 : index
    %c5_881 = arith.constant 5 : index
    %c12_882 = arith.constant 12 : index
    %c0_883 = arith.constant 0 : index
    %1145 = vector.load %arg3[%c1_880, %c5_881, %c12_882, %c0_883] : memref<2x8x14x14xf32, #tpu.memory_space<vmem>>, vector<1x1x1x14xf32>
    %1146 = vector.shape_cast %1145 : vector<1x1x1x14xf32> to vector<14xf32>
    %1147 = vector.shape_cast %1144 : vector<14xf32> to vector<1x1x1x14xf32>
    tpu.vector_store %arg3[%c1_880, %c5_881, %c12_882, %c0_883], %1147 {strides = array<i32>} : memref<2x8x14x14xf32, #tpu.memory_space<vmem>>, vector<1x1x1x14xf32>,
    %1148 = vector.extract_strided_slice %1117 {offsets = [6, 0], sizes = [1, 14], strides = [1, 1]} : vector<8x14xf32> to vector<1x14xf32>
    %1149 = vector.shape_cast %1148 : vector<1x14xf32> to vector<14xf32>
    %c1_884 = arith.constant 1 : index
    %c6_885 = arith.constant 6 : index
    %c12_886 = arith.constant 12 : index
    %c0_887 = arith.constant 0 : index
    %1150 = vector.load %arg3[%c1_884, %c6_885, %c12_886, %c0_887] : memref<2x8x14x14xf32, #tpu.memory_space<vmem>>, vector<1x1x1x14xf32>
    %1151 = vector.shape_cast %1150 : vector<1x1x1x14xf32> to vector<14xf32>
    %1152 = vector.shape_cast %1149 : vector<14xf32> to vector<1x1x1x14xf32>
    tpu.vector_store %arg3[%c1_884, %c6_885, %c12_886, %c0_887], %1152 {strides = array<i32>} : memref<2x8x14x14xf32, #tpu.memory_space<vmem>>, vector<1x1x1x14xf32>,
    %1153 = vector.extract_strided_slice %1117 {offsets = [7, 0], sizes = [1, 14], strides = [1, 1]} : vector<8x14xf32> to vector<1x14xf32>
    %1154 = vector.shape_cast %1153 : vector<1x14xf32> to vector<14xf32>
    %c1_888 = arith.constant 1 : index
    %c7_889 = arith.constant 7 : index
    %c12_890 = arith.constant 12 : index
    %c0_891 = arith.constant 0 : index
    %1155 = vector.load %arg3[%c1_888, %c7_889, %c12_890, %c0_891] : memref<2x8x14x14xf32, #tpu.memory_space<vmem>>, vector<1x1x1x14xf32>
    %1156 = vector.shape_cast %1155 : vector<1x1x1x14xf32> to vector<14xf32>
    %1157 = vector.shape_cast %1154 : vector<14xf32> to vector<1x1x1x14xf32>
    tpu.vector_store %arg3[%c1_888, %c7_889, %c12_890, %c0_891], %1157 {strides = array<i32>} : memref<2x8x14x14xf32, #tpu.memory_space<vmem>>, vector<1x1x1x14xf32>,
    %1158 = vector.extract_strided_slice %50 {offsets = [0, 430], sizes = [8, 14], strides = [1, 1]} : vector<8x444xf32> to vector<8x14xf32>
    %1159 = vector.extract_strided_slice %1158 {offsets = [0, 0], sizes = [1, 14], strides = [1, 1]} : vector<8x14xf32> to vector<1x14xf32>
    %1160 = vector.shape_cast %1159 : vector<1x14xf32> to vector<14xf32>
    %c1_892 = arith.constant 1 : index
    %c0_893 = arith.constant 0 : index
    %c13_894 = arith.constant 13 : index
    %c0_895 = arith.constant 0 : index
    %1161 = vector.load %arg3[%c1_892, %c0_893, %c13_894, %c0_895] : memref<2x8x14x14xf32, #tpu.memory_space<vmem>>, vector<1x1x1x14xf32>
    %1162 = vector.shape_cast %1161 : vector<1x1x1x14xf32> to vector<14xf32>
    %1163 = vector.shape_cast %1160 : vector<14xf32> to vector<1x1x1x14xf32>
    tpu.vector_store %arg3[%c1_892, %c0_893, %c13_894, %c0_895], %1163 {strides = array<i32>} : memref<2x8x14x14xf32, #tpu.memory_space<vmem>>, vector<1x1x1x14xf32>,
    %1164 = vector.extract_strided_slice %1158 {offsets = [1, 0], sizes = [1, 14], strides = [1, 1]} : vector<8x14xf32> to vector<1x14xf32>
    %1165 = vector.shape_cast %1164 : vector<1x14xf32> to vector<14xf32>
    %c1_896 = arith.constant 1 : index
    %c1_897 = arith.constant 1 : index
    %c13_898 = arith.constant 13 : index
    %c0_899 = arith.constant 0 : index
    %1166 = vector.load %arg3[%c1_896, %c1_897, %c13_898, %c0_899] : memref<2x8x14x14xf32, #tpu.memory_space<vmem>>, vector<1x1x1x14xf32>
    %1167 = vector.shape_cast %1166 : vector<1x1x1x14xf32> to vector<14xf32>
    %1168 = vector.shape_cast %1165 : vector<14xf32> to vector<1x1x1x14xf32>
    tpu.vector_store %arg3[%c1_896, %c1_897, %c13_898, %c0_899], %1168 {strides = array<i32>} : memref<2x8x14x14xf32, #tpu.memory_space<vmem>>, vector<1x1x1x14xf32>,
    %1169 = vector.extract_strided_slice %1158 {offsets = [2, 0], sizes = [1, 14], strides = [1, 1]} : vector<8x14xf32> to vector<1x14xf32>
    %1170 = vector.shape_cast %1169 : vector<1x14xf32> to vector<14xf32>
    %c1_900 = arith.constant 1 : index
    %c2_901 = arith.constant 2 : index
    %c13_902 = arith.constant 13 : index
    %c0_903 = arith.constant 0 : index
    %1171 = vector.load %arg3[%c1_900, %c2_901, %c13_902, %c0_903] : memref<2x8x14x14xf32, #tpu.memory_space<vmem>>, vector<1x1x1x14xf32>
    %1172 = vector.shape_cast %1171 : vector<1x1x1x14xf32> to vector<14xf32>
    %1173 = vector.shape_cast %1170 : vector<14xf32> to vector<1x1x1x14xf32>
    tpu.vector_store %arg3[%c1_900, %c2_901, %c13_902, %c0_903], %1173 {strides = array<i32>} : memref<2x8x14x14xf32, #tpu.memory_space<vmem>>, vector<1x1x1x14xf32>,
    %1174 = vector.extract_strided_slice %1158 {offsets = [3, 0], sizes = [1, 14], strides = [1, 1]} : vector<8x14xf32> to vector<1x14xf32>
    %1175 = vector.shape_cast %1174 : vector<1x14xf32> to vector<14xf32>
    %c1_904 = arith.constant 1 : index
    %c3_905 = arith.constant 3 : index
    %c13_906 = arith.constant 13 : index
    %c0_907 = arith.constant 0 : index
    %1176 = vector.load %arg3[%c1_904, %c3_905, %c13_906, %c0_907] : memref<2x8x14x14xf32, #tpu.memory_space<vmem>>, vector<1x1x1x14xf32>
    %1177 = vector.shape_cast %1176 : vector<1x1x1x14xf32> to vector<14xf32>
    %1178 = vector.shape_cast %1175 : vector<14xf32> to vector<1x1x1x14xf32>
    tpu.vector_store %arg3[%c1_904, %c3_905, %c13_906, %c0_907], %1178 {strides = array<i32>} : memref<2x8x14x14xf32, #tpu.memory_space<vmem>>, vector<1x1x1x14xf32>,
    %1179 = vector.extract_strided_slice %1158 {offsets = [4, 0], sizes = [1, 14], strides = [1, 1]} : vector<8x14xf32> to vector<1x14xf32>
    %1180 = vector.shape_cast %1179 : vector<1x14xf32> to vector<14xf32>
    %c1_908 = arith.constant 1 : index
    %c4_909 = arith.constant 4 : index
    %c13_910 = arith.constant 13 : index
    %c0_911 = arith.constant 0 : index
    %1181 = vector.load %arg3[%c1_908, %c4_909, %c13_910, %c0_911] : memref<2x8x14x14xf32, #tpu.memory_space<vmem>>, vector<1x1x1x14xf32>
    %1182 = vector.shape_cast %1181 : vector<1x1x1x14xf32> to vector<14xf32>
    %1183 = vector.shape_cast %1180 : vector<14xf32> to vector<1x1x1x14xf32>
    tpu.vector_store %arg3[%c1_908, %c4_909, %c13_910, %c0_911], %1183 {strides = array<i32>} : memref<2x8x14x14xf32, #tpu.memory_space<vmem>>, vector<1x1x1x14xf32>,
    %1184 = vector.extract_strided_slice %1158 {offsets = [5, 0], sizes = [1, 14], strides = [1, 1]} : vector<8x14xf32> to vector<1x14xf32>
    %1185 = vector.shape_cast %1184 : vector<1x14xf32> to vector<14xf32>
    %c1_912 = arith.constant 1 : index
    %c5_913 = arith.constant 5 : index
    %c13_914 = arith.constant 13 : index
    %c0_915 = arith.constant 0 : index
    %1186 = vector.load %arg3[%c1_912, %c5_913, %c13_914, %c0_915] : memref<2x8x14x14xf32, #tpu.memory_space<vmem>>, vector<1x1x1x14xf32>
    %1187 = vector.shape_cast %1186 : vector<1x1x1x14xf32> to vector<14xf32>
    %1188 = vector.shape_cast %1185 : vector<14xf32> to vector<1x1x1x14xf32>
    tpu.vector_store %arg3[%c1_912, %c5_913, %c13_914, %c0_915], %1188 {strides = array<i32>} : memref<2x8x14x14xf32, #tpu.memory_space<vmem>>, vector<1x1x1x14xf32>,
    %1189 = vector.extract_strided_slice %1158 {offsets = [6, 0], sizes = [1, 14], strides = [1, 1]} : vector<8x14xf32> to vector<1x14xf32>
    %1190 = vector.shape_cast %1189 : vector<1x14xf32> to vector<14xf32>
    %c1_916 = arith.constant 1 : index
    %c6_917 = arith.constant 6 : index
    %c13_918 = arith.constant 13 : index
    %c0_919 = arith.constant 0 : index
    %1191 = vector.load %arg3[%c1_916, %c6_917, %c13_918, %c0_919] : memref<2x8x14x14xf32, #tpu.memory_space<vmem>>, vector<1x1x1x14xf32>
    %1192 = vector.shape_cast %1191 : vector<1x1x1x14xf32> to vector<14xf32>
    %1193 = vector.shape_cast %1190 : vector<14xf32> to vector<1x1x1x14xf32>
    tpu.vector_store %arg3[%c1_916, %c6_917, %c13_918, %c0_919], %1193 {strides = array<i32>} : memref<2x8x14x14xf32, #tpu.memory_space<vmem>>, vector<1x1x1x14xf32>,
    %1194 = vector.extract_strided_slice %1158 {offsets = [7, 0], sizes = [1, 14], strides = [1, 1]} : vector<8x14xf32> to vector<1x14xf32>
    %1195 = vector.shape_cast %1194 : vector<1x14xf32> to vector<14xf32>
    %c1_920 = arith.constant 1 : index
    %c7_921 = arith.constant 7 : index
    %c13_922 = arith.constant 13 : index
    %c0_923 = arith.constant 0 : index
    %1196 = vector.load %arg3[%c1_920, %c7_921, %c13_922, %c0_923] : memref<2x8x14x14xf32, #tpu.memory_space<vmem>>, vector<1x1x1x14xf32>
    %1197 = vector.shape_cast %1196 : vector<1x1x1x14xf32> to vector<14xf32>
    %1198 = vector.shape_cast %1195 : vector<14xf32> to vector<1x1x1x14xf32>
    tpu.vector_store %arg3[%c1_920, %c7_921, %c13_922, %c0_923], %1198 {strides = array<i32>} : memref<2x8x14x14xf32, #tpu.memory_space<vmem>>, vector<1x1x1x14xf32>,
    return
  }
  func.func @transform_0(%arg0: i32) -> (i32, i32, i32) {
    %c0_i32 = arith.constant 0 : i32
    %c0_i32_0 = arith.constant 0 : i32
    %c0_i32_1 = arith.constant 0 : i32
    return %arg0, %c0_i32, %c0_i32_0 : i32, i32, i32
  }
  func.func @transform_1(%arg0: i32) -> (i32, i32) {
    %c0_i32 = arith.constant 0 : i32
    %c0_i32_0 = arith.constant 0 : i32
    %c0_i32_1 = arith.constant 0 : i32
    return %c0_i32, %c0_i32_0 : i32, i32
  }
  func.func @transform_2(%arg0: i32) -> (i32, i32, i32, i32) {
    %c0_i32 = arith.constant 0 : i32
    %c0_i32_0 = arith.constant 0 : i32
    %c0_i32_1 = arith.constant 0 : i32
    %c0_i32_2 = arith.constant 0 : i32
    return %arg0, %c0_i32, %c0_i32_0, %c0_i32_1 : i32, i32, i32, i32
  }
}

</mosaic_0001>

<llo_original>
// kernel: conv2d_relu.1
$region0: #{conv2d_relu.1}
  #allocation0 [shape = 'u32[]', space=smem, size = 0x4, offset = 0x4, fixed_abs, tag = 'smem constant byte address 0x4 - core index']
  #allocation1 [shape = 'u32[144,128]{1,0:T(1,128)}', space=vmem, size = 0x12000, scoped, tag = 'internal scratch']
  #allocation2 [shape = 'f32[40,444]{1,0:T(8,128)}', space=vmem, size = 0x14000, scoped, tag = 'scratch operand']
  %s0 = inlined_call_operand.vmem [shape: f32[2,4,256], index: 0, kind: input, shape index: {}]
  %s1 = inlined_call_operand.vmem [shape: f32[8,40], index: 1, kind: input, shape index: {}]
  %s2 = inlined_call_operand.vmem [shape: f32[2,8,14,14], index: 2, kind: output, shape index: {}]
  %s3 = sld [smem:[#allocation0]]
  $region18: #{conv2d_relu.1} parent=0
    _
  %s5 = ssub.s32 1, %s3
  %s6 = scalar_select 0, %s5, %s3
  // Predicated region
  $region2: #{conv2d_relu.1} parent=0 // pred_check
    _
  $region3: #{conv2d_relu.1} parent=0 // pred_check_branch
    %8 = sbr.rel (0) target = $region5
  $region4: #{conv2d_relu.1} parent=0 // pred_region
    _
  $region5: #{conv2d_relu.1} parent=0 // pred_fallthru
    _
  // Predicated region
  $region6: #{conv2d_relu.1} parent=0 // pred_check
    _
  $region7: #{conv2d_relu.1} parent=0 // pred_check_branch
    %10 = sbr.rel (0) target = $region9
  $region8: #{conv2d_relu.1} parent=0 // pred_region
    _
  $region9: #{conv2d_relu.1} parent=0 // pred_fallthru
    _
  %v11 = vlaneseq
  %v12 = vshrl.u32 %v11, 7
  %vm13 = vcmp.eq.s32.totalorder %v12, 0
  %v14 = vsel %vm13, 1, 0
  %v15 = vcvt.s32.f32 %v14
  %v17 = vrot.slane %v15, 4
  %19 = vst [vmem:[#allocation2 + $0x80] sm:$0xf0] %v17
  %20 = vst [vmem:[#allocation2 + $0x88] sm:$0xf0] %v17
  %21 = vst [vmem:[#allocation2 + $0x90] sm:$0xf0] %v17
  %vm22 = vcmask 490500
  %23 = vst.msk [vmem:[#allocation2 + $0x98] sm:$0xf0] %vm22, %v17
  %v24 = vld [vmem:[%s0] sm:$0xff]
  %v26 = vcombine.high %v24, %v24
  %28 = vst [vmem:[#allocation2] sm:$0xf] %v24
  %vm29 = vcmask 764928
  %30 = vst.msk [vmem:[#allocation2 + $0x8] sm:$0xf] %vm29, %v26
  %v31 = vcombine.low %v24, %v24
  %32 = vrot.lane.b32.xlu0 %v31, 127
  %v33 = vpop.permute.xlu0 %32
  %34 = vrot.lane.b32.xlu0 %v24, 127
  %v35 = vpop.permute.xlu0 %34
  %vm36 = vcmask 1039360
  %v37 = vsel %vm36, %v33, %v35
  %40 = vst [vmem:[#allocation2] sm:$0xf0] %v37
  %vm41 = vcmask 769028
  %42 = vst.msk [vmem:[#allocation2 + $0x8] sm:$0xf0] %vm41, %v35
  %43 = vrot.lane.b32.xlu0 %v24, 126
  %v44 = vpop.permute.xlu0 %43
  %45 = vrot.lane.b32.xlu0 %v26, 126
  %v46 = vpop.permute.xlu0 %45
  %vm47 = vcmask 1031168
  %v48 = vsel %vm47, %v44, %v46
  %51 = vst [vmem:[#allocation2 + $0x20] sm:$0xf] %v48
  %52 = vst.msk [vmem:[#allocation2 + $0x28] sm:$0xf] %vm29, %v46
  %53 = vrot.lane.b32.xlu0 %v31, 112
  %v54 = vpop.permute.xlu0 %53
  %55 = vrot.lane.b32.xlu0 %v24, 112
  %v56 = vpop.permute.xlu0 %55
  %vm57 = vcmask 916480
  %v58 = vsel %vm57, %v54, %v56
  %61 = vst [vmem:[#allocation2 + $0x20] sm:$0xf0] %v58
  %62 = vst.msk [vmem:[#allocation2 + $0x28] sm:$0xf0] %vm41, %v56
  %63 = vrot.lane.b32.xlu0 %v24, 111
  %v64 = vpop.permute.xlu0 %63
  %65 = vrot.lane.b32.xlu0 %v26, 111
  %v66 = vpop.permute.xlu0 %65
  %vm67 = vcmask 908288
  %v68 = vsel %vm67, %v64, %v66
  %71 = vst [vmem:[#allocation2 + $0x40] sm:$0xf] %v68
  %72 = vst.msk [vmem:[#allocation2 + $0x48] sm:$0xf] %vm29, %v66
  %73 = vrot.lane.b32.xlu0 %v31, 110
  %v74 = vpop.permute.xlu0 %73
  %75 = vrot.lane.b32.xlu0 %v24, 110
  %v76 = vpop.permute.xlu0 %75
  %vm77 = vcmask 900096
  %v78 = vsel %vm77, %v74, %v76
  %81 = vst [vmem:[#allocation2 + $0x40] sm:$0xf0] %v78
  %82 = vst.msk [vmem:[#allocation2 + $0x48] sm:$0xf0] %vm41, %v76
  %83 = vrot.lane.b32.xlu0 %v24, 96
  %v84 = vpop.permute.xlu0 %83
  %85 = vrot.lane.b32.xlu0 %v26, 96
  %v86 = vpop.permute.xlu0 %85
  %vm87 = vcmask 785408
  %v88 = vsel %vm87, %v84, %v86
  %91 = vst [vmem:[#allocation2 + $0x60] sm:$0xf] %v88
  %92 = vst.msk [vmem:[#allocation2 + $0x68] sm:$0xf] %vm29, %v86
  %93 = vrot.lane.b32.xlu0 %v31, 95
  %v94 = vpop.permute.xlu0 %93
  %95 = vrot.lane.b32.xlu0 %v24, 95
  %v96 = vpop.permute.xlu0 %95
  %vm97 = vcmask 777216
  %v98 = vsel %vm97, %v94, %v96
  %101 = vst [vmem:[#allocation2 + $0x60] sm:$0xf0] %v98
  %102 = vst.msk [vmem:[#allocation2 + $0x68] sm:$0xf0] %vm41, %v96
  %103 = vrot.lane.b32.xlu0 %v24, 94
  %v104 = vpop.permute.xlu0 %103
  %105 = vrot.lane.b32.xlu0 %v26, 94
  %v106 = vpop.permute.xlu0 %105
  %vm107 = vcmask 769024
  %v108 = vsel %vm107, %v104, %v106
  %111 = vst [vmem:[#allocation2 + $0x80] sm:$0xf] %v108
  %112 = vst.msk [vmem:[#allocation2 + $0x88] sm:$0xf] %vm29, %v106
  %s113 = scalar_lea.vmem %s0, 8
  %v114 = vld [vmem:[%s113] sm:$0xff]
  %v116 = vcombine.high %v114, %v114
  %117 = vrot.lane.b32.xlu0 %v114, 94
  %v118 = vpop.permute.xlu0 %117
  %119 = vrot.lane.b32.xlu0 %v116, 94
  %v120 = vpop.permute.xlu0 %119
  %v121 = vsel %vm107, %v118, %v120
  %vm125 = vcmask 1044208
  %126 = vst.msk [vmem:[#allocation2 + $0x8] sm:$0xf] %vm125, %v118
  %127 = vst [vmem:[#allocation2 + $0x10] sm:$0xf] %v121
  %vm128 = vcmask 486400
  %129 = vst.msk [vmem:[#allocation2 + $0x18] sm:$0xf] %vm128, %v120
  %v130 = vcombine.low %v114, %v114
  %131 = vrot.lane.b32.xlu0 %v130, 93
  %v132 = vpop.permute.xlu0 %131
  %133 = vrot.lane.b32.xlu0 %v114, 93
  %v134 = vpop.permute.xlu0 %133
  %vm135 = vcmask 760832
  %v136 = vsel %vm135, %v132, %v134
  %vm140 = vcmask 1048308
  %141 = vst.msk [vmem:[#allocation2 + $0x8] sm:$0xf0] %vm140, %v132
  %142 = vst [vmem:[#allocation2 + $0x10] sm:$0xf0] %v136
  %143 = vst.msk [vmem:[#allocation2 + $0x18] sm:$0xf0] %vm22, %v134
  %144 = vrot.lane.b32.xlu0 %v114, 92
  %v145 = vpop.permute.xlu0 %144
  %146 = vrot.lane.b32.xlu0 %v116, 92
  %v147 = vpop.permute.xlu0 %146
  %vm148 = vcmask 752640
  %v149 = vsel %vm148, %v145, %v147
  %153 = vst.msk [vmem:[#allocation2 + $0x28] sm:$0xf] %vm125, %v145
  %154 = vst [vmem:[#allocation2 + $0x30] sm:$0xf] %v149
  %155 = vst.msk [vmem:[#allocation2 + $0x38] sm:$0xf] %vm128, %v147
  %156 = vrot.lane.b32.xlu0 %v130, 78
  %v157 = vpop.permute.xlu0 %156
  %158 = vrot.lane.b32.xlu0 %v114, 78
  %v159 = vpop.permute.xlu0 %158
  %vm160 = vcmask 637952
  %v161 = vsel %vm160, %v157, %v159
  %165 = vst.msk [vmem:[#allocation2 + $0x28] sm:$0xf0] %vm140, %v157
  %166 = vst [vmem:[#allocation2 + $0x30] sm:$0xf0] %v161
  %167 = vst.msk [vmem:[#allocation2 + $0x38] sm:$0xf0] %vm22, %v159
  %168 = vrot.lane.b32.xlu0 %v114, 77
  %v169 = vpop.permute.xlu0 %168
  %170 = vrot.lane.b32.xlu0 %v116, 77
  %v171 = vpop.permute.xlu0 %170
  %vm172 = vcmask 629760
  %v173 = vsel %vm172, %v169, %v171
  %177 = vst.msk [vmem:[#allocation2 + $0x48] sm:$0xf] %vm125, %v169
  %178 = vst [vmem:[#allocation2 + $0x50] sm:$0xf] %v173
  %179 = vst.msk [vmem:[#allocation2 + $0x58] sm:$0xf] %vm128, %v171
  %180 = vrot.lane.b32.xlu0 %v130, 76
  %v181 = vpop.permute.xlu0 %180
  %182 = vrot.lane.b32.xlu0 %v114, 76
  %v183 = vpop.permute.xlu0 %182
  %vm184 = vcmask 621568
  %v185 = vsel %vm184, %v181, %v183
  %189 = vst.msk [vmem:[#allocation2 + $0x48] sm:$0xf0] %vm140, %v181
  %190 = vst [vmem:[#allocation2 + $0x50] sm:$0xf0] %v185
  %191 = vst.msk [vmem:[#allocation2 + $0x58] sm:$0xf0] %vm22, %v183
  %192 = vrot.lane.b32.xlu0 %v114, 62
  %v193 = vpop.permute.xlu0 %192
  %194 = vrot.lane.b32.xlu0 %v116, 62
  %v195 = vpop.permute.xlu0 %194
  %vm196 = vcmask 506880
  %v197 = vsel %vm196, %v193, %v195
  %201 = vst.msk [vmem:[#allocation2 + $0x68] sm:$0xf] %vm125, %v193
  %202 = vst [vmem:[#allocation2 + $0x70] sm:$0xf] %v197
  %203 = vst.msk [vmem:[#allocation2 + $0x78] sm:$0xf] %vm128, %v195
  %204 = vrot.lane.b32.xlu0 %v130, 61
  %v205 = vpop.permute.xlu0 %204
  %206 = vrot.lane.b32.xlu0 %v114, 61
  %v207 = vpop.permute.xlu0 %206
  %vm208 = vcmask 498688
  %v209 = vsel %vm208, %v205, %v207
  %213 = vst.msk [vmem:[#allocation2 + $0x68] sm:$0xf0] %vm140, %v205
  %214 = vst [vmem:[#allocation2 + $0x70] sm:$0xf0] %v209
  %215 = vst.msk [vmem:[#allocation2 + $0x78] sm:$0xf0] %vm22, %v207
  %216 = vrot.lane.b32.xlu0 %v114, 60
  %v217 = vpop.permute.xlu0 %216
  %218 = vrot.lane.b32.xlu0 %v116, 60
  %v219 = vpop.permute.xlu0 %218
  %vm220 = vcmask 490496
  %v221 = vsel %vm220, %v217, %v219
  %225 = vst.msk [vmem:[#allocation2 + $0x88] sm:$0xf] %vm125, %v217
  %226 = vst [vmem:[#allocation2 + $0x90] sm:$0xf] %v221
  %227 = vst.msk [vmem:[#allocation2 + $0x98] sm:$0xf] %vm128, %v219
  %v228 = vld [vmem:[%s1] sm:$0xff]
  %v229 = vld [vmem:[#allocation2] sm:$0xff]
  %v230 = vld [vmem:[#allocation2 + $0x8] sm:$0xff]
  %v231 = vld [vmem:[#allocation2 + $0x10] sm:$0xff]
  %v232 = vld [vmem:[#allocation2 + $0x18] sm:$0xff]
  %v233 = vld [vmem:[#allocation2 + $0x20] sm:$0xff]
  %v234 = vld [vmem:[#allocation2 + $0x28] sm:$0xff]
  %v235 = vld [vmem:[#allocation2 + $0x30] sm:$0xff]
  %v236 = vld [vmem:[#allocation2 + $0x38] sm:$0xff]
  %v237 = vld [vmem:[#allocation2 + $0x40] sm:$0xff]
  %v238 = vld [vmem:[#allocation2 + $0x48] sm:$0xff]
  %v239 = vld [vmem:[#allocation2 + $0x50] sm:$0xff]
  %v240 = vld [vmem:[#allocation2 + $0x58] sm:$0xff]
  %v241 = vld [vmem:[#allocation2 + $0x60] sm:$0xff]
  %v242 = vld [vmem:[#allocation2 + $0x68] sm:$0xff]
  %v243 = vld [vmem:[#allocation2 + $0x70] sm:$0xff]
  %v244 = vld [vmem:[#allocation2 + $0x78] sm:$0xff]
  %v245 = vld [vmem:[#allocation2 + $0x80] sm:$0xff]
  %v246 = vld [vmem:[#allocation2 + $0x88] sm:$0xff]
  %v247 = vld [vmem:[#allocation2 + $0x90] sm:$0xff]
  %v248 = vld [vmem:[#allocation2 + $0x98] sm:$0xff]
  %vm249 = vcmask 326656
  %v251 = vsel %vm249, %v228, 0
  %253 = vmatprep.subr.mxu0 %v230
  %254 = vmatpush1.msra.mxu0 %v229
  %255 = vmatprep.subr.mxu0 %v234
  %256 = vmatpush1.msra.mxu0 %v233
  %257 = vmatprep.subr.mxu0 %v238
  %258 = vmatpush1.msra.mxu0 %v237
  %259 = vmatprep.subr.mxu0 %v242
  %260 = vmatpush1.msra.mxu0 %v241
  %261 = vmatprep.subr.mxu0 %v246
  %262 = vmatpush1.msra.mxu0 %v245
  %263 = vmatprep.subr.mxu0 0.0
  %264 = vmatpush1.msra.mxu0 0.0
  %265 = vmatprep.subr.mxu0 0.0
  %266 = vmatpush1.msra.mxu0 0.0
  %267 = vmatprep.subr.mxu0 0.0
  %268 = vmatpush1.msra.mxu0 0.0
  %269 = vmatprep.subr.mxu0 0.0
  %270 = vmatpush1.msra.mxu0 0.0
  %271 = vmatprep.subr.mxu0 0.0
  %272 = vmatpush1.msra.mxu0 0.0
  %273 = vmatprep.subr.mxu0 0.0
  %274 = vmatpush1.msra.mxu0 0.0
  %275 = vmatprep.subr.mxu0 0.0
  %276 = vmatpush1.msra.mxu0 0.0
  %277 = vmatprep.subr.mxu0 0.0
  %278 = vmatpush1.msra.mxu0 0.0
  %279 = vmatprep.subr.mxu0 0.0
  %280 = vmatpush1.msra.mxu0 0.0
  %281 = vmatprep.subr.mxu0 0.0
  %282 = vmatpush1.msra.mxu0 0.0
  %283 = vmatprep.subr.mxu0 0.0
  %284 = vmatpush1.msra.mxu0 0.0
  %285 = vmatprep.subr.mxu0 0.0
  %286 = vmatpush1.msra.mxu0 0.0
  %287 = vmatprep.subr.mxu0 0.0
  %288 = vmatpush1.msra.mxu0 0.0
  %289 = vmatprep.subr.mxu0 0.0
  %290 = vmatpush1.msra.mxu0 0.0
  %291 = vmatprep.subr.mxu0 0.0
  %292 = vmatpush1.msra.mxu0 0.0
  %293 = vmatprep.subr.mxu0 0.0
  %294 = vmatpush1.msra.mxu0 0.0
  %295 = vmatprep.subr.mxu0 0.0
  %296 = vmatpush1.msra.mxu0 0.0
  %297 = vmatprep.subr.mxu0 0.0
  %298 = vmatpush1.msra.mxu0 0.0
  %299 = vmatprep.subr.mxu0 0.0
  %300 = vmatpush1.msra.mxu0 0.0
  %301 = vmatprep.subr.mxu0 0.0
  %302 = vmatpush1.msra.mxu0 0.0
  %303 = vmatprep.subr.mxu0 0.0
  %304 = vmatpush1.msra.mxu0 0.0
  %305 = vmatprep.subr.mxu0 0.0
  %306 = vmatpush1.msra.mxu0 0.0
  %307 = vmatprep.subr.mxu0 0.0
  %308 = vmatpush1.msra.mxu0 0.0
  %309 = vmatprep.subr.mxu0 0.0
  %310 = vmatpush1.msra.mxu0 0.0
  %311 = vmatprep.subr.mxu0 0.0
  %312 = vmatpush1.msra.mxu0 0.0
  %313 = vmatprep.subr.mxu0 0.0
  %314 = vmatpush1.msra.mxu0 0.0
  %315 = vmatprep.subr.mxu0 0.0
  %316 = vmatpush1.msra.mxu0 0.0
  %317 = vmatprep.mubr.f32.mxu0 0.0
  %318 = vmatmul.mubr.f32.gmra.mrb[0].mxu0 %v251
  %v319 = vpop.f32.mrb[0].mxu0
  %v320 = vadd.f32 0.0, %v319
  %v321 = vpop.f32.mrb[0].mxu0
  %v322 = vadd.f32 0.0, %v321
  %323 = vdwg.mxu0
  %324 = vmatprep.subr.mxu0 %v232
  %325 = vmatpush1.msra.mxu0 %v231
  %326 = vmatprep.subr.mxu0 %v236
  %327 = vmatpush1.msra.mxu0 %v235
  %328 = vmatprep.subr.mxu0 %v240
  %329 = vmatpush1.msra.mxu0 %v239
  %330 = vmatprep.subr.mxu0 %v244
  %331 = vmatpush1.msra.mxu0 %v243
  %332 = vmatprep.subr.mxu0 %v248
  %333 = vmatpush1.msra.mxu0 %v247
  %334 = vmatprep.subr.mxu0 0.0
  %335 = vmatpush1.msra.mxu0 0.0
  %336 = vmatprep.subr.mxu0 0.0
  %337 = vmatpush1.msra.mxu0 0.0
  %338 = vmatprep.subr.mxu0 0.0
  %339 = vmatpush1.msra.mxu0 0.0
  %340 = vmatprep.subr.mxu0 0.0
  %341 = vmatpush1.msra.mxu0 0.0
  %342 = vmatprep.subr.mxu0 0.0
  %343 = vmatpush1.msra.mxu0 0.0
  %344 = vmatprep.subr.mxu0 0.0
  %345 = vmatpush1.msra.mxu0 0.0
  %346 = vmatprep.subr.mxu0 0.0
  %347 = vmatpush1.msra.mxu0 0.0
  %348 = vmatprep.subr.mxu0 0.0
  %349 = vmatpush1.msra.mxu0 0.0
  %350 = vmatprep.subr.mxu0 0.0
  %351 = vmatpush1.msra.mxu0 0.0
  %352 = vmatprep.subr.mxu0 0.0
  %353 = vmatpush1.msra.mxu0 0.0
  %354 = vmatprep.subr.mxu0 0.0
  %355 = vmatpush1.msra.mxu0 0.0
  %356 = vmatprep.subr.mxu0 0.0
  %357 = vmatpush1.msra.mxu0 0.0
  %358 = vmatprep.subr.mxu0 0.0
  %359 = vmatpush1.msra.mxu0 0.0
  %360 = vmatprep.subr.mxu0 0.0
  %361 = vmatpush1.msra.mxu0 0.0
  %362 = vmatprep.subr.mxu0 0.0
  %363 = vmatpush1.msra.mxu0 0.0
  %364 = vmatprep.subr.mxu0 0.0
  %365 = vmatpush1.msra.mxu0 0.0
  %366 = vmatprep.subr.mxu0 0.0
  %367 = vmatpush1.msra.mxu0 0.0
  %368 = vmatprep.subr.mxu0 0.0
  %369 = vmatpush1.msra.mxu0 0.0
  %370 = vmatprep.subr.mxu0 0.0
  %371 = vmatpush1.msra.mxu0 0.0
  %372 = vmatprep.subr.mxu0 0.0
  %373 = vmatpush1.msra.mxu0 0.0
  %374 = vmatprep.subr.mxu0 0.0
  %375 = vmatpush1.msra.mxu0 0.0
  %376 = vmatprep.subr.mxu0 0.0
  %377 = vmatpush1.msra.mxu0 0.0
  %378 = vmatprep.subr.mxu0 0.0
  %379 = vmatpush1.msra.mxu0 0.0
  %380 = vmatprep.subr.mxu0 0.0
  %381 = vmatpush1.msra.mxu0 0.0
  %382 = vmatprep.subr.mxu0 0.0
  %383 = vmatpush1.msra.mxu0 0.0
  %384 = vmatprep.subr.mxu0 0.0
  %385 = vmatpush1.msra.mxu0 0.0
  %386 = vmatprep.subr.mxu0 0.0
  %387 = vmatpush1.msra.mxu0 0.0
  %388 = vmatprep.mubr.f32.mxu0 0.0
  %389 = vmatmul.mubr.f32.gmra.mrb[0].mxu0 %v251
  %v390 = vpop.f32.mrb[0].mxu0
  %v391 = vadd.f32 0.0, %v390
  %v392 = vpop.f32.mrb[0].mxu0
  %v393 = vadd.f32 0.0, %v392
  %394 = vdwg.mxu0
  %v395 = vmax.f32 %v320, 0.0
  %v396 = vmax.f32 %v322, 0.0
  %v397 = vmax.f32 %v391, 0.0
  %v398 = vmax.f32 %v393, 0.0
  %vm399 = vcmask 106496
  %400 = vst.msk [vmem:[%s2] sm:$0x1] %vm399, %v395
  %s401 = scalar_lea.vmem %s2, 16
  %vm402 = vcmask 107521
  %403 = vst.msk [vmem:[%s401 - $0x1] sm:$0x2] %vm402, %v395
  %s404 = scalar_lea.vmem %s2, 32
  %vm405 = vcmask 108546
  %406 = vst.msk [vmem:[%s404 - $0x2] sm:$0x4] %vm405, %v395
  %s407 = scalar_lea.vmem %s2, 48
  %vm408 = vcmask 109571
  %409 = vst.msk [vmem:[%s407 - $0x3] sm:$0x8] %vm408, %v395
  %s410 = scalar_lea.vmem %s2, 64
  %vm411 = vcmask 110596
  %412 = vst.msk [vmem:[%s410 - $0x4] sm:$0x10] %vm411, %v395
  %s413 = scalar_lea.vmem %s2, 80
  %vm414 = vcmask 111621
  %415 = vst.msk [vmem:[%s413 - $0x5] sm:$0x20] %vm414, %v395
  %s416 = scalar_lea.vmem %s2, 96
  %vm417 = vcmask 112646
  %418 = vst.msk [vmem:[%s416 - $0x6] sm:$0x40] %vm417, %v395
  %s419 = scalar_lea.vmem %s2, 112
  %vm420 = vcmask 113671
  %421 = vst.msk [vmem:[%s419 - $0x7] sm:$0x80] %vm420, %v395
  %423 = vrot.lane.b32.xlu0 %v395, 112
  %v424 = vpop.permute.xlu0 %423
  %426 = vst.msk [vmem:[%s2 + $0x1] sm:$0x1] %vm399, %v424
  %427 = vst.msk [vmem:[%s401] sm:$0x2] %vm402, %v424
  %428 = vst.msk [vmem:[%s404 - $0x1] sm:$0x4] %vm405, %v424
  %429 = vst.msk [vmem:[%s407 - $0x2] sm:$0x8] %vm408, %v424
  %430 = vst.msk [vmem:[%s410 - $0x3] sm:$0x10] %vm411, %v424
  %431 = vst.msk [vmem:[%s413 - $0x4] sm:$0x20] %vm414, %v424
  %432 = vst.msk [vmem:[%s416 - $0x5] sm:$0x40] %vm417, %v424
  %433 = vst.msk [vmem:[%s419 - $0x6] sm:$0x80] %vm420, %v424
  %434 = vrot.lane.b32.xlu0 %v395, 96
  %v435 = vpop.permute.xlu0 %434
  %437 = vst.msk [vmem:[%s2 + $0x2] sm:$0x1] %vm399, %v435
  %438 = vst.msk [vmem:[%s401 + $0x1] sm:$0x2] %vm402, %v435
  %439 = vst.msk [vmem:[%s404] sm:$0x4] %vm405, %v435
  %440 = vst.msk [vmem:[%s407 - $0x1] sm:$0x8] %vm408, %v435
  %441 = vst.msk [vmem:[%s410 - $0x2] sm:$0x10] %vm411, %v435
  %442 = vst.msk [vmem:[%s413 - $0x3] sm:$0x20] %vm414, %v435
  %443 = vst.msk [vmem:[%s416 - $0x4] sm:$0x40] %vm417, %v435
  %444 = vst.msk [vmem:[%s419 - $0x5] sm:$0x80] %vm420, %v435
  %445 = vrot.lane.b32.xlu0 %v395, 80
  %v446 = vpop.permute.xlu0 %445
  %448 = vst.msk [vmem:[%s2 + $0x3] sm:$0x1] %vm399, %v446
  %449 = vst.msk [vmem:[%s401 + $0x2] sm:$0x2] %vm402, %v446
  %450 = vst.msk [vmem:[%s404 + $0x1] sm:$0x4] %vm405, %v446
  %451 = vst.msk [vmem:[%s407] sm:$0x8] %vm408, %v446
  %452 = vst.msk [vmem:[%s410 - $0x1] sm:$0x10] %vm411, %v446
  %453 = vst.msk [vmem:[%s413 - $0x2] sm:$0x20] %vm414, %v446
  %454 = vst.msk [vmem:[%s416 - $0x3] sm:$0x40] %vm417, %v446
  %455 = vst.msk [vmem:[%s419 - $0x4] sm:$0x80] %vm420, %v446
  %456 = vrot.lane.b32.xlu0 %v395, 64
  %v457 = vpop.permute.xlu0 %456
  %459 = vst.msk [vmem:[%s2 + $0x4] sm:$0x1] %vm399, %v457
  %460 = vst.msk [vmem:[%s401 + $0x3] sm:$0x2] %vm402, %v457
  %461 = vst.msk [vmem:[%s404 + $0x2] sm:$0x4] %vm405, %v457
  %462 = vst.msk [vmem:[%s407 + $0x1] sm:$0x8] %vm408, %v457
  %463 = vst.msk [vmem:[%s410] sm:$0x10] %vm411, %v457
  %464 = vst.msk [vmem:[%s413 - $0x1] sm:$0x20] %vm414, %v457
  %465 = vst.msk [vmem:[%s416 - $0x2] sm:$0x40] %vm417, %v457
  %466 = vst.msk [vmem:[%s419 - $0x3] sm:$0x80] %vm420, %v457
  %467 = vrot.lane.b32.xlu0 %v395, 48
  %v468 = vpop.permute.xlu0 %467
  %470 = vst.msk [vmem:[%s2 + $0x5] sm:$0x1] %vm399, %v468
  %471 = vst.msk [vmem:[%s401 + $0x4] sm:$0x2] %vm402, %v468
  %472 = vst.msk [vmem:[%s404 + $0x3] sm:$0x4] %vm405, %v468
  %473 = vst.msk [vmem:[%s407 + $0x2] sm:$0x8] %vm408, %v468
  %474 = vst.msk [vmem:[%s410 + $0x1] sm:$0x10] %vm411, %v468
  %475 = vst.msk [vmem:[%s413] sm:$0x20] %vm414, %v468
  %476 = vst.msk [vmem:[%s416 - $0x1] sm:$0x40] %vm417, %v468
  %477 = vst.msk [vmem:[%s419 - $0x2] sm:$0x80] %vm420, %v468
  %478 = vrot.lane.b32.xlu0 %v395, 32
  %v479 = vpop.permute.xlu0 %478
  %481 = vst.msk [vmem:[%s2 + $0x6] sm:$0x1] %vm399, %v479
  %482 = vst.msk [vmem:[%s401 + $0x5] sm:$0x2] %vm402, %v479
  %483 = vst.msk [vmem:[%s404 + $0x4] sm:$0x4] %vm405, %v479
  %484 = vst.msk [vmem:[%s407 + $0x3] sm:$0x8] %vm408, %v479
  %485 = vst.msk [vmem:[%s410 + $0x2] sm:$0x10] %vm411, %v479
  %486 = vst.msk [vmem:[%s413 + $0x1] sm:$0x20] %vm414, %v479
  %487 = vst.msk [vmem:[%s416] sm:$0x40] %vm417, %v479
  %488 = vst.msk [vmem:[%s419 - $0x1] sm:$0x80] %vm420, %v479
  %489 = vrot.lane.b32.xlu0 %v395, 16
  %v490 = vpop.permute.xlu0 %489
  %492 = vst.msk [vmem:[%s2 + $0x7] sm:$0x1] %vm399, %v490
  %493 = vst.msk [vmem:[%s401 + $0x6] sm:$0x2] %vm402, %v490
  %494 = vst.msk [vmem:[%s404 + $0x5] sm:$0x4] %vm405, %v490
  %495 = vst.msk [vmem:[%s407 + $0x4] sm:$0x8] %vm408, %v490
  %496 = vst.msk [vmem:[%s410 + $0x3] sm:$0x10] %vm411, %v490
  %497 = vst.msk [vmem:[%s413 + $0x2] sm:$0x20] %vm414, %v490
  %498 = vst.msk [vmem:[%s416 + $0x1] sm:$0x40] %vm417, %v490
  %499 = vst.msk [vmem:[%s419] sm:$0x80] %vm420, %v490
  %500 = vst.msk [vmem:[%s2 + $0x8] sm:$0x1] %vm399, %v396
  %501 = vst.msk [vmem:[%s401 + $0x7] sm:$0x2] %vm402, %v396
  %502 = vst.msk [vmem:[%s404 + $0x6] sm:$0x4] %vm405, %v396
  %503 = vst.msk [vmem:[%s407 + $0x5] sm:$0x8] %vm408, %v396
  %504 = vst.msk [vmem:[%s410 + $0x4] sm:$0x10] %vm411, %v396
  %505 = vst.msk [vmem:[%s413 + $0x3] sm:$0x20] %vm414, %v396
  %506 = vst.msk [vmem:[%s416 + $0x2] sm:$0x40] %vm417, %v396
  %507 = vst.msk [vmem:[%s419 + $0x1] sm:$0x80] %vm420, %v396
  %509 = vrot.lane.b32.xlu0 %v396, 112
  %v510 = vpop.permute.xlu0 %509
  %512 = vst.msk [vmem:[%s2 + $0x9] sm:$0x1] %vm399, %v510
  %513 = vst.msk [vmem:[%s401 + $0x8] sm:$0x2] %vm402, %v510
  %514 = vst.msk [vmem:[%s404 + $0x7] sm:$0x4] %vm405, %v510
  %515 = vst.msk [vmem:[%s407 + $0x6] sm:$0x8] %vm408, %v510
  %516 = vst.msk [vmem:[%s410 + $0x5] sm:$0x10] %vm411, %v510
  %517 = vst.msk [vmem:[%s413 + $0x4] sm:$0x20] %vm414, %v510
  %518 = vst.msk [vmem:[%s416 + $0x3] sm:$0x40] %vm417, %v510
  %519 = vst.msk [vmem:[%s419 + $0x2] sm:$0x80] %vm420, %v510
  %520 = vrot.lane.b32.xlu0 %v396, 96
  %v521 = vpop.permute.xlu0 %520
  %523 = vst.msk [vmem:[%s2 + $0xa] sm:$0x1] %vm399, %v521
  %524 = vst.msk [vmem:[%s401 + $0x9] sm:$0x2] %vm402, %v521
  %525 = vst.msk [vmem:[%s404 + $0x8] sm:$0x4] %vm405, %v521
  %526 = vst.msk [vmem:[%s407 + $0x7] sm:$0x8] %vm408, %v521
  %527 = vst.msk [vmem:[%s410 + $0x6] sm:$0x10] %vm411, %v521
  %528 = vst.msk [vmem:[%s413 + $0x5] sm:$0x20] %vm414, %v521
  %529 = vst.msk [vmem:[%s416 + $0x4] sm:$0x40] %vm417, %v521
  %530 = vst.msk [vmem:[%s419 + $0x3] sm:$0x80] %vm420, %v521
  %531 = vrot.lane.b32.xlu0 %v396, 80
  %v532 = vpop.permute.xlu0 %531
  %534 = vst.msk [vmem:[%s2 + $0xb] sm:$0x1] %vm399, %v532
  %535 = vst.msk [vmem:[%s401 + $0xa] sm:$0x2] %vm402, %v532
  %536 = vst.msk [vmem:[%s404 + $0x9] sm:$0x4] %vm405, %v532
  %537 = vst.msk [vmem:[%s407 + $0x8] sm:$0x8] %vm408, %v532
  %538 = vst.msk [vmem:[%s410 + $0x7] sm:$0x10] %vm411, %v532
  %539 = vst.msk [vmem:[%s413 + $0x6] sm:$0x20] %vm414, %v532
  %540 = vst.msk [vmem:[%s416 + $0x5] sm:$0x40] %vm417, %v532
  %541 = vst.msk [vmem:[%s419 + $0x4] sm:$0x80] %vm420, %v532
  %542 = vrot.lane.b32.xlu0 %v396, 64
  %v543 = vpop.permute.xlu0 %542
  %545 = vst.msk [vmem:[%s2 + $0xc] sm:$0x1] %vm399, %v543
  %546 = vst.msk [vmem:[%s401 + $0xb] sm:$0x2] %vm402, %v543
  %547 = vst.msk [vmem:[%s404 + $0xa] sm:$0x4] %vm405, %v543
  %548 = vst.msk [vmem:[%s407 + $0x9] sm:$0x8] %vm408, %v543
  %549 = vst.msk [vmem:[%s410 + $0x8] sm:$0x10] %vm411, %v543
  %550 = vst.msk [vmem:[%s413 + $0x7] sm:$0x20] %vm414, %v543
  %551 = vst.msk [vmem:[%s416 + $0x6] sm:$0x40] %vm417, %v543
  %552 = vst.msk [vmem:[%s419 + $0x5] sm:$0x80] %vm420, %v543
  %553 = vrot.lane.b32.xlu0 %v396, 48
  %v554 = vpop.permute.xlu0 %553
  %556 = vst.msk [vmem:[%s2 + $0xd] sm:$0x1] %vm399, %v554
  %557 = vst.msk [vmem:[%s401 + $0xc] sm:$0x2] %vm402, %v554
  %558 = vst.msk [vmem:[%s404 + $0xb] sm:$0x4] %vm405, %v554
  %559 = vst.msk [vmem:[%s407 + $0xa] sm:$0x8] %vm408, %v554
  %560 = vst.msk [vmem:[%s410 + $0x9] sm:$0x10] %vm411, %v554
  %561 = vst.msk [vmem:[%s413 + $0x8] sm:$0x20] %vm414, %v554
  %562 = vst.msk [vmem:[%s416 + $0x7] sm:$0x40] %vm417, %v554
  %563 = vst.msk [vmem:[%s419 + $0x6] sm:$0x80] %vm420, %v554
  %564 = vrot.lane.b32.xlu0 %v396, 34
  %v565 = vpop.permute.xlu0 %564
  %s567 = scalar_lea.vmem %s2, 128
  %568 = vst.msk [vmem:[%s567] sm:$0x1] %vm399, %v565
  %s569 = scalar_lea.vmem %s2, 144
  %570 = vst.msk [vmem:[%s569 - $0x1] sm:$0x2] %vm402, %v565
  %s571 = scalar_lea.vmem %s2, 160
  %572 = vst.msk [vmem:[%s571 - $0x2] sm:$0x4] %vm405, %v565
  %s573 = scalar_lea.vmem %s2, 176
  %574 = vst.msk [vmem:[%s573 - $0x3] sm:$0x8] %vm408, %v565
  %s575 = scalar_lea.vmem %s2, 192
  %576 = vst.msk [vmem:[%s575 - $0x4] sm:$0x10] %vm411, %v565
  %s577 = scalar_lea.vmem %s2, 208
  %578 = vst.msk [vmem:[%s577 - $0x5] sm:$0x20] %vm414, %v565
  %s579 = scalar_lea.vmem %s2, 224
  %580 = vst.msk [vmem:[%s579 - $0x6] sm:$0x40] %vm417, %v565
  %s581 = scalar_lea.vmem %s2, 240
  %582 = vst.msk [vmem:[%s581 - $0x7] sm:$0x80] %vm420, %v565
  %583 = vrot.lane.b32.xlu0 %v396, 18
  %v584 = vpop.permute.xlu0 %583
  %586 = vst.msk [vmem:[%s567 + $0x1] sm:$0x1] %vm399, %v584
  %587 = vst.msk [vmem:[%s569] sm:$0x2] %vm402, %v584
  %588 = vst.msk [vmem:[%s571 - $0x1] sm:$0x4] %vm405, %v584
  %589 = vst.msk [vmem:[%s573 - $0x2] sm:$0x8] %vm408, %v584
  %590 = vst.msk [vmem:[%s575 - $0x3] sm:$0x10] %vm411, %v584
  %591 = vst.msk [vmem:[%s577 - $0x4] sm:$0x20] %vm414, %v584
  %592 = vst.msk [vmem:[%s579 - $0x5] sm:$0x40] %vm417, %v584
  %593 = vst.msk [vmem:[%s581 - $0x6] sm:$0x80] %vm420, %v584
  %595 = vrot.lane.b32.xlu0 %v396, 2
  %v596 = vpop.permute.xlu0 %595
  %597 = vrot.lane.b32.xlu0 %v397, 2
  %v598 = vpop.permute.xlu0 %597
  %vm599 = vcmask 15360
  %v600 = vsel %vm599, %v596, %v598
  %602 = vst.msk [vmem:[%s567 + $0x2] sm:$0x1] %vm399, %v600
  %603 = vst.msk [vmem:[%s569 + $0x1] sm:$0x2] %vm402, %v600
  %604 = vst.msk [vmem:[%s571] sm:$0x4] %vm405, %v600
  %605 = vst.msk [vmem:[%s573 - $0x1] sm:$0x8] %vm408, %v600
  %606 = vst.msk [vmem:[%s575 - $0x2] sm:$0x10] %vm411, %v600
  %607 = vst.msk [vmem:[%s577 - $0x3] sm:$0x20] %vm414, %v600
  %608 = vst.msk [vmem:[%s579 - $0x4] sm:$0x40] %vm417, %v600
  %609 = vst.msk [vmem:[%s581 - $0x5] sm:$0x80] %vm420, %v600
  %610 = vrot.lane.b32.xlu0 %v397, 114
  %v611 = vpop.permute.xlu0 %610
  %613 = vst.msk [vmem:[%s567 + $0x3] sm:$0x1] %vm399, %v611
  %614 = vst.msk [vmem:[%s569 + $0x2] sm:$0x2] %vm402, %v611
  %615 = vst.msk [vmem:[%s571 + $0x1] sm:$0x4] %vm405, %v611
  %616 = vst.msk [vmem:[%s573] sm:$0x8] %vm408, %v611
  %617 = vst.msk [vmem:[%s575 - $0x1] sm:$0x10] %vm411, %v611
  %618 = vst.msk [vmem:[%s577 - $0x2] sm:$0x20] %vm414, %v611
  %619 = vst.msk [vmem:[%s579 - $0x3] sm:$0x40] %vm417, %v611
  %620 = vst.msk [vmem:[%s581 - $0x4] sm:$0x80] %vm420, %v611
  %621 = vrot.lane.b32.xlu0 %v397, 98
  %v622 = vpop.permute.xlu0 %621
  %624 = vst.msk [vmem:[%s567 + $0x4] sm:$0x1] %vm399, %v622
  %625 = vst.msk [vmem:[%s569 + $0x3] sm:$0x2] %vm402, %v622
  %626 = vst.msk [vmem:[%s571 + $0x2] sm:$0x4] %vm405, %v622
  %627 = vst.msk [vmem:[%s573 + $0x1] sm:$0x8] %vm408, %v622
  %628 = vst.msk [vmem:[%s575] sm:$0x10] %vm411, %v622
  %629 = vst.msk [vmem:[%s577 - $0x1] sm:$0x20] %vm414, %v622
  %630 = vst.msk [vmem:[%s579 - $0x2] sm:$0x40] %vm417, %v622
  %631 = vst.msk [vmem:[%s581 - $0x3] sm:$0x80] %vm420, %v622
  %632 = vrot.lane.b32.xlu0 %v397, 82
  %v633 = vpop.permute.xlu0 %632
  %635 = vst.msk [vmem:[%s567 + $0x5] sm:$0x1] %vm399, %v633
  %636 = vst.msk [vmem:[%s569 + $0x4] sm:$0x2] %vm402, %v633
  %637 = vst.msk [vmem:[%s571 + $0x3] sm:$0x4] %vm405, %v633
  %638 = vst.msk [vmem:[%s573 + $0x2] sm:$0x8] %vm408, %v633
  %639 = vst.msk [vmem:[%s575 + $0x1] sm:$0x10] %vm411, %v633
  %640 = vst.msk [vmem:[%s577] sm:$0x20] %vm414, %v633
  %641 = vst.msk [vmem:[%s579 - $0x1] sm:$0x40] %vm417, %v633
  %642 = vst.msk [vmem:[%s581 - $0x2] sm:$0x80] %vm420, %v633
  %643 = vrot.lane.b32.xlu0 %v397, 66
  %v644 = vpop.permute.xlu0 %643
  %646 = vst.msk [vmem:[%s567 + $0x6] sm:$0x1] %vm399, %v644
  %647 = vst.msk [vmem:[%s569 + $0x5] sm:$0x2] %vm402, %v644
  %648 = vst.msk [vmem:[%s571 + $0x4] sm:$0x4] %vm405, %v644
  %649 = vst.msk [vmem:[%s573 + $0x3] sm:$0x8] %vm408, %v644
  %650 = vst.msk [vmem:[%s575 + $0x2] sm:$0x10] %vm411, %v644
  %651 = vst.msk [vmem:[%s577 + $0x1] sm:$0x20] %vm414, %v644
  %652 = vst.msk [vmem:[%s579] sm:$0x40] %vm417, %v644
  %653 = vst.msk [vmem:[%s581 - $0x1] sm:$0x80] %vm420, %v644
  %654 = vrot.lane.b32.xlu0 %v397, 50
  %v655 = vpop.permute.xlu0 %654
  %657 = vst.msk [vmem:[%s567 + $0x7] sm:$0x1] %vm399, %v655
  %658 = vst.msk [vmem:[%s569 + $0x6] sm:$0x2] %vm402, %v655
  %659 = vst.msk [vmem:[%s571 + $0x5] sm:$0x4] %vm405, %v655
  %660 = vst.msk [vmem:[%s573 + $0x4] sm:$0x8] %vm408, %v655
  %661 = vst.msk [vmem:[%s575 + $0x3] sm:$0x10] %vm411, %v655
  %662 = vst.msk [vmem:[%s577 + $0x2] sm:$0x20] %vm414, %v655
  %663 = vst.msk [vmem:[%s579 + $0x1] sm:$0x40] %vm417, %v655
  %664 = vst.msk [vmem:[%s581] sm:$0x80] %vm420, %v655
  %665 = vrot.lane.b32.xlu0 %v397, 34
  %v666 = vpop.permute.xlu0 %665
  %668 = vst.msk [vmem:[%s567 + $0x8] sm:$0x1] %vm399, %v666
  %669 = vst.msk [vmem:[%s569 + $0x7] sm:$0x2] %vm402, %v666
  %670 = vst.msk [vmem:[%s571 + $0x6] sm:$0x4] %vm405, %v666
  %671 = vst.msk [vmem:[%s573 + $0x5] sm:$0x8] %vm408, %v666
  %672 = vst.msk [vmem:[%s575 + $0x4] sm:$0x10] %vm411, %v666
  %673 = vst.msk [vmem:[%s577 + $0x3] sm:$0x20] %vm414, %v666
  %674 = vst.msk [vmem:[%s579 + $0x2] sm:$0x40] %vm417, %v666
  %675 = vst.msk [vmem:[%s581 + $0x1] sm:$0x80] %vm420, %v666
  %676 = vrot.lane.b32.xlu0 %v397, 18
  %v677 = vpop.permute.xlu0 %676
  %679 = vst.msk [vmem:[%s567 + $0x9] sm:$0x1] %vm399, %v677
  %680 = vst.msk [vmem:[%s569 + $0x8] sm:$0x2] %vm402, %v677
  %681 = vst.msk [vmem:[%s571 + $0x7] sm:$0x4] %vm405, %v677
  %682 = vst.msk [vmem:[%s573 + $0x6] sm:$0x8] %vm408, %v677
  %683 = vst.msk [vmem:[%s575 + $0x5] sm:$0x10] %vm411, %v677
  %684 = vst.msk [vmem:[%s577 + $0x4] sm:$0x20] %vm414, %v677
  %685 = vst.msk [vmem:[%s579 + $0x3] sm:$0x40] %vm417, %v677
  %686 = vst.msk [vmem:[%s581 + $0x2] sm:$0x80] %vm420, %v677
  %688 = vrot.lane.b32.xlu0 %v398, 2
  %v689 = vpop.permute.xlu0 %688
  %v690 = vsel %vm599, %v598, %v689
  %692 = vst.msk [vmem:[%s567 + $0xa] sm:$0x1] %vm399, %v690
  %693 = vst.msk [vmem:[%s569 + $0x9] sm:$0x2] %vm402, %v690
  %694 = vst.msk [vmem:[%s571 + $0x8] sm:$0x4] %vm405, %v690
  %695 = vst.msk [vmem:[%s573 + $0x7] sm:$0x8] %vm408, %v690
  %696 = vst.msk [vmem:[%s575 + $0x6] sm:$0x10] %vm411, %v690
  %697 = vst.msk [vmem:[%s577 + $0x5] sm:$0x20] %vm414, %v690
  %698 = vst.msk [vmem:[%s579 + $0x4] sm:$0x40] %vm417, %v690
  %699 = vst.msk [vmem:[%s581 + $0x3] sm:$0x80] %vm420, %v690
  %700 = vrot.lane.b32.xlu0 %v398, 114
  %v701 = vpop.permute.xlu0 %700
  %703 = vst.msk [vmem:[%s567 + $0xb] sm:$0x1] %vm399, %v701
  %704 = vst.msk [vmem:[%s569 + $0xa] sm:$0x2] %vm402, %v701
  %705 = vst.msk [vmem:[%s571 + $0x9] sm:$0x4] %vm405, %v701
  %706 = vst.msk [vmem:[%s573 + $0x8] sm:$0x8] %vm408, %v701
  %707 = vst.msk [vmem:[%s575 + $0x7] sm:$0x10] %vm411, %v701
  %708 = vst.msk [vmem:[%s577 + $0x6] sm:$0x20] %vm414, %v701
  %709 = vst.msk [vmem:[%s579 + $0x5] sm:$0x40] %vm417, %v701
  %710 = vst.msk [vmem:[%s581 + $0x4] sm:$0x80] %vm420, %v701
  %711 = vrot.lane.b32.xlu0 %v398, 98
  %v712 = vpop.permute.xlu0 %711
  %714 = vst.msk [vmem:[%s567 + $0xc] sm:$0x1] %vm399, %v712
  %715 = vst.msk [vmem:[%s569 + $0xb] sm:$0x2] %vm402, %v712
  %716 = vst.msk [vmem:[%s571 + $0xa] sm:$0x4] %vm405, %v712
  %717 = vst.msk [vmem:[%s573 + $0x9] sm:$0x8] %vm408, %v712
  %718 = vst.msk [vmem:[%s575 + $0x8] sm:$0x10] %vm411, %v712
  %719 = vst.msk [vmem:[%s577 + $0x7] sm:$0x20] %vm414, %v712
  %720 = vst.msk [vmem:[%s579 + $0x6] sm:$0x40] %vm417, %v712
  %721 = vst.msk [vmem:[%s581 + $0x5] sm:$0x80] %vm420, %v712
  %722 = vrot.lane.b32.xlu0 %v398, 82
  %v723 = vpop.permute.xlu0 %722
  %725 = vst.msk [vmem:[%s567 + $0xd] sm:$0x1] %vm399, %v723
  %726 = vst.msk [vmem:[%s569 + $0xc] sm:$0x2] %vm402, %v723
  %727 = vst.msk [vmem:[%s571 + $0xb] sm:$0x4] %vm405, %v723
  %728 = vst.msk [vmem:[%s573 + $0xa] sm:$0x8] %vm408, %v723
  %729 = vst.msk [vmem:[%s575 + $0x9] sm:$0x10] %vm411, %v723
  %730 = vst.msk [vmem:[%s577 + $0x8] sm:$0x20] %vm414, %v723
  %731 = vst.msk [vmem:[%s579 + $0x7] sm:$0x40] %vm417, %v723
  %732 = vst.msk [vmem:[%s581 + $0x6] sm:$0x80] %vm420, %v723
  // Predicated region
  $region10: #{conv2d_relu.1} parent=0 // pred_check
    _
  $region11: #{conv2d_relu.1} parent=0 // pred_check_branch
    %734 = sbr.rel (0) target = $region13
  $region12: #{conv2d_relu.1} parent=0 // pred_region
    _
  $region13: #{conv2d_relu.1} parent=0 // pred_fallthru
    _
  // Predicated region
  $region14: #{conv2d_relu.1} parent=0 // pred_check
    _
  $region15: #{conv2d_relu.1} parent=0 // pred_check_branch
    %736 = sbr.rel (0) target = $region17
  $region16: #{conv2d_relu.1} parent=0 // pred_region
    _
  $region17: #{conv2d_relu.1} parent=0 // pred_fallthru
    _

</llo_original>
